<compile_context>
chip_gen: v7x
topology: tpu7x:2x2x1
jax: 0.10.0
libtpu: 0.0.40
codegen_flags: <defaults>
</compile_context>

<pallas_src>
import functools

import jax
import jax.numpy as jnp
from jax.experimental import pallas as pl
from jax.experimental.pallas import tpu as pltpu

P = 128  # padded hidden width (hidden dims 128 / 64 / encoding_dim all <= 128)


def _round_up(x, m):
    return ((x + m - 1) // m) * m


def _autoencoder_kernel(x_ref, w1_ref, wmid_ref, w6_ref, b_ref,
                        dec_ref, enc_ref, *, input_dim, encoding_dim):
    """Full encoder+decoder MLP chain for one (tile_m, input_dim) batch tile.

    bf16 operands on the MXU, f32 accumulation / bias / ReLU.  Hidden widths
    are zero-padded to P=128 (lane-dense); padded lanes stay exactly zero
    through the chain (zero weight rows/cols, zero bias lanes, ReLU(0)=0).
    """
    bias = b_ref[...]                                       # (6, BP) f32

    # Layer 1: input_dim -> 128  (f32 -> bf16 cast fused here, no wrapper pad)
    h = x_ref[...].astype(jnp.bfloat16)                     # (tile_m, D)
    y = jnp.dot(h, w1_ref[...], preferred_element_type=jnp.float32) + bias[0, :P]
    h = jnp.maximum(y, 0.0).astype(jnp.bfloat16)            # (tile_m, P)

    # Layers 2..5: 128 -> 64 -> enc -> 64 -> 128 (all zero-padded to P x P)
    for k in range(4):                                       # static unroll
        y = jnp.dot(h, wmid_ref[k], preferred_element_type=jnp.float32) + bias[k + 1, :P]
        y = jnp.maximum(y, 0.0)
        if k == 1:                                           # encoder output
            enc_ref[...] = y[:, :encoding_dim].astype(enc_ref.dtype)
        h = y.astype(jnp.bfloat16)

    # Layer 6: 128 -> input_dim, no activation (true width -> no post-slice)
    dec = jnp.dot(h, w6_ref[...], preferred_element_type=jnp.float32) + bias[5, :input_dim]
    dec_ref[...] = dec.astype(dec_ref.dtype)


def init_params(key, input_dim, encoding_dim=32):
    """PyTorch-Linear-like uniform fan-in init; weights stored as (in, out)."""
    dims = [
        (input_dim, 128),      # encoder L1
        (128, 64),             # encoder L2
        (64, encoding_dim),    # encoder L3
        (encoding_dim, 64),    # decoder L1
        (64, 128),             # decoder L2
        (128, input_dim),      # decoder L3
    ]
    params = {}
    for idx, (fan_in, fan_out) in enumerate(dims, start=1):
        key, kw, kb = jax.random.split(key, 3)
        bound = 1.0 / jnp.sqrt(fan_in)
        params[f"w{idx}"] = jax.random.uniform(kw, (fan_in, fan_out),
                                               jnp.float32, -bound, bound)
        params[f"b{idx}"] = jax.random.uniform(kb, (fan_out,),
                                               jnp.float32, -bound, bound)
    return params


def pack_params_for_kernel(params, input_dim, encoding_dim):
    """Pack 12 params into 4 kernel arrays (bf16 weights, f32 bias stack)."""
    BP = max(P, _round_up(input_dim, 128))  # bias stack lane width
    w1 = params["w1"].astype(jnp.bfloat16)                   # (D, 128)
    w6 = params["w6"].astype(jnp.bfloat16)                   # (128, D)
    mids = [("w2", 128, 64), ("w3", 64, encoding_dim),
            ("w4", encoding_dim, 64), ("w5", 64, 128)]
    wmid = jnp.zeros((4, P, P), jnp.bfloat16)
    for i, (name, ki, ni) in enumerate(mids):
        wmid = wmid.at[i, :ki, :ni].set(params[name].astype(jnp.bfloat16))
    bias = jnp.zeros((6, BP), jnp.float32)
    widths = [128, 64, encoding_dim, 64, 128, input_dim]
    for i, w in enumerate(widths):
        bias = bias.at[i, :w].set(params[f"b{i + 1}"])
    return {"w1": w1, "wmid": wmid, "w6": w6, "bias": bias}


def _device_info():
    try:
        kind = jax.devices()[0].device_kind.lower()
    except Exception:
        kind = ""
    is_v7 = "v7" in kind
    return is_v7, (2 if is_v7 else 1)


def autoencoder_forward(x, kparams, *, input_dim, encoding_dim, max_tile_m=1024):
    """Run the autoencoder forward pass with a single Pallas TPU kernel.

    x: [B, input_dim] float32.  Returns (decoded [B, input_dim] f32,
    encoded [B, encoding_dim] f32), matching the PyTorch module.
    """
    B, D = x.shape
    assert D == input_dim
    is_v7, n_cores = _device_info()

    # Grid / tile per generation:
    #  - 1 TC (v5e/v6e): one fat step when the batch fits (grid=(1,)).
    #  - 2 TC (v7x):     split evenly across cores.
    tile_m = min(max_tile_m, _round_up(max(1, -(-B // n_cores)), 16))
    num_tiles = -(-B // tile_m)
    if is_v7 and num_tiles % n_cores != 0:
        num_tiles = _round_up(num_tiles, n_cores)
    b_pad = num_tiles * tile_m

    x_in = x if b_pad == B else jnp.pad(x, ((0, b_pad - B), (0, 0)))

    def resident2(shape):
        # Constant block index -> fetched once, stays VMEM-resident.
        return pl.BlockSpec(shape, lambda i: (0, 0))

    in_specs = [
        pl.BlockSpec((tile_m, D), lambda i: (i, 0)),              # x tile (f32)
        resident2(kparams["w1"].shape),                           # (D, 128) bf16
        pl.BlockSpec(kparams["wmid"].shape, lambda i: (0, 0, 0)),  # (4,128,128)
        resident2(kparams["w6"].shape),                           # (128, D) bf16
        resident2(kparams["bias"].shape),                         # (6, BP) f32
    ]
    out_specs = [
        pl.BlockSpec((tile_m, D), lambda i: (i, 0)),               # decoded
        pl.BlockSpec((tile_m, encoding_dim), lambda i: (i, 0)),    # encoded
    ]
    out_shape = [
        jax.ShapeDtypeStruct((b_pad, D), jnp.float32),
        jax.ShapeDtypeStruct((b_pad, encoding_dim), jnp.float32),
    ]

    flops = 2 * b_pad * (D * P + 4 * P * P + P * D)
    param_bytes = sum(int(v.size) * v.dtype.itemsize for v in kparams.values())
    bytes_accessed = (b_pad * D * 4 + param_bytes
                      + b_pad * D * 4 + b_pad * encoding_dim * 4)
    cost = pl.CostEstimate(flops=int(flops), transcendentals=0,
                           bytes_accessed=int(bytes_accessed))

    kernel = functools.partial(_autoencoder_kernel,
                               input_dim=input_dim, encoding_dim=encoding_dim)
    args = (x_in, kparams["w1"], kparams["wmid"], kparams["w6"], kparams["bias"])

    def run(dim_sem):
        fn = pl.pallas_call(
            kernel,
            out_shape=out_shape,
            grid_spec=pltpu.PrefetchScalarGridSpec(
                num_scalar_prefetch=0,
                grid=(num_tiles,),
                in_specs=in_specs,
                out_specs=out_specs,
            ),
            cost_estimate=cost,
            compiler_params=pltpu.CompilerParams(dimension_semantics=dim_sem),
        )
        return fn(*args)

    if is_v7 and num_tiles > 1:
        # Explicit 2-TensorCore split on v7x; fall back if unsupported.
        try:
            dec, enc = run((pltpu.CORE_PARALLEL,))
        except Exception:
            dec, enc = run(("parallel",))
    else:
        dec, enc = run(("parallel",))

    if b_pad != B:
        dec, enc = dec[:B], enc[:B]
    return dec, enc


def reference_forward(x, params):
    """Pure-JAX reference mirroring the kernel's bf16-operand / f32-accum math."""

    def lin(h, w, b, relu):
        y = jnp.dot(h.astype(jnp.bfloat16), w.astype(jnp.bfloat16),
                    preferred_element_type=jnp.float32) + b
        return jnp.maximum(y, 0.0) if relu else y

    h = lin(x, params["w1"], params["b1"], True)
    h = lin(h, params["w2"], params["b2"], True)
    enc = lin(h, params["w3"], params["b3"], True)
    h = lin(enc, params["w4"], params["b4"], True)
    h = lin(h, params["w5"], params["b5"], True)
    dec = lin(h, params["w6"], params["b6"], False)
    return dec, enc


if __name__ == "__main__":
    key = jax.random.PRNGKey(0)
    key, k_x, k_p = jax.random.split(key, 3)

    batch = 512
    input_dim = 64
    encoding_dim = 32

    x = jax.random.normal(k_x, (batch, input_dim), jnp.float32)
    params = init_params(k_p, input_dim, encoding_dim)
    kparams = pack_params_for_kernel(params, input_dim, encoding_dim)

    decoded, encoded = autoencoder_forward(
        x, kparams, input_dim=input_dim, encoding_dim=encoding_dim
    )
    decoded = jax.block_until_ready(decoded)
    encoded = jax.block_until_ready(encoded)

    dec_ref, enc_ref = reference_forward(x, params)
    assert decoded.shape == (batch, input_dim)
    assert encoded.shape == (batch, encoding_dim)
    assert jnp.allclose(decoded, dec_ref, atol=3e-2, rtol=3e-2)
    assert jnp.allclose(encoded, enc_ref, atol=3e-2, rtol=3e-2)

    print("KERNEL_OK")
</pallas_src>

<mosaic_0001>
module attributes {stable_mosaic.version = 11 : i64} {
  func.func @_autoencoder_kernel(%arg0: i32, %arg1: memref<512x64xf32, #tpu.memory_space<vmem>>, %arg2: memref<64x128xbf16, #tpu.memory_space<vmem>>, %arg3: memref<4x128x128xbf16, #tpu.memory_space<vmem>>, %arg4: memref<128x64xbf16, #tpu.memory_space<vmem>>, %arg5: memref<6x128xf32, #tpu.memory_space<vmem>>, %arg6: memref<512x64xf32, #tpu.memory_space<vmem>>, %arg7: memref<512x32xf32, #tpu.memory_space<vmem>>) attributes {dimension_semantics = [#tpu.dimension_semantics<parallel>], iteration_bounds = array<i64: 1>, scalar_prefetch = 0 : i64, scratch_operands = 0 : i64, tpu.core_type = #tpu.core_type<tc>, window_params = [{transform_indices = @transform_0, window_bounds = array<i64: 512, 64>}, {pipeline_mode = #tpu.pipeline_mode<synchronous>, transform_indices = @transform_1, window_bounds = array<i64: 64, 128>}, {pipeline_mode = #tpu.pipeline_mode<synchronous>, transform_indices = @transform_2, window_bounds = array<i64: 4, 128, 128>}, {pipeline_mode = #tpu.pipeline_mode<synchronous>, transform_indices = @transform_3, window_bounds = array<i64: 128, 64>}, {pipeline_mode = #tpu.pipeline_mode<synchronous>, transform_indices = @transform_4, window_bounds = array<i64: 6, 128>}, {transform_indices = @transform_5, window_bounds = array<i64: 512, 64>}, {transform_indices = @transform_6, window_bounds = array<i64: 512, 32>}]} {
    %c0 = arith.constant 0 : index
    %c0_0 = arith.constant 0 : index
    %0 = vector.load %arg5[%c0, %c0_0] : memref<6x128xf32, #tpu.memory_space<vmem>>, vector<6x128xf32>
    %c0_1 = arith.constant 0 : index
    %c0_2 = arith.constant 0 : index
    %1 = vector.load %arg1[%c0_1, %c0_2] : memref<512x64xf32, #tpu.memory_space<vmem>>, vector<512x64xf32>
    %2 = arith.truncf %1 : vector<512x64xf32> to vector<512x64xbf16>
    %c0_3 = arith.constant 0 : index
    %c0_4 = arith.constant 0 : index
    %3 = vector.load %arg2[%c0_3, %c0_4] : memref<64x128xbf16, #tpu.memory_space<vmem>>, vector<64x128xbf16>
    %cst = arith.constant dense<0.000000e+00> : vector<512x128xf32>
    %4 = tpu.matmul %2, %3, %cst {dimension_numbers = #tpu.dot_dimension_numbers<[1], [0], [0], [1], [0, 0, 1, 1], [], []>} : vector<512x64xbf16>, vector<64x128xbf16>, vector<512x128xf32> -> vector<512x128xf32>
    %5 = vector.extract_strided_slice %0 {offsets = [0, 0], sizes = [1, 128], strides = [1, 1]} : vector<6x128xf32> to vector<1x128xf32>
    %6 = vector.shape_cast %5 : vector<1x128xf32> to vector<128xf32>
    %7 = vector.shape_cast %6 : vector<128xf32> to vector<1x128xf32>
    %8 = vector.broadcast %7 : vector<1x128xf32> to vector<512x128xf32>
    %9 = arith.addf %4, %8 : vector<512x128xf32>
    %cst_5 = arith.constant 0.000000e+00 : f32
    %10 = vector.broadcast %cst_5 : f32 to vector<512x128xf32>
    %11 = arith.maximumf %9, %10 : vector<512x128xf32>
    %12 = arith.truncf %11 : vector<512x128xf32> to vector<512x128xbf16>
    %c0_6 = arith.constant 0 : index
    %c0_7 = arith.constant 0 : index
    %c0_8 = arith.constant 0 : index
    %13 = vector.load %arg3[%c0_6, %c0_7, %c0_8] : memref<4x128x128xbf16, #tpu.memory_space<vmem>>, vector<1x128x128xbf16>
    %14 = vector.shape_cast %13 : vector<1x128x128xbf16> to vector<128x128xbf16>
    %cst_9 = arith.constant dense<0.000000e+00> : vector<512x128xf32>
    %15 = tpu.matmul %12, %14, %cst_9 {dimension_numbers = #tpu.dot_dimension_numbers<[1], [0], [0], [1], [0, 0, 1, 1], [], []>} : vector<512x128xbf16>, vector<128x128xbf16>, vector<512x128xf32> -> vector<512x128xf32>
    %16 = vector.extract_strided_slice %0 {offsets = [1, 0], sizes = [1, 128], strides = [1, 1]} : vector<6x128xf32> to vector<1x128xf32>
    %17 = vector.shape_cast %16 : vector<1x128xf32> to vector<128xf32>
    %18 = vector.shape_cast %17 : vector<128xf32> to vector<1x128xf32>
    %19 = vector.broadcast %18 : vector<1x128xf32> to vector<512x128xf32>
    %20 = arith.addf %15, %19 : vector<512x128xf32>
    %cst_10 = arith.constant 0.000000e+00 : f32
    %21 = vector.broadcast %cst_10 : f32 to vector<512x128xf32>
    %22 = arith.maximumf %20, %21 : vector<512x128xf32>
    %23 = arith.truncf %22 : vector<512x128xf32> to vector<512x128xbf16>
    %c1 = arith.constant 1 : index
    %c0_11 = arith.constant 0 : index
    %c0_12 = arith.constant 0 : index
    %24 = vector.load %arg3[%c1, %c0_11, %c0_12] : memref<4x128x128xbf16, #tpu.memory_space<vmem>>, vector<1x128x128xbf16>
    %25 = vector.shape_cast %24 : vector<1x128x128xbf16> to vector<128x128xbf16>
    %cst_13 = arith.constant dense<0.000000e+00> : vector<512x128xf32>
    %26 = tpu.matmul %23, %25, %cst_13 {dimension_numbers = #tpu.dot_dimension_numbers<[1], [0], [0], [1], [0, 0, 1, 1], [], []>} : vector<512x128xbf16>, vector<128x128xbf16>, vector<512x128xf32> -> vector<512x128xf32>
    %27 = vector.extract_strided_slice %0 {offsets = [2, 0], sizes = [1, 128], strides = [1, 1]} : vector<6x128xf32> to vector<1x128xf32>
    %28 = vector.shape_cast %27 : vector<1x128xf32> to vector<128xf32>
    %29 = vector.shape_cast %28 : vector<128xf32> to vector<1x128xf32>
    %30 = vector.broadcast %29 : vector<1x128xf32> to vector<512x128xf32>
    %31 = arith.addf %26, %30 : vector<512x128xf32>
    %cst_14 = arith.constant 0.000000e+00 : f32
    %32 = vector.broadcast %cst_14 : f32 to vector<512x128xf32>
    %33 = arith.maximumf %31, %32 : vector<512x128xf32>
    %34 = vector.extract_strided_slice %33 {offsets = [0, 0], sizes = [512, 32], strides = [1, 1]} : vector<512x128xf32> to vector<512x32xf32>
    %c0_15 = arith.constant 0 : index
    %c0_16 = arith.constant 0 : index
    %35 = vector.load %arg7[%c0_15, %c0_16] : memref<512x32xf32, #tpu.memory_space<vmem>>, vector<512x32xf32>
    tpu.vector_store %arg7[%c0_15, %c0_16], %34 {strides = array<i32>} : memref<512x32xf32, #tpu.memory_space<vmem>>, vector<512x32xf32>,
    %36 = arith.truncf %33 : vector<512x128xf32> to vector<512x128xbf16>
    %c2 = arith.constant 2 : index
    %c0_17 = arith.constant 0 : index
    %c0_18 = arith.constant 0 : index
    %37 = vector.load %arg3[%c2, %c0_17, %c0_18] : memref<4x128x128xbf16, #tpu.memory_space<vmem>>, vector<1x128x128xbf16>
    %38 = vector.shape_cast %37 : vector<1x128x128xbf16> to vector<128x128xbf16>
    %cst_19 = arith.constant dense<0.000000e+00> : vector<512x128xf32>
    %39 = tpu.matmul %36, %38, %cst_19 {dimension_numbers = #tpu.dot_dimension_numbers<[1], [0], [0], [1], [0, 0, 1, 1], [], []>} : vector<512x128xbf16>, vector<128x128xbf16>, vector<512x128xf32> -> vector<512x128xf32>
    %40 = vector.extract_strided_slice %0 {offsets = [3, 0], sizes = [1, 128], strides = [1, 1]} : vector<6x128xf32> to vector<1x128xf32>
    %41 = vector.shape_cast %40 : vector<1x128xf32> to vector<128xf32>
    %42 = vector.shape_cast %41 : vector<128xf32> to vector<1x128xf32>
    %43 = vector.broadcast %42 : vector<1x128xf32> to vector<512x128xf32>
    %44 = arith.addf %39, %43 : vector<512x128xf32>
    %cst_20 = arith.constant 0.000000e+00 : f32
    %45 = vector.broadcast %cst_20 : f32 to vector<512x128xf32>
    %46 = arith.maximumf %44, %45 : vector<512x128xf32>
    %47 = arith.truncf %46 : vector<512x128xf32> to vector<512x128xbf16>
    %c3 = arith.constant 3 : index
    %c0_21 = arith.constant 0 : index
    %c0_22 = arith.constant 0 : index
    %48 = vector.load %arg3[%c3, %c0_21, %c0_22] : memref<4x128x128xbf16, #tpu.memory_space<vmem>>, vector<1x128x128xbf16>
    %49 = vector.shape_cast %48 : vector<1x128x128xbf16> to vector<128x128xbf16>
    %cst_23 = arith.constant dense<0.000000e+00> : vector<512x128xf32>
    %50 = tpu.matmul %47, %49, %cst_23 {dimension_numbers = #tpu.dot_dimension_numbers<[1], [0], [0], [1], [0, 0, 1, 1], [], []>} : vector<512x128xbf16>, vector<128x128xbf16>, vector<512x128xf32> -> vector<512x128xf32>
    %51 = vector.extract_strided_slice %0 {offsets = [4, 0], sizes = [1, 128], strides = [1, 1]} : vector<6x128xf32> to vector<1x128xf32>
    %52 = vector.shape_cast %51 : vector<1x128xf32> to vector<128xf32>
    %53 = vector.shape_cast %52 : vector<128xf32> to vector<1x128xf32>
    %54 = vector.broadcast %53 : vector<1x128xf32> to vector<512x128xf32>
    %55 = arith.addf %50, %54 : vector<512x128xf32>
    %cst_24 = arith.constant 0.000000e+00 : f32
    %56 = vector.broadcast %cst_24 : f32 to vector<512x128xf32>
    %57 = arith.maximumf %55, %56 : vector<512x128xf32>
    %58 = arith.truncf %57 : vector<512x128xf32> to vector<512x128xbf16>
    %c0_25 = arith.constant 0 : index
    %c0_26 = arith.constant 0 : index
    %59 = vector.load %arg4[%c0_25, %c0_26] : memref<128x64xbf16, #tpu.memory_space<vmem>>, vector<128x64xbf16>
    %cst_27 = arith.constant dense<0.000000e+00> : vector<512x64xf32>
    %60 = tpu.matmul %58, %59, %cst_27 {dimension_numbers = #tpu.dot_dimension_numbers<[1], [0], [0], [1], [0, 0, 1, 1], [], []>} : vector<512x128xbf16>, vector<128x64xbf16>, vector<512x64xf32> -> vector<512x64xf32>
    %61 = vector.extract_strided_slice %0 {offsets = [5, 0], sizes = [1, 64], strides = [1, 1]} : vector<6x128xf32> to vector<1x64xf32>
    %62 = vector.shape_cast %61 : vector<1x64xf32> to vector<64xf32>
    %63 = vector.shape_cast %62 : vector<64xf32> to vector<1x64xf32>
    %64 = vector.broadcast %63 : vector<1x64xf32> to vector<512x64xf32>
    %65 = arith.addf %60, %64 : vector<512x64xf32>
    %c0_28 = arith.constant 0 : index
    %c0_29 = arith.constant 0 : index
    %66 = vector.load %arg6[%c0_28, %c0_29] : memref<512x64xf32, #tpu.memory_space<vmem>>, vector<512x64xf32>
    tpu.vector_store %arg6[%c0_28, %c0_29], %65 {strides = array<i32>} : memref<512x64xf32, #tpu.memory_space<vmem>>, vector<512x64xf32>,
    return
  }
  func.func @transform_0(%arg0: i32) -> (i32, i32) {
    %c0_i32 = arith.constant 0 : i32
    %c0_i32_0 = arith.constant 0 : i32
    return %arg0, %c0_i32 : i32, i32
  }
  func.func @transform_1(%arg0: i32) -> (i32, i32) {
    %c0_i32 = arith.constant 0 : i32
    %c0_i32_0 = arith.constant 0 : i32
    %c0_i32_1 = arith.constant 0 : i32
    return %c0_i32, %c0_i32_0 : i32, i32
  }
  func.func @transform_2(%arg0: i32) -> (i32, i32, i32) {
    %c0_i32 = arith.constant 0 : i32
    %c0_i32_0 = arith.constant 0 : i32
    %c0_i32_1 = arith.constant 0 : i32
    %c0_i32_2 = arith.constant 0 : i32
    return %c0_i32, %c0_i32_0, %c0_i32_1 : i32, i32, i32
  }
  func.func @transform_3(%arg0: i32) -> (i32, i32) {
    %c0_i32 = arith.constant 0 : i32
    %c0_i32_0 = arith.constant 0 : i32
    %c0_i32_1 = arith.constant 0 : i32
    return %c0_i32, %c0_i32_0 : i32, i32
  }
  func.func @transform_4(%arg0: i32) -> (i32, i32) {
    %c0_i32 = arith.constant 0 : i32
    %c0_i32_0 = arith.constant 0 : i32
    %c0_i32_1 = arith.constant 0 : i32
    return %c0_i32, %c0_i32_0 : i32, i32
  }
  func.func @transform_5(%arg0: i32) -> (i32, i32) {
    %c0_i32 = arith.constant 0 : i32
    %c0_i32_0 = arith.constant 0 : i32
    return %arg0, %c0_i32 : i32, i32
  }
  func.func @transform_6(%arg0: i32) -> (i32, i32) {
    %c0_i32 = arith.constant 0 : i32
    %c0_i32_0 = arith.constant 0 : i32
    return %arg0, %c0_i32 : i32, i32
  }
}

</mosaic_0001>

<llo_original>
// kernel: tpu_custom_call.1
$region0: #{tpu_custom_call.1}
  #allocation0 [shape = 'u32[]', space=smem, size = 0x4, offset = 0x4, fixed_abs, tag = 'smem constant byte address 0x4 - core index']
  #allocation1 [shape = 'u32[144,128]{1,0:T(1,128)}', space=vmem, size = 0x12000, scoped, tag = 'internal scratch']
  %s0 = inlined_call_operand.vmem [shape: f32[512,64], index: 0, kind: input, shape index: {}]
  %s1 = inlined_call_operand.vmem [shape: bf16[64,128], index: 1, kind: input, shape index: {}]
  %s2 = inlined_call_operand.vmem [shape: bf16[4,128,128], index: 2, kind: input, shape index: {}]
  %s3 = inlined_call_operand.vmem [shape: bf16[128,64], index: 3, kind: input, shape index: {}]
  %s4 = inlined_call_operand.vmem [shape: f32[6,128], index: 4, kind: input, shape index: {}]
  %s5 = inlined_call_operand.vmem [shape: f32[512,64], index: 5, kind: output, shape index: {0}]
  %s6 = inlined_call_operand.vmem [shape: f32[512,32], index: 6, kind: output, shape index: {1}]
  %7 = xla_tuple %s5, %s6
  %s8 = sld [smem:[#allocation0]]
  $region38: #{tpu_custom_call.1} parent=0
    _
  %s10 = ssub.s32 1, %s8
  %s11 = scalar_select 0, %s10, %s8
  // Predicated region
  $region2: #{tpu_custom_call.1} parent=0 // pred_check
    _
  $region3: #{tpu_custom_call.1} parent=0 // pred_check_branch
    %13 = sbr.rel (0) target = $region5
  $region4: #{tpu_custom_call.1} parent=0 // pred_region
    _
  $region5: #{tpu_custom_call.1} parent=0 // pred_fallthru
    _
  // Predicated region
  $region6: #{tpu_custom_call.1} parent=0 // pred_check
    _
  $region7: #{tpu_custom_call.1} parent=0 // pred_check_branch
    %15 = sbr.rel (0) target = $region9
  $region8: #{tpu_custom_call.1} parent=0 // pred_region
    _
  $region9: #{tpu_custom_call.1} parent=0 // pred_fallthru
    _
  // Predicated region
  $region10: #{tpu_custom_call.1} parent=0 // pred_check
    _
  $region11: #{tpu_custom_call.1} parent=0 // pred_check_branch
    %17 = sbr.rel (0) target = $region13
  $region12: #{tpu_custom_call.1} parent=0 // pred_region
    _
  $region13: #{tpu_custom_call.1} parent=0 // pred_fallthru
    _
  // Predicated region
  $region14: #{tpu_custom_call.1} parent=0 // pred_check
    _
  $region15: #{tpu_custom_call.1} parent=0 // pred_check_branch
    %19 = sbr.rel (0) target = $region17
  $region16: #{tpu_custom_call.1} parent=0 // pred_region
    _
  $region17: #{tpu_custom_call.1} parent=0 // pred_fallthru
    _
  // Predicated region
  $region18: #{tpu_custom_call.1} parent=0 // pred_check
    _
  $region19: #{tpu_custom_call.1} parent=0 // pred_check_branch
    %21 = sbr.rel (0) target = $region21
  $region20: #{tpu_custom_call.1} parent=0 // pred_region
    _
  $region21: #{tpu_custom_call.1} parent=0 // pred_fallthru
    _
  %v23 = vld [vmem:[%s4] sm:$0x3f]
  %v24 = vld [vmem:[%s0] sm:$0xff]
  %v25 = vld [vmem:[%s0 + $0x8] sm:$0xff]
  %v26 = vld [vmem:[%s0 + $0x10] sm:$0xff]
  %v27 = vld [vmem:[%s0 + $0x18] sm:$0xff]
  %v28 = vld [vmem:[%s0 + $0x20] sm:$0xff]
  %v29 = vld [vmem:[%s0 + $0x28] sm:$0xff]
  %v30 = vld [vmem:[%s0 + $0x30] sm:$0xff]
  %v31 = vld [vmem:[%s0 + $0x38] sm:$0xff]
  %v32 = vld [vmem:[%s0 + $0x40] sm:$0xff]
  %v33 = vld [vmem:[%s0 + $0x48] sm:$0xff]
  %v34 = vld [vmem:[%s0 + $0x50] sm:$0xff]
  %v35 = vld [vmem:[%s0 + $0x58] sm:$0xff]
  %v36 = vld [vmem:[%s0 + $0x60] sm:$0xff]
  %v37 = vld [vmem:[%s0 + $0x68] sm:$0xff]
  %v38 = vld [vmem:[%s0 + $0x70] sm:$0xff]
  %v39 = vld [vmem:[%s0 + $0x78] sm:$0xff]
  %v40 = vld [vmem:[%s0 + $0x80] sm:$0xff]
  %v41 = vld [vmem:[%s0 + $0x88] sm:$0xff]
  %v42 = vld [vmem:[%s0 + $0x90] sm:$0xff]
  %v43 = vld [vmem:[%s0 + $0x98] sm:$0xff]
  %v44 = vld [vmem:[%s0 + $0xa0] sm:$0xff]
  %v45 = vld [vmem:[%s0 + $0xa8] sm:$0xff]
  %v46 = vld [vmem:[%s0 + $0xb0] sm:$0xff]
  %v47 = vld [vmem:[%s0 + $0xb8] sm:$0xff]
  %v48 = vld [vmem:[%s0 + $0xc0] sm:$0xff]
  %v49 = vld [vmem:[%s0 + $0xc8] sm:$0xff]
  %v50 = vld [vmem:[%s0 + $0xd0] sm:$0xff]
  %v51 = vld [vmem:[%s0 + $0xd8] sm:$0xff]
  %v52 = vld [vmem:[%s0 + $0xe0] sm:$0xff]
  %v53 = vld [vmem:[%s0 + $0xe8] sm:$0xff]
  %v54 = vld [vmem:[%s0 + $0xf0] sm:$0xff]
  %v55 = vld [vmem:[%s0 + $0xf8] sm:$0xff]
  %v56 = vld [vmem:[%s0 + $0x100] sm:$0xff]
  %v57 = vld [vmem:[%s0 + $0x108] sm:$0xff]
  %v58 = vld [vmem:[%s0 + $0x110] sm:$0xff]
  %v59 = vld [vmem:[%s0 + $0x118] sm:$0xff]
  %v60 = vld [vmem:[%s0 + $0x120] sm:$0xff]
  %v61 = vld [vmem:[%s0 + $0x128] sm:$0xff]
  %v62 = vld [vmem:[%s0 + $0x130] sm:$0xff]
  %v63 = vld [vmem:[%s0 + $0x138] sm:$0xff]
  %v64 = vld [vmem:[%s0 + $0x140] sm:$0xff]
  %v65 = vld [vmem:[%s0 + $0x148] sm:$0xff]
  %v66 = vld [vmem:[%s0 + $0x150] sm:$0xff]
  %v67 = vld [vmem:[%s0 + $0x158] sm:$0xff]
  %v68 = vld [vmem:[%s0 + $0x160] sm:$0xff]
  %v69 = vld [vmem:[%s0 + $0x168] sm:$0xff]
  %v70 = vld [vmem:[%s0 + $0x170] sm:$0xff]
  %v71 = vld [vmem:[%s0 + $0x178] sm:$0xff]
  %v72 = vld [vmem:[%s0 + $0x180] sm:$0xff]
  %v73 = vld [vmem:[%s0 + $0x188] sm:$0xff]
  %v74 = vld [vmem:[%s0 + $0x190] sm:$0xff]
  %v75 = vld [vmem:[%s0 + $0x198] sm:$0xff]
  %v76 = vld [vmem:[%s0 + $0x1a0] sm:$0xff]
  %v77 = vld [vmem:[%s0 + $0x1a8] sm:$0xff]
  %v78 = vld [vmem:[%s0 + $0x1b0] sm:$0xff]
  %v79 = vld [vmem:[%s0 + $0x1b8] sm:$0xff]
  %v80 = vld [vmem:[%s0 + $0x1c0] sm:$0xff]
  %v81 = vld [vmem:[%s0 + $0x1c8] sm:$0xff]
  %v82 = vld [vmem:[%s0 + $0x1d0] sm:$0xff]
  %v83 = vld [vmem:[%s0 + $0x1d8] sm:$0xff]
  %v84 = vld [vmem:[%s0 + $0x1e0] sm:$0xff]
  %v85 = vld [vmem:[%s0 + $0x1e8] sm:$0xff]
  %v86 = vld [vmem:[%s0 + $0x1f0] sm:$0xff]
  %v87 = vld [vmem:[%s0 + $0x1f8] sm:$0xff]
  %v88 = vpack.c.bf16 %v25, %v24
  %v89 = vpack.c.bf16 %v27, %v26
  %v90 = vpack.c.bf16 %v29, %v28
  %v91 = vpack.c.bf16 %v31, %v30
  %v92 = vpack.c.bf16 %v33, %v32
  %v93 = vpack.c.bf16 %v35, %v34
  %v94 = vpack.c.bf16 %v37, %v36
  %v95 = vpack.c.bf16 %v39, %v38
  %v96 = vpack.c.bf16 %v41, %v40
  %v97 = vpack.c.bf16 %v43, %v42
  %v98 = vpack.c.bf16 %v45, %v44
  %v99 = vpack.c.bf16 %v47, %v46
  %v100 = vpack.c.bf16 %v49, %v48
  %v101 = vpack.c.bf16 %v51, %v50
  %v102 = vpack.c.bf16 %v53, %v52
  %v103 = vpack.c.bf16 %v55, %v54
  %v104 = vpack.c.bf16 %v57, %v56
  %v105 = vpack.c.bf16 %v59, %v58
  %v106 = vpack.c.bf16 %v61, %v60
  %v107 = vpack.c.bf16 %v63, %v62
  %v108 = vpack.c.bf16 %v65, %v64
  %v109 = vpack.c.bf16 %v67, %v66
  %v110 = vpack.c.bf16 %v69, %v68
  %v111 = vpack.c.bf16 %v71, %v70
  %v112 = vpack.c.bf16 %v73, %v72
  %v113 = vpack.c.bf16 %v75, %v74
  %v114 = vpack.c.bf16 %v77, %v76
  %v115 = vpack.c.bf16 %v79, %v78
  %v116 = vpack.c.bf16 %v81, %v80
  %v117 = vpack.c.bf16 %v83, %v82
  %v118 = vpack.c.bf16 %v85, %v84
  %v119 = vpack.c.bf16 %v87, %v86
  %v120 = vld [vmem:[%s1] sm:$0xf]
  %v121 = vld [vmem:[%s1 + $0x4] sm:$0xf]
  %v122 = vld [vmem:[%s1 + $0x8] sm:$0xf]
  %v123 = vld [vmem:[%s1 + $0xc] sm:$0xf]
  %v124 = vld [vmem:[%s1 + $0x10] sm:$0xf]
  %v125 = vld [vmem:[%s1 + $0x14] sm:$0xf]
  %v126 = vld [vmem:[%s1 + $0x18] sm:$0xf]
  %v127 = vld [vmem:[%s1 + $0x1c] sm:$0xf]
  %v128 = vlaneseq
  %v129 = vshrl.u32 %v128, 7
  %v130 = vsub.s32 0, %v129
  %v131 = vrot.slane %v23, %v130
  %v140 = vunpack.c.l.b16 %v120
  %v141 = vunpack.c.l.b16 %v121
  %v142 = vunpack.c.l.b16 %v122
  %v143 = vunpack.c.l.b16 %v123
  %v144 = vunpack.c.l.b16 %v124
  %v145 = vunpack.c.l.b16 %v125
  %v146 = vunpack.c.l.b16 %v126
  %v147 = vunpack.c.l.b16 %v127
  %v148 = vpack.c.b16 %v141, %v140
  %v149 = vpack.c.b16 %v143, %v142
  %v150 = vpack.c.b16 %v145, %v144
  %v151 = vpack.c.b16 %v147, %v146
  %vm156 = vcmask 523264
  %v158 = vsel %vm156, %v88, 0
  %v161 = vsel %vm156, %v89, 0
  %v164 = vsel %vm156, %v90, 0
  %v167 = vsel %vm156, %v91, 0
  %v170 = vsel %vm156, %v92, 0
  %v173 = vsel %vm156, %v93, 0
  %v176 = vsel %vm156, %v94, 0
  %v179 = vsel %vm156, %v95, 0
  %v182 = vsel %vm156, %v96, 0
  %v185 = vsel %vm156, %v97, 0
  %v188 = vsel %vm156, %v98, 0
  %v191 = vsel %vm156, %v99, 0
  %v194 = vsel %vm156, %v100, 0
  %v197 = vsel %vm156, %v101, 0
  %v200 = vsel %vm156, %v102, 0
  %v203 = vsel %vm156, %v103, 0
  %v206 = vsel %vm156, %v104, 0
  %v209 = vsel %vm156, %v105, 0
  %v212 = vsel %vm156, %v106, 0
  %v215 = vsel %vm156, %v107, 0
  %v218 = vsel %vm156, %v108, 0
  %v221 = vsel %vm156, %v109, 0
  %v224 = vsel %vm156, %v110, 0
  %v227 = vsel %vm156, %v111, 0
  %v230 = vsel %vm156, %v112, 0
  %v233 = vsel %vm156, %v113, 0
  %v236 = vsel %vm156, %v114, 0
  %v239 = vsel %vm156, %v115, 0
  %v242 = vsel %vm156, %v116, 0
  %v245 = vsel %vm156, %v117, 0
  %v248 = vsel %vm156, %v118, 0
  %v251 = vsel %vm156, %v119, 0
  %253 = vmatprep.subr.bf16.mxu0 0
  %254 = vmatpush1.bf16.msra.mxu0 %v148
  %255 = vmatprep.subr.bf16.mxu0 0
  %256 = vmatpush1.bf16.msra.mxu0 %v149
  %257 = vmatprep.subr.bf16.mxu0 0
  %258 = vmatpush1.bf16.msra.mxu0 %v150
  %259 = vmatprep.subr.bf16.mxu0 0
  %260 = vmatpush1.bf16.msra.mxu0 %v151
  %261 = vmatprep.subr.bf16.mxu0 0
  %262 = vmatpush1.bf16.msra.mxu0 0
  %263 = vmatprep.subr.bf16.mxu0 0
  %264 = vmatpush1.bf16.msra.mxu0 0
  %265 = vmatprep.subr.bf16.mxu0 0
  %266 = vmatpush1.bf16.msra.mxu0 0
  %267 = vmatprep.subr.bf16.mxu0 0
  %268 = vmatpush1.bf16.msra.mxu0 0
  %269 = vmatprep.subr.bf16.mxu0 0
  %270 = vmatpush1.bf16.msra.mxu0 0
  %271 = vmatprep.subr.bf16.mxu0 0
  %272 = vmatpush1.bf16.msra.mxu0 0
  %273 = vmatprep.subr.bf16.mxu0 0
  %274 = vmatpush1.bf16.msra.mxu0 0
  %275 = vmatprep.subr.bf16.mxu0 0
  %276 = vmatpush1.bf16.msra.mxu0 0
  %277 = vmatprep.subr.bf16.mxu0 0
  %278 = vmatpush1.bf16.msra.mxu0 0
  %279 = vmatprep.subr.bf16.mxu0 0
  %280 = vmatpush1.bf16.msra.mxu0 0
  %281 = vmatprep.subr.bf16.mxu0 0
  %282 = vmatpush1.bf16.msra.mxu0 0
  %283 = vmatprep.subr.bf16.mxu0 0
  %284 = vmatpush1.bf16.msra.mxu0 0
  %285 = vmatprep.mubr.bf16.mxu0 0
  %286 = vmatmul.mubr.bf16.gmra.mrb[0].mxu0 %v158
  %v287 = vpop.f32.mrb[0].mxu0
  %v288 = vadd.f32 %v131, %v287
  %v289 = vpop.f32.mrb[0].mxu0
  %v290 = vpop.f32.mrb[0].mxu0
  %v291 = vadd.f32 %v131, %v290
  %v292 = vpop.f32.mrb[0].mxu0
  %293 = vmatprep.mubr.bf16.mxu0 0
  %294 = vmatmul.mubr.bf16.gmra.mrb[0].mxu0 %v161
  %v295 = vpop.f32.mrb[0].mxu0
  %v296 = vadd.f32 %v131, %v295
  %v297 = vpop.f32.mrb[0].mxu0
  %v298 = vpop.f32.mrb[0].mxu0
  %v299 = vadd.f32 %v131, %v298
  %v300 = vpop.f32.mrb[0].mxu0
  %301 = vmatprep.mubr.bf16.mxu0 0
  %302 = vmatmul.mubr.bf16.gmra.mrb[0].mxu0 %v164
  %v303 = vpop.f32.mrb[0].mxu0
  %v304 = vadd.f32 %v131, %v303
  %v305 = vpop.f32.mrb[0].mxu0
  %v306 = vpop.f32.mrb[0].mxu0
  %v307 = vadd.f32 %v131, %v306
  %v308 = vpop.f32.mrb[0].mxu0
  %309 = vmatprep.mubr.bf16.mxu0 0
  %310 = vmatmul.mubr.bf16.gmra.mrb[0].mxu0 %v167
  %v311 = vpop.f32.mrb[0].mxu0
  %v312 = vadd.f32 %v131, %v311
  %v313 = vpop.f32.mrb[0].mxu0
  %v314 = vpop.f32.mrb[0].mxu0
  %v315 = vadd.f32 %v131, %v314
  %v316 = vpop.f32.mrb[0].mxu0
  %317 = vmatprep.mubr.bf16.mxu0 0
  %318 = vmatmul.mubr.bf16.gmra.mrb[0].mxu0 %v170
  %v319 = vpop.f32.mrb[0].mxu0
  %v320 = vadd.f32 %v131, %v319
  %v321 = vpop.f32.mrb[0].mxu0
  %v322 = vpop.f32.mrb[0].mxu0
  %v323 = vadd.f32 %v131, %v322
  %v324 = vpop.f32.mrb[0].mxu0
  %325 = vmatprep.mubr.bf16.mxu0 0
  %326 = vmatmul.mubr.bf16.gmra.mrb[0].mxu0 %v173
  %v327 = vpop.f32.mrb[0].mxu0
  %v328 = vadd.f32 %v131, %v327
  %v329 = vpop.f32.mrb[0].mxu0
  %v330 = vpop.f32.mrb[0].mxu0
  %v331 = vadd.f32 %v131, %v330
  %v332 = vpop.f32.mrb[0].mxu0
  %333 = vmatprep.mubr.bf16.mxu0 0
  %334 = vmatmul.mubr.bf16.gmra.mrb[0].mxu0 %v176
  %v335 = vpop.f32.mrb[0].mxu0
  %v336 = vadd.f32 %v131, %v335
  %v337 = vpop.f32.mrb[0].mxu0
  %v338 = vpop.f32.mrb[0].mxu0
  %v339 = vadd.f32 %v131, %v338
  %v340 = vpop.f32.mrb[0].mxu0
  %341 = vmatprep.mubr.bf16.mxu0 0
  %342 = vmatmul.mubr.bf16.gmra.mrb[0].mxu0 %v179
  %v343 = vpop.f32.mrb[0].mxu0
  %v344 = vadd.f32 %v131, %v343
  %v345 = vpop.f32.mrb[0].mxu0
  %v346 = vpop.f32.mrb[0].mxu0
  %v347 = vadd.f32 %v131, %v346
  %v348 = vpop.f32.mrb[0].mxu0
  %349 = vmatprep.mubr.bf16.mxu0 0
  %350 = vmatmul.mubr.bf16.gmra.mrb[0].mxu0 %v182
  %v351 = vpop.f32.mrb[0].mxu0
  %v352 = vadd.f32 %v131, %v351
  %v353 = vpop.f32.mrb[0].mxu0
  %v354 = vpop.f32.mrb[0].mxu0
  %v355 = vadd.f32 %v131, %v354
  %v356 = vpop.f32.mrb[0].mxu0
  %357 = vmatprep.mubr.bf16.mxu0 0
  %358 = vmatmul.mubr.bf16.gmra.mrb[0].mxu0 %v185
  %v359 = vpop.f32.mrb[0].mxu0
  %v360 = vadd.f32 %v131, %v359
  %v361 = vpop.f32.mrb[0].mxu0
  %v362 = vpop.f32.mrb[0].mxu0
  %v363 = vadd.f32 %v131, %v362
  %v364 = vpop.f32.mrb[0].mxu0
  %365 = vmatprep.mubr.bf16.mxu0 0
  %366 = vmatmul.mubr.bf16.gmra.mrb[0].mxu0 %v188
  %v367 = vpop.f32.mrb[0].mxu0
  %v368 = vadd.f32 %v131, %v367
  %v369 = vpop.f32.mrb[0].mxu0
  %v370 = vpop.f32.mrb[0].mxu0
  %v371 = vadd.f32 %v131, %v370
  %v372 = vpop.f32.mrb[0].mxu0
  %373 = vmatprep.mubr.bf16.mxu0 0
  %374 = vmatmul.mubr.bf16.gmra.mrb[0].mxu0 %v191
  %v375 = vpop.f32.mrb[0].mxu0
  %v376 = vadd.f32 %v131, %v375
  %v377 = vpop.f32.mrb[0].mxu0
  %v378 = vpop.f32.mrb[0].mxu0
  %v379 = vadd.f32 %v131, %v378
  %v380 = vpop.f32.mrb[0].mxu0
  %381 = vmatprep.mubr.bf16.mxu0 0
  %382 = vmatmul.mubr.bf16.gmra.mrb[0].mxu0 %v194
  %v383 = vpop.f32.mrb[0].mxu0
  %v384 = vadd.f32 %v131, %v383
  %v385 = vpop.f32.mrb[0].mxu0
  %v386 = vpop.f32.mrb[0].mxu0
  %v387 = vadd.f32 %v131, %v386
  %v388 = vpop.f32.mrb[0].mxu0
  %389 = vmatprep.mubr.bf16.mxu0 0
  %390 = vmatmul.mubr.bf16.gmra.mrb[0].mxu0 %v197
  %v391 = vpop.f32.mrb[0].mxu0
  %v392 = vadd.f32 %v131, %v391
  %v393 = vpop.f32.mrb[0].mxu0
  %v394 = vpop.f32.mrb[0].mxu0
  %v395 = vadd.f32 %v131, %v394
  %v396 = vpop.f32.mrb[0].mxu0
  %397 = vmatprep.mubr.bf16.mxu0 0
  %398 = vmatmul.mubr.bf16.gmra.mrb[0].mxu0 %v200
  %v399 = vpop.f32.mrb[0].mxu0
  %v400 = vadd.f32 %v131, %v399
  %v401 = vpop.f32.mrb[0].mxu0
  %v402 = vpop.f32.mrb[0].mxu0
  %v403 = vadd.f32 %v131, %v402
  %v404 = vpop.f32.mrb[0].mxu0
  %405 = vmatprep.mubr.bf16.mxu0 0
  %406 = vmatmul.mubr.bf16.gmra.mrb[0].mxu0 %v203
  %v407 = vpop.f32.mrb[0].mxu0
  %v408 = vadd.f32 %v131, %v407
  %v409 = vpop.f32.mrb[0].mxu0
  %v410 = vpop.f32.mrb[0].mxu0
  %v411 = vadd.f32 %v131, %v410
  %v412 = vpop.f32.mrb[0].mxu0
  %413 = vmatprep.mubr.bf16.mxu0 0
  %414 = vmatmul.mubr.bf16.gmra.mrb[0].mxu0 %v206
  %v415 = vpop.f32.mrb[0].mxu0
  %v416 = vadd.f32 %v131, %v415
  %v417 = vpop.f32.mrb[0].mxu0
  %v418 = vpop.f32.mrb[0].mxu0
  %v419 = vadd.f32 %v131, %v418
  %v420 = vpop.f32.mrb[0].mxu0
  %421 = vmatprep.mubr.bf16.mxu0 0
  %422 = vmatmul.mubr.bf16.gmra.mrb[0].mxu0 %v209
  %v423 = vpop.f32.mrb[0].mxu0
  %v424 = vadd.f32 %v131, %v423
  %v425 = vpop.f32.mrb[0].mxu0
  %v426 = vpop.f32.mrb[0].mxu0
  %v427 = vadd.f32 %v131, %v426
  %v428 = vpop.f32.mrb[0].mxu0
  %429 = vmatprep.mubr.bf16.mxu0 0
  %430 = vmatmul.mubr.bf16.gmra.mrb[0].mxu0 %v212
  %v431 = vpop.f32.mrb[0].mxu0
  %v432 = vadd.f32 %v131, %v431
  %v433 = vpop.f32.mrb[0].mxu0
  %v434 = vpop.f32.mrb[0].mxu0
  %v435 = vadd.f32 %v131, %v434
  %v436 = vpop.f32.mrb[0].mxu0
  %437 = vmatprep.mubr.bf16.mxu0 0
  %438 = vmatmul.mubr.bf16.gmra.mrb[0].mxu0 %v215
  %v439 = vpop.f32.mrb[0].mxu0
  %v440 = vadd.f32 %v131, %v439
  %v441 = vpop.f32.mrb[0].mxu0
  %v442 = vpop.f32.mrb[0].mxu0
  %v443 = vadd.f32 %v131, %v442
  %v444 = vpop.f32.mrb[0].mxu0
  %445 = vmatprep.mubr.bf16.mxu0 0
  %446 = vmatmul.mubr.bf16.gmra.mrb[0].mxu0 %v218
  %v447 = vpop.f32.mrb[0].mxu0
  %v448 = vadd.f32 %v131, %v447
  %v449 = vpop.f32.mrb[0].mxu0
  %v450 = vpop.f32.mrb[0].mxu0
  %v451 = vadd.f32 %v131, %v450
  %v452 = vpop.f32.mrb[0].mxu0
  %453 = vmatprep.mubr.bf16.mxu0 0
  %454 = vmatmul.mubr.bf16.gmra.mrb[0].mxu0 %v221
  %v455 = vpop.f32.mrb[0].mxu0
  %v456 = vadd.f32 %v131, %v455
  %v457 = vpop.f32.mrb[0].mxu0
  %v458 = vpop.f32.mrb[0].mxu0
  %v459 = vadd.f32 %v131, %v458
  %v460 = vpop.f32.mrb[0].mxu0
  %461 = vmatprep.mubr.bf16.mxu0 0
  %462 = vmatmul.mubr.bf16.gmra.mrb[0].mxu0 %v224
  %v463 = vpop.f32.mrb[0].mxu0
  %v464 = vadd.f32 %v131, %v463
  %v465 = vpop.f32.mrb[0].mxu0
  %v466 = vpop.f32.mrb[0].mxu0
  %v467 = vadd.f32 %v131, %v466
  %v468 = vpop.f32.mrb[0].mxu0
  %469 = vmatprep.mubr.bf16.mxu0 0
  %470 = vmatmul.mubr.bf16.gmra.mrb[0].mxu0 %v227
  %v471 = vpop.f32.mrb[0].mxu0
  %v472 = vadd.f32 %v131, %v471
  %v473 = vpop.f32.mrb[0].mxu0
  %v474 = vpop.f32.mrb[0].mxu0
  %v475 = vadd.f32 %v131, %v474
  %v476 = vpop.f32.mrb[0].mxu0
  %477 = vmatprep.mubr.bf16.mxu0 0
  %478 = vmatmul.mubr.bf16.gmra.mrb[0].mxu0 %v230
  %v479 = vpop.f32.mrb[0].mxu0
  %v480 = vadd.f32 %v131, %v479
  %v481 = vpop.f32.mrb[0].mxu0
  %v482 = vpop.f32.mrb[0].mxu0
  %v483 = vadd.f32 %v131, %v482
  %v484 = vpop.f32.mrb[0].mxu0
  %485 = vmatprep.mubr.bf16.mxu0 0
  %486 = vmatmul.mubr.bf16.gmra.mrb[0].mxu0 %v233
  %v487 = vpop.f32.mrb[0].mxu0
  %v488 = vadd.f32 %v131, %v487
  %v489 = vpop.f32.mrb[0].mxu0
  %v490 = vpop.f32.mrb[0].mxu0
  %v491 = vadd.f32 %v131, %v490
  %v492 = vpop.f32.mrb[0].mxu0
  %493 = vmatprep.mubr.bf16.mxu0 0
  %494 = vmatmul.mubr.bf16.gmra.mrb[0].mxu0 %v236
  %v495 = vpop.f32.mrb[0].mxu0
  %v496 = vadd.f32 %v131, %v495
  %v497 = vpop.f32.mrb[0].mxu0
  %v498 = vpop.f32.mrb[0].mxu0
  %v499 = vadd.f32 %v131, %v498
  %v500 = vpop.f32.mrb[0].mxu0
  %501 = vmatprep.mubr.bf16.mxu0 0
  %502 = vmatmul.mubr.bf16.gmra.mrb[0].mxu0 %v239
  %v503 = vpop.f32.mrb[0].mxu0
  %v504 = vadd.f32 %v131, %v503
  %v505 = vpop.f32.mrb[0].mxu0
  %v506 = vpop.f32.mrb[0].mxu0
  %v507 = vadd.f32 %v131, %v506
  %v508 = vpop.f32.mrb[0].mxu0
  %509 = vmatprep.mubr.bf16.mxu0 0
  %510 = vmatmul.mubr.bf16.gmra.mrb[0].mxu0 %v242
  %v511 = vpop.f32.mrb[0].mxu0
  %v512 = vadd.f32 %v131, %v511
  %v513 = vpop.f32.mrb[0].mxu0
  %v514 = vpop.f32.mrb[0].mxu0
  %v515 = vadd.f32 %v131, %v514
  %v516 = vpop.f32.mrb[0].mxu0
  %517 = vmatprep.mubr.bf16.mxu0 0
  %518 = vmatmul.mubr.bf16.gmra.mrb[0].mxu0 %v245
  %v519 = vpop.f32.mrb[0].mxu0
  %v520 = vadd.f32 %v131, %v519
  %v521 = vpop.f32.mrb[0].mxu0
  %v522 = vpop.f32.mrb[0].mxu0
  %v523 = vadd.f32 %v131, %v522
  %v524 = vpop.f32.mrb[0].mxu0
  %525 = vmatprep.mubr.bf16.mxu0 0
  %526 = vmatmul.mubr.bf16.gmra.mrb[0].mxu0 %v248
  %v527 = vpop.f32.mrb[0].mxu0
  %v528 = vadd.f32 %v131, %v527
  %v529 = vpop.f32.mrb[0].mxu0
  %v530 = vpop.f32.mrb[0].mxu0
  %v531 = vadd.f32 %v131, %v530
  %v532 = vpop.f32.mrb[0].mxu0
  %533 = vmatprep.mubr.bf16.mxu0 0
  %534 = vmatmul.mubr.bf16.gmra.mrb[0].mxu0 %v251
  %v535 = vpop.f32.mrb[0].mxu0
  %v536 = vadd.f32 %v131, %v535
  %v537 = vpop.f32.mrb[0].mxu0
  %v538 = vpop.f32.mrb[0].mxu0
  %v539 = vadd.f32 %v131, %v538
  %v540 = vpop.f32.mrb[0].mxu0
  %541 = vdwg.mxu0
  %v542 = vmax.f32 %v288, 0.0
  %v543 = vmax.f32 %v291, 0.0
  %v544 = vmax.f32 %v296, 0.0
  %v545 = vmax.f32 %v299, 0.0
  %v546 = vmax.f32 %v304, 0.0
  %v547 = vmax.f32 %v307, 0.0
  %v548 = vmax.f32 %v312, 0.0
  %v549 = vmax.f32 %v315, 0.0
  %v550 = vmax.f32 %v320, 0.0
  %v551 = vmax.f32 %v323, 0.0
  %v552 = vmax.f32 %v328, 0.0
  %v553 = vmax.f32 %v331, 0.0
  %v554 = vmax.f32 %v336, 0.0
  %v555 = vmax.f32 %v339, 0.0
  %v556 = vmax.f32 %v344, 0.0
  %v557 = vmax.f32 %v347, 0.0
  %v558 = vmax.f32 %v352, 0.0
  %v559 = vmax.f32 %v355, 0.0
  %v560 = vmax.f32 %v360, 0.0
  %v561 = vmax.f32 %v363, 0.0
  %v562 = vmax.f32 %v368, 0.0
  %v563 = vmax.f32 %v371, 0.0
  %v564 = vmax.f32 %v376, 0.0
  %v565 = vmax.f32 %v379, 0.0
  %v566 = vmax.f32 %v384, 0.0
  %v567 = vmax.f32 %v387, 0.0
  %v568 = vmax.f32 %v392, 0.0
  %v569 = vmax.f32 %v395, 0.0
  %v570 = vmax.f32 %v400, 0.0
  %v571 = vmax.f32 %v403, 0.0
  %v572 = vmax.f32 %v408, 0.0
  %v573 = vmax.f32 %v411, 0.0
  %v574 = vmax.f32 %v416, 0.0
  %v575 = vmax.f32 %v419, 0.0
  %v576 = vmax.f32 %v424, 0.0
  %v577 = vmax.f32 %v427, 0.0
  %v578 = vmax.f32 %v432, 0.0
  %v579 = vmax.f32 %v435, 0.0
  %v580 = vmax.f32 %v440, 0.0
  %v581 = vmax.f32 %v443, 0.0
  %v582 = vmax.f32 %v448, 0.0
  %v583 = vmax.f32 %v451, 0.0
  %v584 = vmax.f32 %v456, 0.0
  %v585 = vmax.f32 %v459, 0.0
  %v586 = vmax.f32 %v464, 0.0
  %v587 = vmax.f32 %v467, 0.0
  %v588 = vmax.f32 %v472, 0.0
  %v589 = vmax.f32 %v475, 0.0
  %v590 = vmax.f32 %v480, 0.0
  %v591 = vmax.f32 %v483, 0.0
  %v592 = vmax.f32 %v488, 0.0
  %v593 = vmax.f32 %v491, 0.0
  %v594 = vmax.f32 %v496, 0.0
  %v595 = vmax.f32 %v499, 0.0
  %v596 = vmax.f32 %v504, 0.0
  %v597 = vmax.f32 %v507, 0.0
  %v598 = vmax.f32 %v512, 0.0
  %v599 = vmax.f32 %v515, 0.0
  %v600 = vmax.f32 %v520, 0.0
  %v601 = vmax.f32 %v523, 0.0
  %v602 = vmax.f32 %v528, 0.0
  %v603 = vmax.f32 %v531, 0.0
  %v604 = vmax.f32 %v536, 0.0
  %v605 = vmax.f32 %v539, 0.0
  %v606 = vpack.c.bf16 %v543, %v542
  %v607 = vpack.c.bf16 %v545, %v544
  %v608 = vpack.c.bf16 %v547, %v546
  %v609 = vpack.c.bf16 %v549, %v548
  %v610 = vpack.c.bf16 %v551, %v550
  %v611 = vpack.c.bf16 %v553, %v552
  %v612 = vpack.c.bf16 %v555, %v554
  %v613 = vpack.c.bf16 %v557, %v556
  %v614 = vpack.c.bf16 %v559, %v558
  %v615 = vpack.c.bf16 %v561, %v560
  %v616 = vpack.c.bf16 %v563, %v562
  %v617 = vpack.c.bf16 %v565, %v564
  %v618 = vpack.c.bf16 %v567, %v566
  %v619 = vpack.c.bf16 %v569, %v568
  %v620 = vpack.c.bf16 %v571, %v570
  %v621 = vpack.c.bf16 %v573, %v572
  %v622 = vpack.c.bf16 %v575, %v574
  %v623 = vpack.c.bf16 %v577, %v576
  %v624 = vpack.c.bf16 %v579, %v578
  %v625 = vpack.c.bf16 %v581, %v580
  %v626 = vpack.c.bf16 %v583, %v582
  %v627 = vpack.c.bf16 %v585, %v584
  %v628 = vpack.c.bf16 %v587, %v586
  %v629 = vpack.c.bf16 %v589, %v588
  %v630 = vpack.c.bf16 %v591, %v590
  %v631 = vpack.c.bf16 %v593, %v592
  %v632 = vpack.c.bf16 %v595, %v594
  %v633 = vpack.c.bf16 %v597, %v596
  %v634 = vpack.c.bf16 %v599, %v598
  %v635 = vpack.c.bf16 %v601, %v600
  %v636 = vpack.c.bf16 %v603, %v602
  %v637 = vpack.c.bf16 %v605, %v604
  %v638 = vld [vmem:[%s2] sm:$0xf]
  %v639 = vld [vmem:[%s2 + $0x4] sm:$0xf]
  %v640 = vld [vmem:[%s2 + $0x8] sm:$0xf]
  %v641 = vld [vmem:[%s2 + $0xc] sm:$0xf]
  %v642 = vld [vmem:[%s2 + $0x10] sm:$0xf]
  %v643 = vld [vmem:[%s2 + $0x14] sm:$0xf]
  %v644 = vld [vmem:[%s2 + $0x18] sm:$0xf]
  %v645 = vld [vmem:[%s2 + $0x1c] sm:$0xf]
  %v646 = vld [vmem:[%s2 + $0x20] sm:$0xf]
  %v647 = vld [vmem:[%s2 + $0x24] sm:$0xf]
  %v648 = vld [vmem:[%s2 + $0x28] sm:$0xf]
  %v649 = vld [vmem:[%s2 + $0x2c] sm:$0xf]
  %v650 = vld [vmem:[%s2 + $0x30] sm:$0xf]
  %v651 = vld [vmem:[%s2 + $0x34] sm:$0xf]
  %v652 = vld [vmem:[%s2 + $0x38] sm:$0xf]
  %v653 = vld [vmem:[%s2 + $0x3c] sm:$0xf]
  %v654 = vlaneseq
  %v655 = vshrl.u32 %v654, 7
  %v656 = vsub.s32 1, %v655
  %v657 = vrot.slane %v23, %v656
  %v674 = vunpack.c.l.b16 %v638
  %v675 = vunpack.c.l.b16 %v639
  %v676 = vunpack.c.l.b16 %v640
  %v677 = vunpack.c.l.b16 %v641
  %v678 = vunpack.c.l.b16 %v642
  %v679 = vunpack.c.l.b16 %v643
  %v680 = vunpack.c.l.b16 %v644
  %v681 = vunpack.c.l.b16 %v645
  %v682 = vunpack.c.l.b16 %v646
  %v683 = vunpack.c.l.b16 %v647
  %v684 = vunpack.c.l.b16 %v648
  %v685 = vunpack.c.l.b16 %v649
  %v686 = vunpack.c.l.b16 %v650
  %v687 = vunpack.c.l.b16 %v651
  %v688 = vunpack.c.l.b16 %v652
  %v689 = vunpack.c.l.b16 %v653
  %v690 = vpack.c.b16 %v675, %v674
  %v691 = vpack.c.b16 %v677, %v676
  %v692 = vpack.c.b16 %v679, %v678
  %v693 = vpack.c.b16 %v681, %v680
  %v694 = vpack.c.b16 %v683, %v682
  %v695 = vpack.c.b16 %v685, %v684
  %v696 = vpack.c.b16 %v687, %v686
  %v697 = vpack.c.b16 %v689, %v688
  %706 = vmatprep.subr.bf16.mxu0 0
  %707 = vmatpush1.bf16.msra.mxu0 %v690
  %708 = vmatprep.subr.bf16.mxu0 0
  %709 = vmatpush1.bf16.msra.mxu0 %v691
  %710 = vmatprep.subr.bf16.mxu0 0
  %711 = vmatpush1.bf16.msra.mxu0 %v692
  %712 = vmatprep.subr.bf16.mxu0 0
  %713 = vmatpush1.bf16.msra.mxu0 %v693
  %714 = vmatprep.subr.bf16.mxu0 0
  %715 = vmatpush1.bf16.msra.mxu0 %v694
  %716 = vmatprep.subr.bf16.mxu0 0
  %717 = vmatpush1.bf16.msra.mxu0 %v695
  %718 = vmatprep.subr.bf16.mxu0 0
  %719 = vmatpush1.bf16.msra.mxu0 %v696
  %720 = vmatprep.subr.bf16.mxu0 0
  %721 = vmatpush1.bf16.msra.mxu0 %v697
  %722 = vmatprep.subr.bf16.mxu0 0
  %723 = vmatpush1.bf16.msra.mxu0 0
  %724 = vmatprep.subr.bf16.mxu0 0
  %725 = vmatpush1.bf16.msra.mxu0 0
  %726 = vmatprep.subr.bf16.mxu0 0
  %727 = vmatpush1.bf16.msra.mxu0 0
  %728 = vmatprep.subr.bf16.mxu0 0
  %729 = vmatpush1.bf16.msra.mxu0 0
  %730 = vmatprep.subr.bf16.mxu0 0
  %731 = vmatpush1.bf16.msra.mxu0 0
  %732 = vmatprep.subr.bf16.mxu0 0
  %733 = vmatpush1.bf16.msra.mxu0 0
  %734 = vmatprep.subr.bf16.mxu0 0
  %735 = vmatpush1.bf16.msra.mxu0 0
  %736 = vmatprep.subr.bf16.mxu0 0
  %737 = vmatpush1.bf16.msra.mxu0 0
  %738 = vmatprep.mubr.bf16.mxu0 0
  %739 = vmatmul.mubr.bf16.gmra.mrb[0].mxu0 %v606
  %v740 = vpop.f32.mrb[0].mxu0
  %v741 = vadd.f32 %v657, %v740
  %v742 = vpop.f32.mrb[0].mxu0
  %v743 = vpop.f32.mrb[0].mxu0
  %v744 = vadd.f32 %v657, %v743
  %v745 = vpop.f32.mrb[0].mxu0
  %746 = vmatprep.mubr.bf16.mxu0 0
  %747 = vmatmul.mubr.bf16.gmra.mrb[0].mxu0 %v607
  %v748 = vpop.f32.mrb[0].mxu0
  %v749 = vadd.f32 %v657, %v748
  %v750 = vpop.f32.mrb[0].mxu0
  %v751 = vpop.f32.mrb[0].mxu0
  %v752 = vadd.f32 %v657, %v751
  %v753 = vpop.f32.mrb[0].mxu0
  %754 = vmatprep.mubr.bf16.mxu0 0
  %755 = vmatmul.mubr.bf16.gmra.mrb[0].mxu0 %v608
  %v756 = vpop.f32.mrb[0].mxu0
  %v757 = vadd.f32 %v657, %v756
  %v758 = vpop.f32.mrb[0].mxu0
  %v759 = vpop.f32.mrb[0].mxu0
  %v760 = vadd.f32 %v657, %v759
  %v761 = vpop.f32.mrb[0].mxu0
  %762 = vmatprep.mubr.bf16.mxu0 0
  %763 = vmatmul.mubr.bf16.gmra.mrb[0].mxu0 %v609
  %v764 = vpop.f32.mrb[0].mxu0
  %v765 = vadd.f32 %v657, %v764
  %v766 = vpop.f32.mrb[0].mxu0
  %v767 = vpop.f32.mrb[0].mxu0
  %v768 = vadd.f32 %v657, %v767
  %v769 = vpop.f32.mrb[0].mxu0
  %770 = vmatprep.mubr.bf16.mxu0 0
  %771 = vmatmul.mubr.bf16.gmra.mrb[0].mxu0 %v610
  %v772 = vpop.f32.mrb[0].mxu0
  %v773 = vadd.f32 %v657, %v772
  %v774 = vpop.f32.mrb[0].mxu0
  %v775 = vpop.f32.mrb[0].mxu0
  %v776 = vadd.f32 %v657, %v775
  %v777 = vpop.f32.mrb[0].mxu0
  %778 = vmatprep.mubr.bf16.mxu0 0
  %779 = vmatmul.mubr.bf16.gmra.mrb[0].mxu0 %v611
  %v780 = vpop.f32.mrb[0].mxu0
  %v781 = vadd.f32 %v657, %v780
  %v782 = vpop.f32.mrb[0].mxu0
  %v783 = vpop.f32.mrb[0].mxu0
  %v784 = vadd.f32 %v657, %v783
  %v785 = vpop.f32.mrb[0].mxu0
  %786 = vmatprep.mubr.bf16.mxu0 0
  %787 = vmatmul.mubr.bf16.gmra.mrb[0].mxu0 %v612
  %v788 = vpop.f32.mrb[0].mxu0
  %v789 = vadd.f32 %v657, %v788
  %v790 = vpop.f32.mrb[0].mxu0
  %v791 = vpop.f32.mrb[0].mxu0
  %v792 = vadd.f32 %v657, %v791
  %v793 = vpop.f32.mrb[0].mxu0
  %794 = vmatprep.mubr.bf16.mxu0 0
  %795 = vmatmul.mubr.bf16.gmra.mrb[0].mxu0 %v613
  %v796 = vpop.f32.mrb[0].mxu0
  %v797 = vadd.f32 %v657, %v796
  %v798 = vpop.f32.mrb[0].mxu0
  %v799 = vpop.f32.mrb[0].mxu0
  %v800 = vadd.f32 %v657, %v799
  %v801 = vpop.f32.mrb[0].mxu0
  %802 = vmatprep.mubr.bf16.mxu0 0
  %803 = vmatmul.mubr.bf16.gmra.mrb[0].mxu0 %v614
  %v804 = vpop.f32.mrb[0].mxu0
  %v805 = vadd.f32 %v657, %v804
  %v806 = vpop.f32.mrb[0].mxu0
  %v807 = vpop.f32.mrb[0].mxu0
  %v808 = vadd.f32 %v657, %v807
  %v809 = vpop.f32.mrb[0].mxu0
  %810 = vmatprep.mubr.bf16.mxu0 0
  %811 = vmatmul.mubr.bf16.gmra.mrb[0].mxu0 %v615
  %v812 = vpop.f32.mrb[0].mxu0
  %v813 = vadd.f32 %v657, %v812
  %v814 = vpop.f32.mrb[0].mxu0
  %v815 = vpop.f32.mrb[0].mxu0
  %v816 = vadd.f32 %v657, %v815
  %v817 = vpop.f32.mrb[0].mxu0
  %818 = vmatprep.mubr.bf16.mxu0 0
  %819 = vmatmul.mubr.bf16.gmra.mrb[0].mxu0 %v616
  %v820 = vpop.f32.mrb[0].mxu0
  %v821 = vadd.f32 %v657, %v820
  %v822 = vpop.f32.mrb[0].mxu0
  %v823 = vpop.f32.mrb[0].mxu0
  %v824 = vadd.f32 %v657, %v823
  %v825 = vpop.f32.mrb[0].mxu0
  %826 = vmatprep.mubr.bf16.mxu0 0
  %827 = vmatmul.mubr.bf16.gmra.mrb[0].mxu0 %v617
  %v828 = vpop.f32.mrb[0].mxu0
  %v829 = vadd.f32 %v657, %v828
  %v830 = vpop.f32.mrb[0].mxu0
  %v831 = vpop.f32.mrb[0].mxu0
  %v832 = vadd.f32 %v657, %v831
  %v833 = vpop.f32.mrb[0].mxu0
  %834 = vmatprep.mubr.bf16.mxu0 0
  %835 = vmatmul.mubr.bf16.gmra.mrb[0].mxu0 %v618
  %v836 = vpop.f32.mrb[0].mxu0
  %v837 = vadd.f32 %v657, %v836
  %v838 = vpop.f32.mrb[0].mxu0
  %v839 = vpop.f32.mrb[0].mxu0
  %v840 = vadd.f32 %v657, %v839
  %v841 = vpop.f32.mrb[0].mxu0
  %842 = vmatprep.mubr.bf16.mxu0 0
  %843 = vmatmul.mubr.bf16.gmra.mrb[0].mxu0 %v619
  %v844 = vpop.f32.mrb[0].mxu0
  %v845 = vadd.f32 %v657, %v844
  %v846 = vpop.f32.mrb[0].mxu0
  %v847 = vpop.f32.mrb[0].mxu0
  %v848 = vadd.f32 %v657, %v847
  %v849 = vpop.f32.mrb[0].mxu0
  %850 = vmatprep.mubr.bf16.mxu0 0
  %851 = vmatmul.mubr.bf16.gmra.mrb[0].mxu0 %v620
  %v852 = vpop.f32.mrb[0].mxu0
  %v853 = vadd.f32 %v657, %v852
  %v854 = vpop.f32.mrb[0].mxu0
  %v855 = vpop.f32.mrb[0].mxu0
  %v856 = vadd.f32 %v657, %v855
  %v857 = vpop.f32.mrb[0].mxu0
  %858 = vmatprep.mubr.bf16.mxu0 0
  %859 = vmatmul.mubr.bf16.gmra.mrb[0].mxu0 %v621
  %v860 = vpop.f32.mrb[0].mxu0
  %v861 = vadd.f32 %v657, %v860
  %v862 = vpop.f32.mrb[0].mxu0
  %v863 = vpop.f32.mrb[0].mxu0
  %v864 = vadd.f32 %v657, %v863
  %v865 = vpop.f32.mrb[0].mxu0
  %866 = vmatprep.mubr.bf16.mxu0 0
  %867 = vmatmul.mubr.bf16.gmra.mrb[0].mxu0 %v622
  %v868 = vpop.f32.mrb[0].mxu0
  %v869 = vadd.f32 %v657, %v868
  %v870 = vpop.f32.mrb[0].mxu0
  %v871 = vpop.f32.mrb[0].mxu0
  %v872 = vadd.f32 %v657, %v871
  %v873 = vpop.f32.mrb[0].mxu0
  %874 = vmatprep.mubr.bf16.mxu0 0
  %875 = vmatmul.mubr.bf16.gmra.mrb[0].mxu0 %v623
  %v876 = vpop.f32.mrb[0].mxu0
  %v877 = vadd.f32 %v657, %v876
  %v878 = vpop.f32.mrb[0].mxu0
  %v879 = vpop.f32.mrb[0].mxu0
  %v880 = vadd.f32 %v657, %v879
  %v881 = vpop.f32.mrb[0].mxu0
  %882 = vmatprep.mubr.bf16.mxu0 0
  %883 = vmatmul.mubr.bf16.gmra.mrb[0].mxu0 %v624
  %v884 = vpop.f32.mrb[0].mxu0
  %v885 = vadd.f32 %v657, %v884
  %v886 = vpop.f32.mrb[0].mxu0
  %v887 = vpop.f32.mrb[0].mxu0
  %v888 = vadd.f32 %v657, %v887
  %v889 = vpop.f32.mrb[0].mxu0
  %890 = vmatprep.mubr.bf16.mxu0 0
  %891 = vmatmul.mubr.bf16.gmra.mrb[0].mxu0 %v625
  %v892 = vpop.f32.mrb[0].mxu0
  %v893 = vadd.f32 %v657, %v892
  %v894 = vpop.f32.mrb[0].mxu0
  %v895 = vpop.f32.mrb[0].mxu0
  %v896 = vadd.f32 %v657, %v895
  %v897 = vpop.f32.mrb[0].mxu0
  %898 = vmatprep.mubr.bf16.mxu0 0
  %899 = vmatmul.mubr.bf16.gmra.mrb[0].mxu0 %v626
  %v900 = vpop.f32.mrb[0].mxu0
  %v901 = vadd.f32 %v657, %v900
  %v902 = vpop.f32.mrb[0].mxu0
  %v903 = vpop.f32.mrb[0].mxu0
  %v904 = vadd.f32 %v657, %v903
  %v905 = vpop.f32.mrb[0].mxu0
  %906 = vmatprep.mubr.bf16.mxu0 0
  %907 = vmatmul.mubr.bf16.gmra.mrb[0].mxu0 %v627
  %v908 = vpop.f32.mrb[0].mxu0
  %v909 = vadd.f32 %v657, %v908
  %v910 = vpop.f32.mrb[0].mxu0
  %v911 = vpop.f32.mrb[0].mxu0
  %v912 = vadd.f32 %v657, %v911
  %v913 = vpop.f32.mrb[0].mxu0
  %914 = vmatprep.mubr.bf16.mxu0 0
  %915 = vmatmul.mubr.bf16.gmra.mrb[0].mxu0 %v628
  %v916 = vpop.f32.mrb[0].mxu0
  %v917 = vadd.f32 %v657, %v916
  %v918 = vpop.f32.mrb[0].mxu0
  %v919 = vpop.f32.mrb[0].mxu0
  %v920 = vadd.f32 %v657, %v919
  %v921 = vpop.f32.mrb[0].mxu0
  %922 = vmatprep.mubr.bf16.mxu0 0
  %923 = vmatmul.mubr.bf16.gmra.mrb[0].mxu0 %v629
  %v924 = vpop.f32.mrb[0].mxu0
  %v925 = vadd.f32 %v657, %v924
  %v926 = vpop.f32.mrb[0].mxu0
  %v927 = vpop.f32.mrb[0].mxu0
  %v928 = vadd.f32 %v657, %v927
  %v929 = vpop.f32.mrb[0].mxu0
  %930 = vmatprep.mubr.bf16.mxu0 0
  %931 = vmatmul.mubr.bf16.gmra.mrb[0].mxu0 %v630
  %v932 = vpop.f32.mrb[0].mxu0
  %v933 = vadd.f32 %v657, %v932
  %v934 = vpop.f32.mrb[0].mxu0
  %v935 = vpop.f32.mrb[0].mxu0
  %v936 = vadd.f32 %v657, %v935
  %v937 = vpop.f32.mrb[0].mxu0
  %938 = vmatprep.mubr.bf16.mxu0 0
  %939 = vmatmul.mubr.bf16.gmra.mrb[0].mxu0 %v631
  %v940 = vpop.f32.mrb[0].mxu0
  %v941 = vadd.f32 %v657, %v940
  %v942 = vpop.f32.mrb[0].mxu0
  %v943 = vpop.f32.mrb[0].mxu0
  %v944 = vadd.f32 %v657, %v943
  %v945 = vpop.f32.mrb[0].mxu0
  %946 = vmatprep.mubr.bf16.mxu0 0
  %947 = vmatmul.mubr.bf16.gmra.mrb[0].mxu0 %v632
  %v948 = vpop.f32.mrb[0].mxu0
  %v949 = vadd.f32 %v657, %v948
  %v950 = vpop.f32.mrb[0].mxu0
  %v951 = vpop.f32.mrb[0].mxu0
  %v952 = vadd.f32 %v657, %v951
  %v953 = vpop.f32.mrb[0].mxu0
  %954 = vmatprep.mubr.bf16.mxu0 0
  %955 = vmatmul.mubr.bf16.gmra.mrb[0].mxu0 %v633
  %v956 = vpop.f32.mrb[0].mxu0
  %v957 = vadd.f32 %v657, %v956
  %v958 = vpop.f32.mrb[0].mxu0
  %v959 = vpop.f32.mrb[0].mxu0
  %v960 = vadd.f32 %v657, %v959
  %v961 = vpop.f32.mrb[0].mxu0
  %962 = vmatprep.mubr.bf16.mxu0 0
  %963 = vmatmul.mubr.bf16.gmra.mrb[0].mxu0 %v634
  %v964 = vpop.f32.mrb[0].mxu0
  %v965 = vadd.f32 %v657, %v964
  %v966 = vpop.f32.mrb[0].mxu0
  %v967 = vpop.f32.mrb[0].mxu0
  %v968 = vadd.f32 %v657, %v967
  %v969 = vpop.f32.mrb[0].mxu0
  %970 = vmatprep.mubr.bf16.mxu0 0
  %971 = vmatmul.mubr.bf16.gmra.mrb[0].mxu0 %v635
  %v972 = vpop.f32.mrb[0].mxu0
  %v973 = vadd.f32 %v657, %v972
  %v974 = vpop.f32.mrb[0].mxu0
  %v975 = vpop.f32.mrb[0].mxu0
  %v976 = vadd.f32 %v657, %v975
  %v977 = vpop.f32.mrb[0].mxu0
  %978 = vmatprep.mubr.bf16.mxu0 0
  %979 = vmatmul.mubr.bf16.gmra.mrb[0].mxu0 %v636
  %v980 = vpop.f32.mrb[0].mxu0
  %v981 = vadd.f32 %v657, %v980
  %v982 = vpop.f32.mrb[0].mxu0
  %v983 = vpop.f32.mrb[0].mxu0
  %v984 = vadd.f32 %v657, %v983
  %v985 = vpop.f32.mrb[0].mxu0
  %986 = vmatprep.mubr.bf16.mxu0 0
  %987 = vmatmul.mubr.bf16.gmra.mrb[0].mxu0 %v637
  %v988 = vpop.f32.mrb[0].mxu0
  %v989 = vadd.f32 %v657, %v988
  %v990 = vpop.f32.mrb[0].mxu0
  %v991 = vpop.f32.mrb[0].mxu0
  %v992 = vadd.f32 %v657, %v991
  %v993 = vpop.f32.mrb[0].mxu0
  %994 = vdwg.mxu0
  %v995 = vmax.f32 %v741, 0.0
  %v996 = vmax.f32 %v744, 0.0
  %v997 = vmax.f32 %v749, 0.0
  %v998 = vmax.f32 %v752, 0.0
  %v999 = vmax.f32 %v757, 0.0
  %v1000 = vmax.f32 %v760, 0.0
  %v1001 = vmax.f32 %v765, 0.0
  %v1002 = vmax.f32 %v768, 0.0
  %v1003 = vmax.f32 %v773, 0.0
  %v1004 = vmax.f32 %v776, 0.0
  %v1005 = vmax.f32 %v781, 0.0
  %v1006 = vmax.f32 %v784, 0.0
  %v1007 = vmax.f32 %v789, 0.0
  %v1008 = vmax.f32 %v792, 0.0
  %v1009 = vmax.f32 %v797, 0.0
  %v1010 = vmax.f32 %v800, 0.0
  %v1011 = vmax.f32 %v805, 0.0
  %v1012 = vmax.f32 %v808, 0.0
  %v1013 = vmax.f32 %v813, 0.0
  %v1014 = vmax.f32 %v816, 0.0
  %v1015 = vmax.f32 %v821, 0.0
  %v1016 = vmax.f32 %v824, 0.0
  %v1017 = vmax.f32 %v829, 0.0
  %v1018 = vmax.f32 %v832, 0.0
  %v1019 = vmax.f32 %v837, 0.0
  %v1020 = vmax.f32 %v840, 0.0
  %v1021 = vmax.f32 %v845, 0.0
  %v1022 = vmax.f32 %v848, 0.0
  %v1023 = vmax.f32 %v853, 0.0
  %v1024 = vmax.f32 %v856, 0.0
  %v1025 = vmax.f32 %v861, 0.0
  %v1026 = vmax.f32 %v864, 0.0
  %v1027 = vmax.f32 %v869, 0.0
  %v1028 = vmax.f32 %v872, 0.0
  %v1029 = vmax.f32 %v877, 0.0
  %v1030 = vmax.f32 %v880, 0.0
  %v1031 = vmax.f32 %v885, 0.0
  %v1032 = vmax.f32 %v888, 0.0
  %v1033 = vmax.f32 %v893, 0.0
  %v1034 = vmax.f32 %v896, 0.0
  %v1035 = vmax.f32 %v901, 0.0
  %v1036 = vmax.f32 %v904, 0.0
  %v1037 = vmax.f32 %v909, 0.0
  %v1038 = vmax.f32 %v912, 0.0
  %v1039 = vmax.f32 %v917, 0.0
  %v1040 = vmax.f32 %v920, 0.0
  %v1041 = vmax.f32 %v925, 0.0
  %v1042 = vmax.f32 %v928, 0.0
  %v1043 = vmax.f32 %v933, 0.0
  %v1044 = vmax.f32 %v936, 0.0
  %v1045 = vmax.f32 %v941, 0.0
  %v1046 = vmax.f32 %v944, 0.0
  %v1047 = vmax.f32 %v949, 0.0
  %v1048 = vmax.f32 %v952, 0.0
  %v1049 = vmax.f32 %v957, 0.0
  %v1050 = vmax.f32 %v960, 0.0
  %v1051 = vmax.f32 %v965, 0.0
  %v1052 = vmax.f32 %v968, 0.0
  %v1053 = vmax.f32 %v973, 0.0
  %v1054 = vmax.f32 %v976, 0.0
  %v1055 = vmax.f32 %v981, 0.0
  %v1056 = vmax.f32 %v984, 0.0
  %v1057 = vmax.f32 %v989, 0.0
  %v1058 = vmax.f32 %v992, 0.0
  %v1059 = vpack.c.bf16 %v996, %v995
  %v1060 = vpack.c.bf16 %v998, %v997
  %v1061 = vpack.c.bf16 %v1000, %v999
  %v1062 = vpack.c.bf16 %v1002, %v1001
  %v1063 = vpack.c.bf16 %v1004, %v1003
  %v1064 = vpack.c.bf16 %v1006, %v1005
  %v1065 = vpack.c.bf16 %v1008, %v1007
  %v1066 = vpack.c.bf16 %v1010, %v1009
  %v1067 = vpack.c.bf16 %v1012, %v1011
  %v1068 = vpack.c.bf16 %v1014, %v1013
  %v1069 = vpack.c.bf16 %v1016, %v1015
  %v1070 = vpack.c.bf16 %v1018, %v1017
  %v1071 = vpack.c.bf16 %v1020, %v1019
  %v1072 = vpack.c.bf16 %v1022, %v1021
  %v1073 = vpack.c.bf16 %v1024, %v1023
  %v1074 = vpack.c.bf16 %v1026, %v1025
  %v1075 = vpack.c.bf16 %v1028, %v1027
  %v1076 = vpack.c.bf16 %v1030, %v1029
  %v1077 = vpack.c.bf16 %v1032, %v1031
  %v1078 = vpack.c.bf16 %v1034, %v1033
  %v1079 = vpack.c.bf16 %v1036, %v1035
  %v1080 = vpack.c.bf16 %v1038, %v1037
  %v1081 = vpack.c.bf16 %v1040, %v1039
  %v1082 = vpack.c.bf16 %v1042, %v1041
  %v1083 = vpack.c.bf16 %v1044, %v1043
  %v1084 = vpack.c.bf16 %v1046, %v1045
  %v1085 = vpack.c.bf16 %v1048, %v1047
  %v1086 = vpack.c.bf16 %v1050, %v1049
  %v1087 = vpack.c.bf16 %v1052, %v1051
  %v1088 = vpack.c.bf16 %v1054, %v1053
  %v1089 = vpack.c.bf16 %v1056, %v1055
  %v1090 = vpack.c.bf16 %v1058, %v1057
  %s1091 = scalar_lea.vmem %s2, 64
  %v1092 = vld [vmem:[%s1091] sm:$0xf]
  %v1093 = vld [vmem:[%s1091 + $0x4] sm:$0xf]
  %v1094 = vld [vmem:[%s1091 + $0x8] sm:$0xf]
  %v1095 = vld [vmem:[%s1091 + $0xc] sm:$0xf]
  %v1096 = vld [vmem:[%s1091 + $0x10] sm:$0xf]
  %v1097 = vld [vmem:[%s1091 + $0x14] sm:$0xf]
  %v1098 = vld [vmem:[%s1091 + $0x18] sm:$0xf]
  %v1099 = vld [vmem:[%s1091 + $0x1c] sm:$0xf]
  %v1100 = vld [vmem:[%s1091 + $0x20] sm:$0xf]
  %v1101 = vld [vmem:[%s1091 + $0x24] sm:$0xf]
  %v1102 = vld [vmem:[%s1091 + $0x28] sm:$0xf]
  %v1103 = vld [vmem:[%s1091 + $0x2c] sm:$0xf]
  %v1104 = vld [vmem:[%s1091 + $0x30] sm:$0xf]
  %v1105 = vld [vmem:[%s1091 + $0x34] sm:$0xf]
  %v1106 = vld [vmem:[%s1091 + $0x38] sm:$0xf]
  %v1107 = vld [vmem:[%s1091 + $0x3c] sm:$0xf]
  %v1108 = vlaneseq
  %v1109 = vshrl.u32 %v1108, 7
  %v1110 = vsub.s32 2, %v1109
  %v1111 = vrot.slane %v23, %v1110
  %v1128 = vunpack.c.l.b16 %v1092
  %v1129 = vunpack.c.l.b16 %v1093
  %v1130 = vunpack.c.l.b16 %v1094
  %v1131 = vunpack.c.l.b16 %v1095
  %v1132 = vunpack.c.l.b16 %v1096
  %v1133 = vunpack.c.l.b16 %v1097
  %v1134 = vunpack.c.l.b16 %v1098
  %v1135 = vunpack.c.l.b16 %v1099
  %v1136 = vunpack.c.l.b16 %v1100
  %v1137 = vunpack.c.l.b16 %v1101
  %v1138 = vunpack.c.l.b16 %v1102
  %v1139 = vunpack.c.l.b16 %v1103
  %v1140 = vunpack.c.l.b16 %v1104
  %v1141 = vunpack.c.l.b16 %v1105
  %v1142 = vunpack.c.l.b16 %v1106
  %v1143 = vunpack.c.l.b16 %v1107
  %v1144 = vpack.c.b16 %v1129, %v1128
  %v1145 = vpack.c.b16 %v1131, %v1130
  %v1146 = vpack.c.b16 %v1133, %v1132
  %v1147 = vpack.c.b16 %v1135, %v1134
  %v1148 = vpack.c.b16 %v1137, %v1136
  %v1149 = vpack.c.b16 %v1139, %v1138
  %v1150 = vpack.c.b16 %v1141, %v1140
  %v1151 = vpack.c.b16 %v1143, %v1142
  %1160 = vmatprep.subr.bf16.mxu0 0
  %1161 = vmatpush1.bf16.msra.mxu0 %v1144
  %1162 = vmatprep.subr.bf16.mxu0 0
  %1163 = vmatpush1.bf16.msra.mxu0 %v1145
  %1164 = vmatprep.subr.bf16.mxu0 0
  %1165 = vmatpush1.bf16.msra.mxu0 %v1146
  %1166 = vmatprep.subr.bf16.mxu0 0
  %1167 = vmatpush1.bf16.msra.mxu0 %v1147
  %1168 = vmatprep.subr.bf16.mxu0 0
  %1169 = vmatpush1.bf16.msra.mxu0 %v1148
  %1170 = vmatprep.subr.bf16.mxu0 0
  %1171 = vmatpush1.bf16.msra.mxu0 %v1149
  %1172 = vmatprep.subr.bf16.mxu0 0
  %1173 = vmatpush1.bf16.msra.mxu0 %v1150
  %1174 = vmatprep.subr.bf16.mxu0 0
  %1175 = vmatpush1.bf16.msra.mxu0 %v1151
  %1176 = vmatprep.subr.bf16.mxu0 0
  %1177 = vmatpush1.bf16.msra.mxu0 0
  %1178 = vmatprep.subr.bf16.mxu0 0
  %1179 = vmatpush1.bf16.msra.mxu0 0
  %1180 = vmatprep.subr.bf16.mxu0 0
  %1181 = vmatpush1.bf16.msra.mxu0 0
  %1182 = vmatprep.subr.bf16.mxu0 0
  %1183 = vmatpush1.bf16.msra.mxu0 0
  %1184 = vmatprep.subr.bf16.mxu0 0
  %1185 = vmatpush1.bf16.msra.mxu0 0
  %1186 = vmatprep.subr.bf16.mxu0 0
  %1187 = vmatpush1.bf16.msra.mxu0 0
  %1188 = vmatprep.subr.bf16.mxu0 0
  %1189 = vmatpush1.bf16.msra.mxu0 0
  %1190 = vmatprep.subr.bf16.mxu0 0
  %1191 = vmatpush1.bf16.msra.mxu0 0
  %1192 = vmatprep.mubr.bf16.mxu0 0
  %1193 = vmatmul.mubr.bf16.gmra.mrb[0].mxu0 %v1059
  %v1194 = vpop.f32.mrb[0].mxu0
  %v1195 = vadd.f32 %v1111, %v1194
  %v1196 = vpop.f32.mrb[0].mxu0
  %v1197 = vpop.f32.mrb[0].mxu0
  %v1198 = vadd.f32 %v1111, %v1197
  %v1199 = vpop.f32.mrb[0].mxu0
  %1200 = vmatprep.mubr.bf16.mxu0 0
  %1201 = vmatmul.mubr.bf16.gmra.mrb[0].mxu0 %v1060
  %v1202 = vpop.f32.mrb[0].mxu0
  %v1203 = vadd.f32 %v1111, %v1202
  %v1204 = vpop.f32.mrb[0].mxu0
  %v1205 = vpop.f32.mrb[0].mxu0
  %v1206 = vadd.f32 %v1111, %v1205
  %v1207 = vpop.f32.mrb[0].mxu0
  %1208 = vmatprep.mubr.bf16.mxu0 0
  %1209 = vmatmul.mubr.bf16.gmra.mrb[0].mxu0 %v1061
  %v1210 = vpop.f32.mrb[0].mxu0
  %v1211 = vadd.f32 %v1111, %v1210
  %v1212 = vpop.f32.mrb[0].mxu0
  %v1213 = vpop.f32.mrb[0].mxu0
  %v1214 = vadd.f32 %v1111, %v1213
  %v1215 = vpop.f32.mrb[0].mxu0
  %1216 = vmatprep.mubr.bf16.mxu0 0
  %1217 = vmatmul.mubr.bf16.gmra.mrb[0].mxu0 %v1062
  %v1218 = vpop.f32.mrb[0].mxu0
  %v1219 = vadd.f32 %v1111, %v1218
  %v1220 = vpop.f32.mrb[0].mxu0
  %v1221 = vpop.f32.mrb[0].mxu0
  %v1222 = vadd.f32 %v1111, %v1221
  %v1223 = vpop.f32.mrb[0].mxu0
  %1224 = vmatprep.mubr.bf16.mxu0 0
  %1225 = vmatmul.mubr.bf16.gmra.mrb[0].mxu0 %v1063
  %v1226 = vpop.f32.mrb[0].mxu0
  %v1227 = vadd.f32 %v1111, %v1226
  %v1228 = vpop.f32.mrb[0].mxu0
  %v1229 = vpop.f32.mrb[0].mxu0
  %v1230 = vadd.f32 %v1111, %v1229
  %v1231 = vpop.f32.mrb[0].mxu0
  %1232 = vmatprep.mubr.bf16.mxu0 0
  %1233 = vmatmul.mubr.bf16.gmra.mrb[0].mxu0 %v1064
  %v1234 = vpop.f32.mrb[0].mxu0
  %v1235 = vadd.f32 %v1111, %v1234
  %v1236 = vpop.f32.mrb[0].mxu0
  %v1237 = vpop.f32.mrb[0].mxu0
  %v1238 = vadd.f32 %v1111, %v1237
  %v1239 = vpop.f32.mrb[0].mxu0
  %1240 = vmatprep.mubr.bf16.mxu0 0
  %1241 = vmatmul.mubr.bf16.gmra.mrb[0].mxu0 %v1065
  %v1242 = vpop.f32.mrb[0].mxu0
  %v1243 = vadd.f32 %v1111, %v1242
  %v1244 = vpop.f32.mrb[0].mxu0
  %v1245 = vpop.f32.mrb[0].mxu0
  %v1246 = vadd.f32 %v1111, %v1245
  %v1247 = vpop.f32.mrb[0].mxu0
  %1248 = vmatprep.mubr.bf16.mxu0 0
  %1249 = vmatmul.mubr.bf16.gmra.mrb[0].mxu0 %v1066
  %v1250 = vpop.f32.mrb[0].mxu0
  %v1251 = vadd.f32 %v1111, %v1250
  %v1252 = vpop.f32.mrb[0].mxu0
  %v1253 = vpop.f32.mrb[0].mxu0
  %v1254 = vadd.f32 %v1111, %v1253
  %v1255 = vpop.f32.mrb[0].mxu0
  %1256 = vmatprep.mubr.bf16.mxu0 0
  %1257 = vmatmul.mubr.bf16.gmra.mrb[0].mxu0 %v1067
  %v1258 = vpop.f32.mrb[0].mxu0
  %v1259 = vadd.f32 %v1111, %v1258
  %v1260 = vpop.f32.mrb[0].mxu0
  %v1261 = vpop.f32.mrb[0].mxu0
  %v1262 = vadd.f32 %v1111, %v1261
  %v1263 = vpop.f32.mrb[0].mxu0
  %1264 = vmatprep.mubr.bf16.mxu0 0
  %1265 = vmatmul.mubr.bf16.gmra.mrb[0].mxu0 %v1068
  %v1266 = vpop.f32.mrb[0].mxu0
  %v1267 = vadd.f32 %v1111, %v1266
  %v1268 = vpop.f32.mrb[0].mxu0
  %v1269 = vpop.f32.mrb[0].mxu0
  %v1270 = vadd.f32 %v1111, %v1269
  %v1271 = vpop.f32.mrb[0].mxu0
  %1272 = vmatprep.mubr.bf16.mxu0 0
  %1273 = vmatmul.mubr.bf16.gmra.mrb[0].mxu0 %v1069
  %v1274 = vpop.f32.mrb[0].mxu0
  %v1275 = vadd.f32 %v1111, %v1274
  %v1276 = vpop.f32.mrb[0].mxu0
  %v1277 = vpop.f32.mrb[0].mxu0
  %v1278 = vadd.f32 %v1111, %v1277
  %v1279 = vpop.f32.mrb[0].mxu0
  %1280 = vmatprep.mubr.bf16.mxu0 0
  %1281 = vmatmul.mubr.bf16.gmra.mrb[0].mxu0 %v1070
  %v1282 = vpop.f32.mrb[0].mxu0
  %v1283 = vadd.f32 %v1111, %v1282
  %v1284 = vpop.f32.mrb[0].mxu0
  %v1285 = vpop.f32.mrb[0].mxu0
  %v1286 = vadd.f32 %v1111, %v1285
  %v1287 = vpop.f32.mrb[0].mxu0
  %1288 = vmatprep.mubr.bf16.mxu0 0
  %1289 = vmatmul.mubr.bf16.gmra.mrb[0].mxu0 %v1071
  %v1290 = vpop.f32.mrb[0].mxu0
  %v1291 = vadd.f32 %v1111, %v1290
  %v1292 = vpop.f32.mrb[0].mxu0
  %v1293 = vpop.f32.mrb[0].mxu0
  %v1294 = vadd.f32 %v1111, %v1293
  %v1295 = vpop.f32.mrb[0].mxu0
  %1296 = vmatprep.mubr.bf16.mxu0 0
  %1297 = vmatmul.mubr.bf16.gmra.mrb[0].mxu0 %v1072
  %v1298 = vpop.f32.mrb[0].mxu0
  %v1299 = vadd.f32 %v1111, %v1298
  %v1300 = vpop.f32.mrb[0].mxu0
  %v1301 = vpop.f32.mrb[0].mxu0
  %v1302 = vadd.f32 %v1111, %v1301
  %v1303 = vpop.f32.mrb[0].mxu0
  %1304 = vmatprep.mubr.bf16.mxu0 0
  %1305 = vmatmul.mubr.bf16.gmra.mrb[0].mxu0 %v1073
  %v1306 = vpop.f32.mrb[0].mxu0
  %v1307 = vadd.f32 %v1111, %v1306
  %v1308 = vpop.f32.mrb[0].mxu0
  %v1309 = vpop.f32.mrb[0].mxu0
  %v1310 = vadd.f32 %v1111, %v1309
  %v1311 = vpop.f32.mrb[0].mxu0
  %1312 = vmatprep.mubr.bf16.mxu0 0
  %1313 = vmatmul.mubr.bf16.gmra.mrb[0].mxu0 %v1074
  %v1314 = vpop.f32.mrb[0].mxu0
  %v1315 = vadd.f32 %v1111, %v1314
  %v1316 = vpop.f32.mrb[0].mxu0
  %v1317 = vpop.f32.mrb[0].mxu0
  %v1318 = vadd.f32 %v1111, %v1317
  %v1319 = vpop.f32.mrb[0].mxu0
  %1320 = vmatprep.mubr.bf16.mxu0 0
  %1321 = vmatmul.mubr.bf16.gmra.mrb[0].mxu0 %v1075
  %v1322 = vpop.f32.mrb[0].mxu0
  %v1323 = vadd.f32 %v1111, %v1322
  %v1324 = vpop.f32.mrb[0].mxu0
  %v1325 = vpop.f32.mrb[0].mxu0
  %v1326 = vadd.f32 %v1111, %v1325
  %v1327 = vpop.f32.mrb[0].mxu0
  %1328 = vmatprep.mubr.bf16.mxu0 0
  %1329 = vmatmul.mubr.bf16.gmra.mrb[0].mxu0 %v1076
  %v1330 = vpop.f32.mrb[0].mxu0
  %v1331 = vadd.f32 %v1111, %v1330
  %v1332 = vpop.f32.mrb[0].mxu0
  %v1333 = vpop.f32.mrb[0].mxu0
  %v1334 = vadd.f32 %v1111, %v1333
  %v1335 = vpop.f32.mrb[0].mxu0
  %1336 = vmatprep.mubr.bf16.mxu0 0
  %1337 = vmatmul.mubr.bf16.gmra.mrb[0].mxu0 %v1077
  %v1338 = vpop.f32.mrb[0].mxu0
  %v1339 = vadd.f32 %v1111, %v1338
  %v1340 = vpop.f32.mrb[0].mxu0
  %v1341 = vpop.f32.mrb[0].mxu0
  %v1342 = vadd.f32 %v1111, %v1341
  %v1343 = vpop.f32.mrb[0].mxu0
  %1344 = vmatprep.mubr.bf16.mxu0 0
  %1345 = vmatmul.mubr.bf16.gmra.mrb[0].mxu0 %v1078
  %v1346 = vpop.f32.mrb[0].mxu0
  %v1347 = vadd.f32 %v1111, %v1346
  %v1348 = vpop.f32.mrb[0].mxu0
  %v1349 = vpop.f32.mrb[0].mxu0
  %v1350 = vadd.f32 %v1111, %v1349
  %v1351 = vpop.f32.mrb[0].mxu0
  %1352 = vmatprep.mubr.bf16.mxu0 0
  %1353 = vmatmul.mubr.bf16.gmra.mrb[0].mxu0 %v1079
  %v1354 = vpop.f32.mrb[0].mxu0
  %v1355 = vadd.f32 %v1111, %v1354
  %v1356 = vpop.f32.mrb[0].mxu0
  %v1357 = vpop.f32.mrb[0].mxu0
  %v1358 = vadd.f32 %v1111, %v1357
  %v1359 = vpop.f32.mrb[0].mxu0
  %1360 = vmatprep.mubr.bf16.mxu0 0
  %1361 = vmatmul.mubr.bf16.gmra.mrb[0].mxu0 %v1080
  %v1362 = vpop.f32.mrb[0].mxu0
  %v1363 = vadd.f32 %v1111, %v1362
  %v1364 = vpop.f32.mrb[0].mxu0
  %v1365 = vpop.f32.mrb[0].mxu0
  %v1366 = vadd.f32 %v1111, %v1365
  %v1367 = vpop.f32.mrb[0].mxu0
  %1368 = vmatprep.mubr.bf16.mxu0 0
  %1369 = vmatmul.mubr.bf16.gmra.mrb[0].mxu0 %v1081
  %v1370 = vpop.f32.mrb[0].mxu0
  %v1371 = vadd.f32 %v1111, %v1370
  %v1372 = vpop.f32.mrb[0].mxu0
  %v1373 = vpop.f32.mrb[0].mxu0
  %v1374 = vadd.f32 %v1111, %v1373
  %v1375 = vpop.f32.mrb[0].mxu0
  %1376 = vmatprep.mubr.bf16.mxu0 0
  %1377 = vmatmul.mubr.bf16.gmra.mrb[0].mxu0 %v1082
  %v1378 = vpop.f32.mrb[0].mxu0
  %v1379 = vadd.f32 %v1111, %v1378
  %v1380 = vpop.f32.mrb[0].mxu0
  %v1381 = vpop.f32.mrb[0].mxu0
  %v1382 = vadd.f32 %v1111, %v1381
  %v1383 = vpop.f32.mrb[0].mxu0
  %1384 = vmatprep.mubr.bf16.mxu0 0
  %1385 = vmatmul.mubr.bf16.gmra.mrb[0].mxu0 %v1083
  %v1386 = vpop.f32.mrb[0].mxu0
  %v1387 = vadd.f32 %v1111, %v1386
  %v1388 = vpop.f32.mrb[0].mxu0
  %v1389 = vpop.f32.mrb[0].mxu0
  %v1390 = vadd.f32 %v1111, %v1389
  %v1391 = vpop.f32.mrb[0].mxu0
  %1392 = vmatprep.mubr.bf16.mxu0 0
  %1393 = vmatmul.mubr.bf16.gmra.mrb[0].mxu0 %v1084
  %v1394 = vpop.f32.mrb[0].mxu0
  %v1395 = vadd.f32 %v1111, %v1394
  %v1396 = vpop.f32.mrb[0].mxu0
  %v1397 = vpop.f32.mrb[0].mxu0
  %v1398 = vadd.f32 %v1111, %v1397
  %v1399 = vpop.f32.mrb[0].mxu0
  %1400 = vmatprep.mubr.bf16.mxu0 0
  %1401 = vmatmul.mubr.bf16.gmra.mrb[0].mxu0 %v1085
  %v1402 = vpop.f32.mrb[0].mxu0
  %v1403 = vadd.f32 %v1111, %v1402
  %v1404 = vpop.f32.mrb[0].mxu0
  %v1405 = vpop.f32.mrb[0].mxu0
  %v1406 = vadd.f32 %v1111, %v1405
  %v1407 = vpop.f32.mrb[0].mxu0
  %1408 = vmatprep.mubr.bf16.mxu0 0
  %1409 = vmatmul.mubr.bf16.gmra.mrb[0].mxu0 %v1086
  %v1410 = vpop.f32.mrb[0].mxu0
  %v1411 = vadd.f32 %v1111, %v1410
  %v1412 = vpop.f32.mrb[0].mxu0
  %v1413 = vpop.f32.mrb[0].mxu0
  %v1414 = vadd.f32 %v1111, %v1413
  %v1415 = vpop.f32.mrb[0].mxu0
  %1416 = vmatprep.mubr.bf16.mxu0 0
  %1417 = vmatmul.mubr.bf16.gmra.mrb[0].mxu0 %v1087
  %v1418 = vpop.f32.mrb[0].mxu0
  %v1419 = vadd.f32 %v1111, %v1418
  %v1420 = vpop.f32.mrb[0].mxu0
  %v1421 = vpop.f32.mrb[0].mxu0
  %v1422 = vadd.f32 %v1111, %v1421
  %v1423 = vpop.f32.mrb[0].mxu0
  %1424 = vmatprep.mubr.bf16.mxu0 0
  %1425 = vmatmul.mubr.bf16.gmra.mrb[0].mxu0 %v1088
  %v1426 = vpop.f32.mrb[0].mxu0
  %v1427 = vadd.f32 %v1111, %v1426
  %v1428 = vpop.f32.mrb[0].mxu0
  %v1429 = vpop.f32.mrb[0].mxu0
  %v1430 = vadd.f32 %v1111, %v1429
  %v1431 = vpop.f32.mrb[0].mxu0
  %1432 = vmatprep.mubr.bf16.mxu0 0
  %1433 = vmatmul.mubr.bf16.gmra.mrb[0].mxu0 %v1089
  %v1434 = vpop.f32.mrb[0].mxu0
  %v1435 = vadd.f32 %v1111, %v1434
  %v1436 = vpop.f32.mrb[0].mxu0
  %v1437 = vpop.f32.mrb[0].mxu0
  %v1438 = vadd.f32 %v1111, %v1437
  %v1439 = vpop.f32.mrb[0].mxu0
  %1440 = vmatprep.mubr.bf16.mxu0 0
  %1441 = vmatmul.mubr.bf16.gmra.mrb[0].mxu0 %v1090
  %v1442 = vpop.f32.mrb[0].mxu0
  %v1443 = vadd.f32 %v1111, %v1442
  %v1444 = vpop.f32.mrb[0].mxu0
  %v1445 = vpop.f32.mrb[0].mxu0
  %v1446 = vadd.f32 %v1111, %v1445
  %v1447 = vpop.f32.mrb[0].mxu0
  %1448 = vdwg.mxu0
  %v1449 = vmax.f32 %v1195, 0.0
  %v1450 = vmax.f32 %v1198, 0.0
  %v1451 = vmax.f32 %v1203, 0.0
  %v1452 = vmax.f32 %v1206, 0.0
  %v1453 = vmax.f32 %v1211, 0.0
  %v1454 = vmax.f32 %v1214, 0.0
  %v1455 = vmax.f32 %v1219, 0.0
  %v1456 = vmax.f32 %v1222, 0.0
  %v1457 = vmax.f32 %v1227, 0.0
  %v1458 = vmax.f32 %v1230, 0.0
  %v1459 = vmax.f32 %v1235, 0.0
  %v1460 = vmax.f32 %v1238, 0.0
  %v1461 = vmax.f32 %v1243, 0.0
  %v1462 = vmax.f32 %v1246, 0.0
  %v1463 = vmax.f32 %v1251, 0.0
  %v1464 = vmax.f32 %v1254, 0.0
  %v1465 = vmax.f32 %v1259, 0.0
  %v1466 = vmax.f32 %v1262, 0.0
  %v1467 = vmax.f32 %v1267, 0.0
  %v1468 = vmax.f32 %v1270, 0.0
  %v1469 = vmax.f32 %v1275, 0.0
  %v1470 = vmax.f32 %v1278, 0.0
  %v1471 = vmax.f32 %v1283, 0.0
  %v1472 = vmax.f32 %v1286, 0.0
  %v1473 = vmax.f32 %v1291, 0.0
  %v1474 = vmax.f32 %v1294, 0.0
  %v1475 = vmax.f32 %v1299, 0.0
  %v1476 = vmax.f32 %v1302, 0.0
  %v1477 = vmax.f32 %v1307, 0.0
  %v1478 = vmax.f32 %v1310, 0.0
  %v1479 = vmax.f32 %v1315, 0.0
  %v1480 = vmax.f32 %v1318, 0.0
  %v1481 = vmax.f32 %v1323, 0.0
  %v1482 = vmax.f32 %v1326, 0.0
  %v1483 = vmax.f32 %v1331, 0.0
  %v1484 = vmax.f32 %v1334, 0.0
  %v1485 = vmax.f32 %v1339, 0.0
  %v1486 = vmax.f32 %v1342, 0.0
  %v1487 = vmax.f32 %v1347, 0.0
  %v1488 = vmax.f32 %v1350, 0.0
  %v1489 = vmax.f32 %v1355, 0.0
  %v1490 = vmax.f32 %v1358, 0.0
  %v1491 = vmax.f32 %v1363, 0.0
  %v1492 = vmax.f32 %v1366, 0.0
  %v1493 = vmax.f32 %v1371, 0.0
  %v1494 = vmax.f32 %v1374, 0.0
  %v1495 = vmax.f32 %v1379, 0.0
  %v1496 = vmax.f32 %v1382, 0.0
  %v1497 = vmax.f32 %v1387, 0.0
  %v1498 = vmax.f32 %v1390, 0.0
  %v1499 = vmax.f32 %v1395, 0.0
  %v1500 = vmax.f32 %v1398, 0.0
  %v1501 = vmax.f32 %v1403, 0.0
  %v1502 = vmax.f32 %v1406, 0.0
  %v1503 = vmax.f32 %v1411, 0.0
  %v1504 = vmax.f32 %v1414, 0.0
  %v1505 = vmax.f32 %v1419, 0.0
  %v1506 = vmax.f32 %v1422, 0.0
  %v1507 = vmax.f32 %v1427, 0.0
  %v1508 = vmax.f32 %v1430, 0.0
  %v1509 = vmax.f32 %v1435, 0.0
  %v1510 = vmax.f32 %v1438, 0.0
  %v1511 = vmax.f32 %v1443, 0.0
  %v1512 = vmax.f32 %v1446, 0.0
  %vm1513 = vcmask 261120
  %1514 = vst.msk [vmem:[%s6] sm:$0xff] %vm1513, %v1449
  %1515 = vst.msk [vmem:[%s6 + $0x8] sm:$0xff] %vm1513, %v1450
  %1516 = vst.msk [vmem:[%s6 + $0x10] sm:$0xff] %vm1513, %v1451
  %1517 = vst.msk [vmem:[%s6 + $0x18] sm:$0xff] %vm1513, %v1452
  %1518 = vst.msk [vmem:[%s6 + $0x20] sm:$0xff] %vm1513, %v1453
  %1519 = vst.msk [vmem:[%s6 + $0x28] sm:$0xff] %vm1513, %v1454
  %1520 = vst.msk [vmem:[%s6 + $0x30] sm:$0xff] %vm1513, %v1455
  %1521 = vst.msk [vmem:[%s6 + $0x38] sm:$0xff] %vm1513, %v1456
  %1522 = vst.msk [vmem:[%s6 + $0x40] sm:$0xff] %vm1513, %v1457
  %1523 = vst.msk [vmem:[%s6 + $0x48] sm:$0xff] %vm1513, %v1458
  %1524 = vst.msk [vmem:[%s6 + $0x50] sm:$0xff] %vm1513, %v1459
  %1525 = vst.msk [vmem:[%s6 + $0x58] sm:$0xff] %vm1513, %v1460
  %1526 = vst.msk [vmem:[%s6 + $0x60] sm:$0xff] %vm1513, %v1461
  %1527 = vst.msk [vmem:[%s6 + $0x68] sm:$0xff] %vm1513, %v1462
  %1528 = vst.msk [vmem:[%s6 + $0x70] sm:$0xff] %vm1513, %v1463
  %1529 = vst.msk [vmem:[%s6 + $0x78] sm:$0xff] %vm1513, %v1464
  %1530 = vst.msk [vmem:[%s6 + $0x80] sm:$0xff] %vm1513, %v1465
  %1531 = vst.msk [vmem:[%s6 + $0x88] sm:$0xff] %vm1513, %v1466
  %1532 = vst.msk [vmem:[%s6 + $0x90] sm:$0xff] %vm1513, %v1467
  %1533 = vst.msk [vmem:[%s6 + $0x98] sm:$0xff] %vm1513, %v1468
  %1534 = vst.msk [vmem:[%s6 + $0xa0] sm:$0xff] %vm1513, %v1469
  %1535 = vst.msk [vmem:[%s6 + $0xa8] sm:$0xff] %vm1513, %v1470
  %1536 = vst.msk [vmem:[%s6 + $0xb0] sm:$0xff] %vm1513, %v1471
  %1537 = vst.msk [vmem:[%s6 + $0xb8] sm:$0xff] %vm1513, %v1472
  %1538 = vst.msk [vmem:[%s6 + $0xc0] sm:$0xff] %vm1513, %v1473
  %1539 = vst.msk [vmem:[%s6 + $0xc8] sm:$0xff] %vm1513, %v1474
  %1540 = vst.msk [vmem:[%s6 + $0xd0] sm:$0xff] %vm1513, %v1475
  %1541 = vst.msk [vmem:[%s6 + $0xd8] sm:$0xff] %vm1513, %v1476
  %1542 = vst.msk [vmem:[%s6 + $0xe0] sm:$0xff] %vm1513, %v1477
  %1543 = vst.msk [vmem:[%s6 + $0xe8] sm:$0xff] %vm1513, %v1478
  %1544 = vst.msk [vmem:[%s6 + $0xf0] sm:$0xff] %vm1513, %v1479
  %1545 = vst.msk [vmem:[%s6 + $0xf8] sm:$0xff] %vm1513, %v1480
  %1546 = vst.msk [vmem:[%s6 + $0x100] sm:$0xff] %vm1513, %v1481
  %1547 = vst.msk [vmem:[%s6 + $0x108] sm:$0xff] %vm1513, %v1482
  %1548 = vst.msk [vmem:[%s6 + $0x110] sm:$0xff] %vm1513, %v1483
  %1549 = vst.msk [vmem:[%s6 + $0x118] sm:$0xff] %vm1513, %v1484
  %1550 = vst.msk [vmem:[%s6 + $0x120] sm:$0xff] %vm1513, %v1485
  %1551 = vst.msk [vmem:[%s6 + $0x128] sm:$0xff] %vm1513, %v1486
  %1552 = vst.msk [vmem:[%s6 + $0x130] sm:$0xff] %vm1513, %v1487
  %1553 = vst.msk [vmem:[%s6 + $0x138] sm:$0xff] %vm1513, %v1488
  %1554 = vst.msk [vmem:[%s6 + $0x140] sm:$0xff] %vm1513, %v1489
  %1555 = vst.msk [vmem:[%s6 + $0x148] sm:$0xff] %vm1513, %v1490
  %1556 = vst.msk [vmem:[%s6 + $0x150] sm:$0xff] %vm1513, %v1491
  %1557 = vst.msk [vmem:[%s6 + $0x158] sm:$0xff] %vm1513, %v1492
  %1558 = vst.msk [vmem:[%s6 + $0x160] sm:$0xff] %vm1513, %v1493
  %1559 = vst.msk [vmem:[%s6 + $0x168] sm:$0xff] %vm1513, %v1494
  %1560 = vst.msk [vmem:[%s6 + $0x170] sm:$0xff] %vm1513, %v1495
  %1561 = vst.msk [vmem:[%s6 + $0x178] sm:$0xff] %vm1513, %v1496
  %1562 = vst.msk [vmem:[%s6 + $0x180] sm:$0xff] %vm1513, %v1497
  %1563 = vst.msk [vmem:[%s6 + $0x188] sm:$0xff] %vm1513, %v1498
  %1564 = vst.msk [vmem:[%s6 + $0x190] sm:$0xff] %vm1513, %v1499
  %1565 = vst.msk [vmem:[%s6 + $0x198] sm:$0xff] %vm1513, %v1500
  %1566 = vst.msk [vmem:[%s6 + $0x1a0] sm:$0xff] %vm1513, %v1501
  %1567 = vst.msk [vmem:[%s6 + $0x1a8] sm:$0xff] %vm1513, %v1502
  %1568 = vst.msk [vmem:[%s6 + $0x1b0] sm:$0xff] %vm1513, %v1503
  %1569 = vst.msk [vmem:[%s6 + $0x1b8] sm:$0xff] %vm1513, %v1504
  %1570 = vst.msk [vmem:[%s6 + $0x1c0] sm:$0xff] %vm1513, %v1505
  %1571 = vst.msk [vmem:[%s6 + $0x1c8] sm:$0xff] %vm1513, %v1506
  %1572 = vst.msk [vmem:[%s6 + $0x1d0] sm:$0xff] %vm1513, %v1507
  %1573 = vst.msk [vmem:[%s6 + $0x1d8] sm:$0xff] %vm1513, %v1508
  %1574 = vst.msk [vmem:[%s6 + $0x1e0] sm:$0xff] %vm1513, %v1509
  %1575 = vst.msk [vmem:[%s6 + $0x1e8] sm:$0xff] %vm1513, %v1510
  %1576 = vst.msk [vmem:[%s6 + $0x1f0] sm:$0xff] %vm1513, %v1511
  %1577 = vst.msk [vmem:[%s6 + $0x1f8] sm:$0xff] %vm1513, %v1512
  %v1578 = vpack.c.bf16 %v1450, %v1449
  %v1579 = vpack.c.bf16 %v1452, %v1451
  %v1580 = vpack.c.bf16 %v1454, %v1453
  %v1581 = vpack.c.bf16 %v1456, %v1455
  %v1582 = vpack.c.bf16 %v1458, %v1457
  %v1583 = vpack.c.bf16 %v1460, %v1459
  %v1584 = vpack.c.bf16 %v1462, %v1461
  %v1585 = vpack.c.bf16 %v1464, %v1463
  %v1586 = vpack.c.bf16 %v1466, %v1465
  %v1587 = vpack.c.bf16 %v1468, %v1467
  %v1588 = vpack.c.bf16 %v1470, %v1469
  %v1589 = vpack.c.bf16 %v1472, %v1471
  %v1590 = vpack.c.bf16 %v1474, %v1473
  %v1591 = vpack.c.bf16 %v1476, %v1475
  %v1592 = vpack.c.bf16 %v1478, %v1477
  %v1593 = vpack.c.bf16 %v1480, %v1479
  %v1594 = vpack.c.bf16 %v1482, %v1481
  %v1595 = vpack.c.bf16 %v1484, %v1483
  %v1596 = vpack.c.bf16 %v1486, %v1485
  %v1597 = vpack.c.bf16 %v1488, %v1487
  %v1598 = vpack.c.bf16 %v1490, %v1489
  %v1599 = vpack.c.bf16 %v1492, %v1491
  %v1600 = vpack.c.bf16 %v1494, %v1493
  %v1601 = vpack.c.bf16 %v1496, %v1495
  %v1602 = vpack.c.bf16 %v1498, %v1497
  %v1603 = vpack.c.bf16 %v1500, %v1499
  %v1604 = vpack.c.bf16 %v1502, %v1501
  %v1605 = vpack.c.bf16 %v1504, %v1503
  %v1606 = vpack.c.bf16 %v1506, %v1505
  %v1607 = vpack.c.bf16 %v1508, %v1507
  %v1608 = vpack.c.bf16 %v1510, %v1509
  %v1609 = vpack.c.bf16 %v1512, %v1511
  %s1610 = scalar_lea.vmem %s2, 128
  %v1611 = vld [vmem:[%s1610] sm:$0xf]
  %v1612 = vld [vmem:[%s1610 + $0x4] sm:$0xf]
  %v1613 = vld [vmem:[%s1610 + $0x8] sm:$0xf]
  %v1614 = vld [vmem:[%s1610 + $0xc] sm:$0xf]
  %v1615 = vld [vmem:[%s1610 + $0x10] sm:$0xf]
  %v1616 = vld [vmem:[%s1610 + $0x14] sm:$0xf]
  %v1617 = vld [vmem:[%s1610 + $0x18] sm:$0xf]
  %v1618 = vld [vmem:[%s1610 + $0x1c] sm:$0xf]
  %v1619 = vld [vmem:[%s1610 + $0x20] sm:$0xf]
  %v1620 = vld [vmem:[%s1610 + $0x24] sm:$0xf]
  %v1621 = vld [vmem:[%s1610 + $0x28] sm:$0xf]
  %v1622 = vld [vmem:[%s1610 + $0x2c] sm:$0xf]
  %v1623 = vld [vmem:[%s1610 + $0x30] sm:$0xf]
  %v1624 = vld [vmem:[%s1610 + $0x34] sm:$0xf]
  %v1625 = vld [vmem:[%s1610 + $0x38] sm:$0xf]
  %v1626 = vld [vmem:[%s1610 + $0x3c] sm:$0xf]
  %v1627 = vlaneseq
  %v1628 = vshrl.u32 %v1627, 7
  %v1629 = vsub.s32 3, %v1628
  %v1630 = vrot.slane %v23, %v1629
  %v1647 = vunpack.c.l.b16 %v1611
  %v1648 = vunpack.c.l.b16 %v1612
  %v1649 = vunpack.c.l.b16 %v1613
  %v1650 = vunpack.c.l.b16 %v1614
  %v1651 = vunpack.c.l.b16 %v1615
  %v1652 = vunpack.c.l.b16 %v1616
  %v1653 = vunpack.c.l.b16 %v1617
  %v1654 = vunpack.c.l.b16 %v1618
  %v1655 = vunpack.c.l.b16 %v1619
  %v1656 = vunpack.c.l.b16 %v1620
  %v1657 = vunpack.c.l.b16 %v1621
  %v1658 = vunpack.c.l.b16 %v1622
  %v1659 = vunpack.c.l.b16 %v1623
  %v1660 = vunpack.c.l.b16 %v1624
  %v1661 = vunpack.c.l.b16 %v1625
  %v1662 = vunpack.c.l.b16 %v1626
  %v1663 = vpack.c.b16 %v1648, %v1647
  %v1664 = vpack.c.b16 %v1650, %v1649
  %v1665 = vpack.c.b16 %v1652, %v1651
  %v1666 = vpack.c.b16 %v1654, %v1653
  %v1667 = vpack.c.b16 %v1656, %v1655
  %v1668 = vpack.c.b16 %v1658, %v1657
  %v1669 = vpack.c.b16 %v1660, %v1659
  %v1670 = vpack.c.b16 %v1662, %v1661
  %1679 = vmatprep.subr.bf16.mxu0 0
  %1680 = vmatpush1.bf16.msra.mxu0 %v1663
  %1681 = vmatprep.subr.bf16.mxu0 0
  %1682 = vmatpush1.bf16.msra.mxu0 %v1664
  %1683 = vmatprep.subr.bf16.mxu0 0
  %1684 = vmatpush1.bf16.msra.mxu0 %v1665
  %1685 = vmatprep.subr.bf16.mxu0 0
  %1686 = vmatpush1.bf16.msra.mxu0 %v1666
  %1687 = vmatprep.subr.bf16.mxu0 0
  %1688 = vmatpush1.bf16.msra.mxu0 %v1667
  %1689 = vmatprep.subr.bf16.mxu0 0
  %1690 = vmatpush1.bf16.msra.mxu0 %v1668
  %1691 = vmatprep.subr.bf16.mxu0 0
  %1692 = vmatpush1.bf16.msra.mxu0 %v1669
  %1693 = vmatprep.subr.bf16.mxu0 0
  %1694 = vmatpush1.bf16.msra.mxu0 %v1670
  %1695 = vmatprep.subr.bf16.mxu0 0
  %1696 = vmatpush1.bf16.msra.mxu0 0
  %1697 = vmatprep.subr.bf16.mxu0 0
  %1698 = vmatpush1.bf16.msra.mxu0 0
  %1699 = vmatprep.subr.bf16.mxu0 0
  %1700 = vmatpush1.bf16.msra.mxu0 0
  %1701 = vmatprep.subr.bf16.mxu0 0
  %1702 = vmatpush1.bf16.msra.mxu0 0
  %1703 = vmatprep.subr.bf16.mxu0 0
  %1704 = vmatpush1.bf16.msra.mxu0 0
  %1705 = vmatprep.subr.bf16.mxu0 0
  %1706 = vmatpush1.bf16.msra.mxu0 0
  %1707 = vmatprep.subr.bf16.mxu0 0
  %1708 = vmatpush1.bf16.msra.mxu0 0
  %1709 = vmatprep.subr.bf16.mxu0 0
  %1710 = vmatpush1.bf16.msra.mxu0 0
  %1711 = vmatprep.mubr.bf16.mxu0 0
  %1712 = vmatmul.mubr.bf16.gmra.mrb[0].mxu0 %v1578
  %v1713 = vpop.f32.mrb[0].mxu0
  %v1714 = vadd.f32 %v1630, %v1713
  %v1715 = vpop.f32.mrb[0].mxu0
  %v1716 = vpop.f32.mrb[0].mxu0
  %v1717 = vadd.f32 %v1630, %v1716
  %v1718 = vpop.f32.mrb[0].mxu0
  %1719 = vmatprep.mubr.bf16.mxu0 0
  %1720 = vmatmul.mubr.bf16.gmra.mrb[0].mxu0 %v1579
  %v1721 = vpop.f32.mrb[0].mxu0
  %v1722 = vadd.f32 %v1630, %v1721
  %v1723 = vpop.f32.mrb[0].mxu0
  %v1724 = vpop.f32.mrb[0].mxu0
  %v1725 = vadd.f32 %v1630, %v1724
  %v1726 = vpop.f32.mrb[0].mxu0
  %1727 = vmatprep.mubr.bf16.mxu0 0
  %1728 = vmatmul.mubr.bf16.gmra.mrb[0].mxu0 %v1580
  %v1729 = vpop.f32.mrb[0].mxu0
  %v1730 = vadd.f32 %v1630, %v1729
  %v1731 = vpop.f32.mrb[0].mxu0
  %v1732 = vpop.f32.mrb[0].mxu0
  %v1733 = vadd.f32 %v1630, %v1732
  %v1734 = vpop.f32.mrb[0].mxu0
  %1735 = vmatprep.mubr.bf16.mxu0 0
  %1736 = vmatmul.mubr.bf16.gmra.mrb[0].mxu0 %v1581
  %v1737 = vpop.f32.mrb[0].mxu0
  %v1738 = vadd.f32 %v1630, %v1737
  %v1739 = vpop.f32.mrb[0].mxu0
  %v1740 = vpop.f32.mrb[0].mxu0
  %v1741 = vadd.f32 %v1630, %v1740
  %v1742 = vpop.f32.mrb[0].mxu0
  %1743 = vmatprep.mubr.bf16.mxu0 0
  %1744 = vmatmul.mubr.bf16.gmra.mrb[0].mxu0 %v1582
  %v1745 = vpop.f32.mrb[0].mxu0
  %v1746 = vadd.f32 %v1630, %v1745
  %v1747 = vpop.f32.mrb[0].mxu0
  %v1748 = vpop.f32.mrb[0].mxu0
  %v1749 = vadd.f32 %v1630, %v1748
  %v1750 = vpop.f32.mrb[0].mxu0
  %1751 = vmatprep.mubr.bf16.mxu0 0
  %1752 = vmatmul.mubr.bf16.gmra.mrb[0].mxu0 %v1583
  %v1753 = vpop.f32.mrb[0].mxu0
  %v1754 = vadd.f32 %v1630, %v1753
  %v1755 = vpop.f32.mrb[0].mxu0
  %v1756 = vpop.f32.mrb[0].mxu0
  %v1757 = vadd.f32 %v1630, %v1756
  %v1758 = vpop.f32.mrb[0].mxu0
  %1759 = vmatprep.mubr.bf16.mxu0 0
  %1760 = vmatmul.mubr.bf16.gmra.mrb[0].mxu0 %v1584
  %v1761 = vpop.f32.mrb[0].mxu0
  %v1762 = vadd.f32 %v1630, %v1761
  %v1763 = vpop.f32.mrb[0].mxu0
  %v1764 = vpop.f32.mrb[0].mxu0
  %v1765 = vadd.f32 %v1630, %v1764
  %v1766 = vpop.f32.mrb[0].mxu0
  %1767 = vmatprep.mubr.bf16.mxu0 0
  %1768 = vmatmul.mubr.bf16.gmra.mrb[0].mxu0 %v1585
  %v1769 = vpop.f32.mrb[0].mxu0
  %v1770 = vadd.f32 %v1630, %v1769
  %v1771 = vpop.f32.mrb[0].mxu0
  %v1772 = vpop.f32.mrb[0].mxu0
  %v1773 = vadd.f32 %v1630, %v1772
  %v1774 = vpop.f32.mrb[0].mxu0
  %1775 = vmatprep.mubr.bf16.mxu0 0
  %1776 = vmatmul.mubr.bf16.gmra.mrb[0].mxu0 %v1586
  %v1777 = vpop.f32.mrb[0].mxu0
  %v1778 = vadd.f32 %v1630, %v1777
  %v1779 = vpop.f32.mrb[0].mxu0
  %v1780 = vpop.f32.mrb[0].mxu0
  %v1781 = vadd.f32 %v1630, %v1780
  %v1782 = vpop.f32.mrb[0].mxu0
  %1783 = vmatprep.mubr.bf16.mxu0 0
  %1784 = vmatmul.mubr.bf16.gmra.mrb[0].mxu0 %v1587
  %v1785 = vpop.f32.mrb[0].mxu0
  %v1786 = vadd.f32 %v1630, %v1785
  %v1787 = vpop.f32.mrb[0].mxu0
  %v1788 = vpop.f32.mrb[0].mxu0
  %v1789 = vadd.f32 %v1630, %v1788
  %v1790 = vpop.f32.mrb[0].mxu0
  %1791 = vmatprep.mubr.bf16.mxu0 0
  %1792 = vmatmul.mubr.bf16.gmra.mrb[0].mxu0 %v1588
  %v1793 = vpop.f32.mrb[0].mxu0
  %v1794 = vadd.f32 %v1630, %v1793
  %v1795 = vpop.f32.mrb[0].mxu0
  %v1796 = vpop.f32.mrb[0].mxu0
  %v1797 = vadd.f32 %v1630, %v1796
  %v1798 = vpop.f32.mrb[0].mxu0
  %1799 = vmatprep.mubr.bf16.mxu0 0
  %1800 = vmatmul.mubr.bf16.gmra.mrb[0].mxu0 %v1589
  %v1801 = vpop.f32.mrb[0].mxu0
  %v1802 = vadd.f32 %v1630, %v1801
  %v1803 = vpop.f32.mrb[0].mxu0
  %v1804 = vpop.f32.mrb[0].mxu0
  %v1805 = vadd.f32 %v1630, %v1804
  %v1806 = vpop.f32.mrb[0].mxu0
  %1807 = vmatprep.mubr.bf16.mxu0 0
  %1808 = vmatmul.mubr.bf16.gmra.mrb[0].mxu0 %v1590
  %v1809 = vpop.f32.mrb[0].mxu0
  %v1810 = vadd.f32 %v1630, %v1809
  %v1811 = vpop.f32.mrb[0].mxu0
  %v1812 = vpop.f32.mrb[0].mxu0
  %v1813 = vadd.f32 %v1630, %v1812
  %v1814 = vpop.f32.mrb[0].mxu0
  %1815 = vmatprep.mubr.bf16.mxu0 0
  %1816 = vmatmul.mubr.bf16.gmra.mrb[0].mxu0 %v1591
  %v1817 = vpop.f32.mrb[0].mxu0
  %v1818 = vadd.f32 %v1630, %v1817
  %v1819 = vpop.f32.mrb[0].mxu0
  %v1820 = vpop.f32.mrb[0].mxu0
  %v1821 = vadd.f32 %v1630, %v1820
  %v1822 = vpop.f32.mrb[0].mxu0
  %1823 = vmatprep.mubr.bf16.mxu0 0
  %1824 = vmatmul.mubr.bf16.gmra.mrb[0].mxu0 %v1592
  %v1825 = vpop.f32.mrb[0].mxu0
  %v1826 = vadd.f32 %v1630, %v1825
  %v1827 = vpop.f32.mrb[0].mxu0
  %v1828 = vpop.f32.mrb[0].mxu0
  %v1829 = vadd.f32 %v1630, %v1828
  %v1830 = vpop.f32.mrb[0].mxu0
  %1831 = vmatprep.mubr.bf16.mxu0 0
  %1832 = vmatmul.mubr.bf16.gmra.mrb[0].mxu0 %v1593
  %v1833 = vpop.f32.mrb[0].mxu0
  %v1834 = vadd.f32 %v1630, %v1833
  %v1835 = vpop.f32.mrb[0].mxu0
  %v1836 = vpop.f32.mrb[0].mxu0
  %v1837 = vadd.f32 %v1630, %v1836
  %v1838 = vpop.f32.mrb[0].mxu0
  %1839 = vmatprep.mubr.bf16.mxu0 0
  %1840 = vmatmul.mubr.bf16.gmra.mrb[0].mxu0 %v1594
  %v1841 = vpop.f32.mrb[0].mxu0
  %v1842 = vadd.f32 %v1630, %v1841
  %v1843 = vpop.f32.mrb[0].mxu0
  %v1844 = vpop.f32.mrb[0].mxu0
  %v1845 = vadd.f32 %v1630, %v1844
  %v1846 = vpop.f32.mrb[0].mxu0
  %1847 = vmatprep.mubr.bf16.mxu0 0
  %1848 = vmatmul.mubr.bf16.gmra.mrb[0].mxu0 %v1595
  %v1849 = vpop.f32.mrb[0].mxu0
  %v1850 = vadd.f32 %v1630, %v1849
  %v1851 = vpop.f32.mrb[0].mxu0
  %v1852 = vpop.f32.mrb[0].mxu0
  %v1853 = vadd.f32 %v1630, %v1852
  %v1854 = vpop.f32.mrb[0].mxu0
  %1855 = vmatprep.mubr.bf16.mxu0 0
  %1856 = vmatmul.mubr.bf16.gmra.mrb[0].mxu0 %v1596
  %v1857 = vpop.f32.mrb[0].mxu0
  %v1858 = vadd.f32 %v1630, %v1857
  %v1859 = vpop.f32.mrb[0].mxu0
  %v1860 = vpop.f32.mrb[0].mxu0
  %v1861 = vadd.f32 %v1630, %v1860
  %v1862 = vpop.f32.mrb[0].mxu0
  %1863 = vmatprep.mubr.bf16.mxu0 0
  %1864 = vmatmul.mubr.bf16.gmra.mrb[0].mxu0 %v1597
  %v1865 = vpop.f32.mrb[0].mxu0
  %v1866 = vadd.f32 %v1630, %v1865
  %v1867 = vpop.f32.mrb[0].mxu0
  %v1868 = vpop.f32.mrb[0].mxu0
  %v1869 = vadd.f32 %v1630, %v1868
  %v1870 = vpop.f32.mrb[0].mxu0
  %1871 = vmatprep.mubr.bf16.mxu0 0
  %1872 = vmatmul.mubr.bf16.gmra.mrb[0].mxu0 %v1598
  %v1873 = vpop.f32.mrb[0].mxu0
  %v1874 = vadd.f32 %v1630, %v1873
  %v1875 = vpop.f32.mrb[0].mxu0
  %v1876 = vpop.f32.mrb[0].mxu0
  %v1877 = vadd.f32 %v1630, %v1876
  %v1878 = vpop.f32.mrb[0].mxu0
  %1879 = vmatprep.mubr.bf16.mxu0 0
  %1880 = vmatmul.mubr.bf16.gmra.mrb[0].mxu0 %v1599
  %v1881 = vpop.f32.mrb[0].mxu0
  %v1882 = vadd.f32 %v1630, %v1881
  %v1883 = vpop.f32.mrb[0].mxu0
  %v1884 = vpop.f32.mrb[0].mxu0
  %v1885 = vadd.f32 %v1630, %v1884
  %v1886 = vpop.f32.mrb[0].mxu0
  %1887 = vmatprep.mubr.bf16.mxu0 0
  %1888 = vmatmul.mubr.bf16.gmra.mrb[0].mxu0 %v1600
  %v1889 = vpop.f32.mrb[0].mxu0
  %v1890 = vadd.f32 %v1630, %v1889
  %v1891 = vpop.f32.mrb[0].mxu0
  %v1892 = vpop.f32.mrb[0].mxu0
  %v1893 = vadd.f32 %v1630, %v1892
  %v1894 = vpop.f32.mrb[0].mxu0
  %1895 = vmatprep.mubr.bf16.mxu0 0
  %1896 = vmatmul.mubr.bf16.gmra.mrb[0].mxu0 %v1601
  %v1897 = vpop.f32.mrb[0].mxu0
  %v1898 = vadd.f32 %v1630, %v1897
  %v1899 = vpop.f32.mrb[0].mxu0
  %v1900 = vpop.f32.mrb[0].mxu0
  %v1901 = vadd.f32 %v1630, %v1900
  %v1902 = vpop.f32.mrb[0].mxu0
  %1903 = vmatprep.mubr.bf16.mxu0 0
  %1904 = vmatmul.mubr.bf16.gmra.mrb[0].mxu0 %v1602
  %v1905 = vpop.f32.mrb[0].mxu0
  %v1906 = vadd.f32 %v1630, %v1905
  %v1907 = vpop.f32.mrb[0].mxu0
  %v1908 = vpop.f32.mrb[0].mxu0
  %v1909 = vadd.f32 %v1630, %v1908
  %v1910 = vpop.f32.mrb[0].mxu0
  %1911 = vmatprep.mubr.bf16.mxu0 0
  %1912 = vmatmul.mubr.bf16.gmra.mrb[0].mxu0 %v1603
  %v1913 = vpop.f32.mrb[0].mxu0
  %v1914 = vadd.f32 %v1630, %v1913
  %v1915 = vpop.f32.mrb[0].mxu0
  %v1916 = vpop.f32.mrb[0].mxu0
  %v1917 = vadd.f32 %v1630, %v1916
  %v1918 = vpop.f32.mrb[0].mxu0
  %1919 = vmatprep.mubr.bf16.mxu0 0
  %1920 = vmatmul.mubr.bf16.gmra.mrb[0].mxu0 %v1604
  %v1921 = vpop.f32.mrb[0].mxu0
  %v1922 = vadd.f32 %v1630, %v1921
  %v1923 = vpop.f32.mrb[0].mxu0
  %v1924 = vpop.f32.mrb[0].mxu0
  %v1925 = vadd.f32 %v1630, %v1924
  %v1926 = vpop.f32.mrb[0].mxu0
  %1927 = vmatprep.mubr.bf16.mxu0 0
  %1928 = vmatmul.mubr.bf16.gmra.mrb[0].mxu0 %v1605
  %v1929 = vpop.f32.mrb[0].mxu0
  %v1930 = vadd.f32 %v1630, %v1929
  %v1931 = vpop.f32.mrb[0].mxu0
  %v1932 = vpop.f32.mrb[0].mxu0
  %v1933 = vadd.f32 %v1630, %v1932
  %v1934 = vpop.f32.mrb[0].mxu0
  %1935 = vmatprep.mubr.bf16.mxu0 0
  %1936 = vmatmul.mubr.bf16.gmra.mrb[0].mxu0 %v1606
  %v1937 = vpop.f32.mrb[0].mxu0
  %v1938 = vadd.f32 %v1630, %v1937
  %v1939 = vpop.f32.mrb[0].mxu0
  %v1940 = vpop.f32.mrb[0].mxu0
  %v1941 = vadd.f32 %v1630, %v1940
  %v1942 = vpop.f32.mrb[0].mxu0
  %1943 = vmatprep.mubr.bf16.mxu0 0
  %1944 = vmatmul.mubr.bf16.gmra.mrb[0].mxu0 %v1607
  %v1945 = vpop.f32.mrb[0].mxu0
  %v1946 = vadd.f32 %v1630, %v1945
  %v1947 = vpop.f32.mrb[0].mxu0
  %v1948 = vpop.f32.mrb[0].mxu0
  %v1949 = vadd.f32 %v1630, %v1948
  %v1950 = vpop.f32.mrb[0].mxu0
  %1951 = vmatprep.mubr.bf16.mxu0 0
  %1952 = vmatmul.mubr.bf16.gmra.mrb[0].mxu0 %v1608
  %v1953 = vpop.f32.mrb[0].mxu0
  %v1954 = vadd.f32 %v1630, %v1953
  %v1955 = vpop.f32.mrb[0].mxu0
  %v1956 = vpop.f32.mrb[0].mxu0
  %v1957 = vadd.f32 %v1630, %v1956
  %v1958 = vpop.f32.mrb[0].mxu0
  %1959 = vmatprep.mubr.bf16.mxu0 0
  %1960 = vmatmul.mubr.bf16.gmra.mrb[0].mxu0 %v1609
  %v1961 = vpop.f32.mrb[0].mxu0
  %v1962 = vadd.f32 %v1630, %v1961
  %v1963 = vpop.f32.mrb[0].mxu0
  %v1964 = vpop.f32.mrb[0].mxu0
  %v1965 = vadd.f32 %v1630, %v1964
  %v1966 = vpop.f32.mrb[0].mxu0
  %1967 = vdwg.mxu0
  %v1968 = vmax.f32 %v1714, 0.0
  %v1969 = vmax.f32 %v1717, 0.0
  %v1970 = vmax.f32 %v1722, 0.0
  %v1971 = vmax.f32 %v1725, 0.0
  %v1972 = vmax.f32 %v1730, 0.0
  %v1973 = vmax.f32 %v1733, 0.0
  %v1974 = vmax.f32 %v1738, 0.0
  %v1975 = vmax.f32 %v1741, 0.0
  %v1976 = vmax.f32 %v1746, 0.0
  %v1977 = vmax.f32 %v1749, 0.0
  %v1978 = vmax.f32 %v1754, 0.0
  %v1979 = vmax.f32 %v1757, 0.0
  %v1980 = vmax.f32 %v1762, 0.0
  %v1981 = vmax.f32 %v1765, 0.0
  %v1982 = vmax.f32 %v1770, 0.0
  %v1983 = vmax.f32 %v1773, 0.0
  %v1984 = vmax.f32 %v1778, 0.0
  %v1985 = vmax.f32 %v1781, 0.0
  %v1986 = vmax.f32 %v1786, 0.0
  %v1987 = vmax.f32 %v1789, 0.0
  %v1988 = vmax.f32 %v1794, 0.0
  %v1989 = vmax.f32 %v1797, 0.0
  %v1990 = vmax.f32 %v1802, 0.0
  %v1991 = vmax.f32 %v1805, 0.0
  %v1992 = vmax.f32 %v1810, 0.0
  %v1993 = vmax.f32 %v1813, 0.0
  %v1994 = vmax.f32 %v1818, 0.0
  %v1995 = vmax.f32 %v1821, 0.0
  %v1996 = vmax.f32 %v1826, 0.0
  %v1997 = vmax.f32 %v1829, 0.0
  %v1998 = vmax.f32 %v1834, 0.0
  %v1999 = vmax.f32 %v1837, 0.0
  %v2000 = vmax.f32 %v1842, 0.0
  %v2001 = vmax.f32 %v1845, 0.0
  %v2002 = vmax.f32 %v1850, 0.0
  %v2003 = vmax.f32 %v1853, 0.0
  %v2004 = vmax.f32 %v1858, 0.0
  %v2005 = vmax.f32 %v1861, 0.0
  %v2006 = vmax.f32 %v1866, 0.0
  %v2007 = vmax.f32 %v1869, 0.0
  %v2008 = vmax.f32 %v1874, 0.0
  %v2009 = vmax.f32 %v1877, 0.0
  %v2010 = vmax.f32 %v1882, 0.0
  %v2011 = vmax.f32 %v1885, 0.0
  %v2012 = vmax.f32 %v1890, 0.0
  %v2013 = vmax.f32 %v1893, 0.0
  %v2014 = vmax.f32 %v1898, 0.0
  %v2015 = vmax.f32 %v1901, 0.0
  %v2016 = vmax.f32 %v1906, 0.0
  %v2017 = vmax.f32 %v1909, 0.0
  %v2018 = vmax.f32 %v1914, 0.0
  %v2019 = vmax.f32 %v1917, 0.0
  %v2020 = vmax.f32 %v1922, 0.0
  %v2021 = vmax.f32 %v1925, 0.0
  %v2022 = vmax.f32 %v1930, 0.0
  %v2023 = vmax.f32 %v1933, 0.0
  %v2024 = vmax.f32 %v1938, 0.0
  %v2025 = vmax.f32 %v1941, 0.0
  %v2026 = vmax.f32 %v1946, 0.0
  %v2027 = vmax.f32 %v1949, 0.0
  %v2028 = vmax.f32 %v1954, 0.0
  %v2029 = vmax.f32 %v1957, 0.0
  %v2030 = vmax.f32 %v1962, 0.0
  %v2031 = vmax.f32 %v1965, 0.0
  %v2032 = vpack.c.bf16 %v1969, %v1968
  %v2033 = vpack.c.bf16 %v1971, %v1970
  %v2034 = vpack.c.bf16 %v1973, %v1972
  %v2035 = vpack.c.bf16 %v1975, %v1974
  %v2036 = vpack.c.bf16 %v1977, %v1976
  %v2037 = vpack.c.bf16 %v1979, %v1978
  %v2038 = vpack.c.bf16 %v1981, %v1980
  %v2039 = vpack.c.bf16 %v1983, %v1982
  %v2040 = vpack.c.bf16 %v1985, %v1984
  %v2041 = vpack.c.bf16 %v1987, %v1986
  %v2042 = vpack.c.bf16 %v1989, %v1988
  %v2043 = vpack.c.bf16 %v1991, %v1990
  %v2044 = vpack.c.bf16 %v1993, %v1992
  %v2045 = vpack.c.bf16 %v1995, %v1994
  %v2046 = vpack.c.bf16 %v1997, %v1996
  %v2047 = vpack.c.bf16 %v1999, %v1998
  %v2048 = vpack.c.bf16 %v2001, %v2000
  %v2049 = vpack.c.bf16 %v2003, %v2002
  %v2050 = vpack.c.bf16 %v2005, %v2004
  %v2051 = vpack.c.bf16 %v2007, %v2006
  %v2052 = vpack.c.bf16 %v2009, %v2008
  %v2053 = vpack.c.bf16 %v2011, %v2010
  %v2054 = vpack.c.bf16 %v2013, %v2012
  %v2055 = vpack.c.bf16 %v2015, %v2014
  %v2056 = vpack.c.bf16 %v2017, %v2016
  %v2057 = vpack.c.bf16 %v2019, %v2018
  %v2058 = vpack.c.bf16 %v2021, %v2020
  %v2059 = vpack.c.bf16 %v2023, %v2022
  %v2060 = vpack.c.bf16 %v2025, %v2024
  %v2061 = vpack.c.bf16 %v2027, %v2026
  %v2062 = vpack.c.bf16 %v2029, %v2028
  %v2063 = vpack.c.bf16 %v2031, %v2030
  %s2064 = scalar_lea.vmem %s2, 192
  %v2065 = vld [vmem:[%s2064] sm:$0xf]
  %v2066 = vld [vmem:[%s2064 + $0x4] sm:$0xf]
  %v2067 = vld [vmem:[%s2064 + $0x8] sm:$0xf]
  %v2068 = vld [vmem:[%s2064 + $0xc] sm:$0xf]
  %v2069 = vld [vmem:[%s2064 + $0x10] sm:$0xf]
  %v2070 = vld [vmem:[%s2064 + $0x14] sm:$0xf]
  %v2071 = vld [vmem:[%s2064 + $0x18] sm:$0xf]
  %v2072 = vld [vmem:[%s2064 + $0x1c] sm:$0xf]
  %v2073 = vld [vmem:[%s2064 + $0x20] sm:$0xf]
  %v2074 = vld [vmem:[%s2064 + $0x24] sm:$0xf]
  %v2075 = vld [vmem:[%s2064 + $0x28] sm:$0xf]
  %v2076 = vld [vmem:[%s2064 + $0x2c] sm:$0xf]
  %v2077 = vld [vmem:[%s2064 + $0x30] sm:$0xf]
  %v2078 = vld [vmem:[%s2064 + $0x34] sm:$0xf]
  %v2079 = vld [vmem:[%s2064 + $0x38] sm:$0xf]
  %v2080 = vld [vmem:[%s2064 + $0x3c] sm:$0xf]
  %v2081 = vlaneseq
  %v2082 = vshrl.u32 %v2081, 7
  %v2083 = vsub.s32 4, %v2082
  %v2084 = vrot.slane %v23, %v2083
  %v2101 = vunpack.c.l.b16 %v2065
  %v2102 = vunpack.c.l.b16 %v2066
  %v2103 = vunpack.c.l.b16 %v2067
  %v2104 = vunpack.c.l.b16 %v2068
  %v2105 = vunpack.c.l.b16 %v2069
  %v2106 = vunpack.c.l.b16 %v2070
  %v2107 = vunpack.c.l.b16 %v2071
  %v2108 = vunpack.c.l.b16 %v2072
  %v2109 = vunpack.c.l.b16 %v2073
  %v2110 = vunpack.c.l.b16 %v2074
  %v2111 = vunpack.c.l.b16 %v2075
  %v2112 = vunpack.c.l.b16 %v2076
  %v2113 = vunpack.c.l.b16 %v2077
  %v2114 = vunpack.c.l.b16 %v2078
  %v2115 = vunpack.c.l.b16 %v2079
  %v2116 = vunpack.c.l.b16 %v2080
  %v2117 = vpack.c.b16 %v2102, %v2101
  %v2118 = vpack.c.b16 %v2104, %v2103
  %v2119 = vpack.c.b16 %v2106, %v2105
  %v2120 = vpack.c.b16 %v2108, %v2107
  %v2121 = vpack.c.b16 %v2110, %v2109
  %v2122 = vpack.c.b16 %v2112, %v2111
  %v2123 = vpack.c.b16 %v2114, %v2113
  %v2124 = vpack.c.b16 %v2116, %v2115
  %2133 = vmatprep.subr.bf16.mxu0 0
  %2134 = vmatpush1.bf16.msra.mxu0 %v2117
  %2135 = vmatprep.subr.bf16.mxu0 0
  %2136 = vmatpush1.bf16.msra.mxu0 %v2118
  %2137 = vmatprep.subr.bf16.mxu0 0
  %2138 = vmatpush1.bf16.msra.mxu0 %v2119
  %2139 = vmatprep.subr.bf16.mxu0 0
  %2140 = vmatpush1.bf16.msra.mxu0 %v2120
  %2141 = vmatprep.subr.bf16.mxu0 0
  %2142 = vmatpush1.bf16.msra.mxu0 %v2121
  %2143 = vmatprep.subr.bf16.mxu0 0
  %2144 = vmatpush1.bf16.msra.mxu0 %v2122
  %2145 = vmatprep.subr.bf16.mxu0 0
  %2146 = vmatpush1.bf16.msra.mxu0 %v2123
  %2147 = vmatprep.subr.bf16.mxu0 0
  %2148 = vmatpush1.bf16.msra.mxu0 %v2124
  %2149 = vmatprep.subr.bf16.mxu0 0
  %2150 = vmatpush1.bf16.msra.mxu0 0
  %2151 = vmatprep.subr.bf16.mxu0 0
  %2152 = vmatpush1.bf16.msra.mxu0 0
  %2153 = vmatprep.subr.bf16.mxu0 0
  %2154 = vmatpush1.bf16.msra.mxu0 0
  %2155 = vmatprep.subr.bf16.mxu0 0
  %2156 = vmatpush1.bf16.msra.mxu0 0
  %2157 = vmatprep.subr.bf16.mxu0 0
  %2158 = vmatpush1.bf16.msra.mxu0 0
  %2159 = vmatprep.subr.bf16.mxu0 0
  %2160 = vmatpush1.bf16.msra.mxu0 0
  %2161 = vmatprep.subr.bf16.mxu0 0
  %2162 = vmatpush1.bf16.msra.mxu0 0
  %2163 = vmatprep.subr.bf16.mxu0 0
  %2164 = vmatpush1.bf16.msra.mxu0 0
  %2165 = vmatprep.mubr.bf16.mxu0 0
  %2166 = vmatmul.mubr.bf16.gmra.mrb[0].mxu0 %v2032
  %v2167 = vpop.f32.mrb[0].mxu0
  %v2168 = vadd.f32 %v2084, %v2167
  %v2169 = vpop.f32.mrb[0].mxu0
  %v2170 = vpop.f32.mrb[0].mxu0
  %v2171 = vadd.f32 %v2084, %v2170
  %v2172 = vpop.f32.mrb[0].mxu0
  %2173 = vmatprep.mubr.bf16.mxu0 0
  %2174 = vmatmul.mubr.bf16.gmra.mrb[0].mxu0 %v2033
  %v2175 = vpop.f32.mrb[0].mxu0
  %v2176 = vadd.f32 %v2084, %v2175
  %v2177 = vpop.f32.mrb[0].mxu0
  %v2178 = vpop.f32.mrb[0].mxu0
  %v2179 = vadd.f32 %v2084, %v2178
  %v2180 = vpop.f32.mrb[0].mxu0
  %2181 = vmatprep.mubr.bf16.mxu0 0
  %2182 = vmatmul.mubr.bf16.gmra.mrb[0].mxu0 %v2034
  %v2183 = vpop.f32.mrb[0].mxu0
  %v2184 = vadd.f32 %v2084, %v2183
  %v2185 = vpop.f32.mrb[0].mxu0
  %v2186 = vpop.f32.mrb[0].mxu0
  %v2187 = vadd.f32 %v2084, %v2186
  %v2188 = vpop.f32.mrb[0].mxu0
  %2189 = vmatprep.mubr.bf16.mxu0 0
  %2190 = vmatmul.mubr.bf16.gmra.mrb[0].mxu0 %v2035
  %v2191 = vpop.f32.mrb[0].mxu0
  %v2192 = vadd.f32 %v2084, %v2191
  %v2193 = vpop.f32.mrb[0].mxu0
  %v2194 = vpop.f32.mrb[0].mxu0
  %v2195 = vadd.f32 %v2084, %v2194
  %v2196 = vpop.f32.mrb[0].mxu0
  %2197 = vmatprep.mubr.bf16.mxu0 0
  %2198 = vmatmul.mubr.bf16.gmra.mrb[0].mxu0 %v2036
  %v2199 = vpop.f32.mrb[0].mxu0
  %v2200 = vadd.f32 %v2084, %v2199
  %v2201 = vpop.f32.mrb[0].mxu0
  %v2202 = vpop.f32.mrb[0].mxu0
  %v2203 = vadd.f32 %v2084, %v2202
  %v2204 = vpop.f32.mrb[0].mxu0
  %2205 = vmatprep.mubr.bf16.mxu0 0
  %2206 = vmatmul.mubr.bf16.gmra.mrb[0].mxu0 %v2037
  %v2207 = vpop.f32.mrb[0].mxu0
  %v2208 = vadd.f32 %v2084, %v2207
  %v2209 = vpop.f32.mrb[0].mxu0
  %v2210 = vpop.f32.mrb[0].mxu0
  %v2211 = vadd.f32 %v2084, %v2210
  %v2212 = vpop.f32.mrb[0].mxu0
  %2213 = vmatprep.mubr.bf16.mxu0 0
  %2214 = vmatmul.mubr.bf16.gmra.mrb[0].mxu0 %v2038
  %v2215 = vpop.f32.mrb[0].mxu0
  %v2216 = vadd.f32 %v2084, %v2215
  %v2217 = vpop.f32.mrb[0].mxu0
  %v2218 = vpop.f32.mrb[0].mxu0
  %v2219 = vadd.f32 %v2084, %v2218
  %v2220 = vpop.f32.mrb[0].mxu0
  %2221 = vmatprep.mubr.bf16.mxu0 0
  %2222 = vmatmul.mubr.bf16.gmra.mrb[0].mxu0 %v2039
  %v2223 = vpop.f32.mrb[0].mxu0
  %v2224 = vadd.f32 %v2084, %v2223
  %v2225 = vpop.f32.mrb[0].mxu0
  %v2226 = vpop.f32.mrb[0].mxu0
  %v2227 = vadd.f32 %v2084, %v2226
  %v2228 = vpop.f32.mrb[0].mxu0
  %2229 = vmatprep.mubr.bf16.mxu0 0
  %2230 = vmatmul.mubr.bf16.gmra.mrb[0].mxu0 %v2040
  %v2231 = vpop.f32.mrb[0].mxu0
  %v2232 = vadd.f32 %v2084, %v2231
  %v2233 = vpop.f32.mrb[0].mxu0
  %v2234 = vpop.f32.mrb[0].mxu0
  %v2235 = vadd.f32 %v2084, %v2234
  %v2236 = vpop.f32.mrb[0].mxu0
  %2237 = vmatprep.mubr.bf16.mxu0 0
  %2238 = vmatmul.mubr.bf16.gmra.mrb[0].mxu0 %v2041
  %v2239 = vpop.f32.mrb[0].mxu0
  %v2240 = vadd.f32 %v2084, %v2239
  %v2241 = vpop.f32.mrb[0].mxu0
  %v2242 = vpop.f32.mrb[0].mxu0
  %v2243 = vadd.f32 %v2084, %v2242
  %v2244 = vpop.f32.mrb[0].mxu0
  %2245 = vmatprep.mubr.bf16.mxu0 0
  %2246 = vmatmul.mubr.bf16.gmra.mrb[0].mxu0 %v2042
  %v2247 = vpop.f32.mrb[0].mxu0
  %v2248 = vadd.f32 %v2084, %v2247
  %v2249 = vpop.f32.mrb[0].mxu0
  %v2250 = vpop.f32.mrb[0].mxu0
  %v2251 = vadd.f32 %v2084, %v2250
  %v2252 = vpop.f32.mrb[0].mxu0
  %2253 = vmatprep.mubr.bf16.mxu0 0
  %2254 = vmatmul.mubr.bf16.gmra.mrb[0].mxu0 %v2043
  %v2255 = vpop.f32.mrb[0].mxu0
  %v2256 = vadd.f32 %v2084, %v2255
  %v2257 = vpop.f32.mrb[0].mxu0
  %v2258 = vpop.f32.mrb[0].mxu0
  %v2259 = vadd.f32 %v2084, %v2258
  %v2260 = vpop.f32.mrb[0].mxu0
  %2261 = vmatprep.mubr.bf16.mxu0 0
  %2262 = vmatmul.mubr.bf16.gmra.mrb[0].mxu0 %v2044
  %v2263 = vpop.f32.mrb[0].mxu0
  %v2264 = vadd.f32 %v2084, %v2263
  %v2265 = vpop.f32.mrb[0].mxu0
  %v2266 = vpop.f32.mrb[0].mxu0
  %v2267 = vadd.f32 %v2084, %v2266
  %v2268 = vpop.f32.mrb[0].mxu0
  %2269 = vmatprep.mubr.bf16.mxu0 0
  %2270 = vmatmul.mubr.bf16.gmra.mrb[0].mxu0 %v2045
  %v2271 = vpop.f32.mrb[0].mxu0
  %v2272 = vadd.f32 %v2084, %v2271
  %v2273 = vpop.f32.mrb[0].mxu0
  %v2274 = vpop.f32.mrb[0].mxu0
  %v2275 = vadd.f32 %v2084, %v2274
  %v2276 = vpop.f32.mrb[0].mxu0
  %2277 = vmatprep.mubr.bf16.mxu0 0
  %2278 = vmatmul.mubr.bf16.gmra.mrb[0].mxu0 %v2046
  %v2279 = vpop.f32.mrb[0].mxu0
  %v2280 = vadd.f32 %v2084, %v2279
  %v2281 = vpop.f32.mrb[0].mxu0
  %v2282 = vpop.f32.mrb[0].mxu0
  %v2283 = vadd.f32 %v2084, %v2282
  %v2284 = vpop.f32.mrb[0].mxu0
  %2285 = vmatprep.mubr.bf16.mxu0 0
  %2286 = vmatmul.mubr.bf16.gmra.mrb[0].mxu0 %v2047
  %v2287 = vpop.f32.mrb[0].mxu0
  %v2288 = vadd.f32 %v2084, %v2287
  %v2289 = vpop.f32.mrb[0].mxu0
  %v2290 = vpop.f32.mrb[0].mxu0
  %v2291 = vadd.f32 %v2084, %v2290
  %v2292 = vpop.f32.mrb[0].mxu0
  %2293 = vmatprep.mubr.bf16.mxu0 0
  %2294 = vmatmul.mubr.bf16.gmra.mrb[0].mxu0 %v2048
  %v2295 = vpop.f32.mrb[0].mxu0
  %v2296 = vadd.f32 %v2084, %v2295
  %v2297 = vpop.f32.mrb[0].mxu0
  %v2298 = vpop.f32.mrb[0].mxu0
  %v2299 = vadd.f32 %v2084, %v2298
  %v2300 = vpop.f32.mrb[0].mxu0
  %2301 = vmatprep.mubr.bf16.mxu0 0
  %2302 = vmatmul.mubr.bf16.gmra.mrb[0].mxu0 %v2049
  %v2303 = vpop.f32.mrb[0].mxu0
  %v2304 = vadd.f32 %v2084, %v2303
  %v2305 = vpop.f32.mrb[0].mxu0
  %v2306 = vpop.f32.mrb[0].mxu0
  %v2307 = vadd.f32 %v2084, %v2306
  %v2308 = vpop.f32.mrb[0].mxu0
  %2309 = vmatprep.mubr.bf16.mxu0 0
  %2310 = vmatmul.mubr.bf16.gmra.mrb[0].mxu0 %v2050
  %v2311 = vpop.f32.mrb[0].mxu0
  %v2312 = vadd.f32 %v2084, %v2311
  %v2313 = vpop.f32.mrb[0].mxu0
  %v2314 = vpop.f32.mrb[0].mxu0
  %v2315 = vadd.f32 %v2084, %v2314
  %v2316 = vpop.f32.mrb[0].mxu0
  %2317 = vmatprep.mubr.bf16.mxu0 0
  %2318 = vmatmul.mubr.bf16.gmra.mrb[0].mxu0 %v2051
  %v2319 = vpop.f32.mrb[0].mxu0
  %v2320 = vadd.f32 %v2084, %v2319
  %v2321 = vpop.f32.mrb[0].mxu0
  %v2322 = vpop.f32.mrb[0].mxu0
  %v2323 = vadd.f32 %v2084, %v2322
  %v2324 = vpop.f32.mrb[0].mxu0
  %2325 = vmatprep.mubr.bf16.mxu0 0
  %2326 = vmatmul.mubr.bf16.gmra.mrb[0].mxu0 %v2052
  %v2327 = vpop.f32.mrb[0].mxu0
  %v2328 = vadd.f32 %v2084, %v2327
  %v2329 = vpop.f32.mrb[0].mxu0
  %v2330 = vpop.f32.mrb[0].mxu0
  %v2331 = vadd.f32 %v2084, %v2330
  %v2332 = vpop.f32.mrb[0].mxu0
  %2333 = vmatprep.mubr.bf16.mxu0 0
  %2334 = vmatmul.mubr.bf16.gmra.mrb[0].mxu0 %v2053
  %v2335 = vpop.f32.mrb[0].mxu0
  %v2336 = vadd.f32 %v2084, %v2335
  %v2337 = vpop.f32.mrb[0].mxu0
  %v2338 = vpop.f32.mrb[0].mxu0
  %v2339 = vadd.f32 %v2084, %v2338
  %v2340 = vpop.f32.mrb[0].mxu0
  %2341 = vmatprep.mubr.bf16.mxu0 0
  %2342 = vmatmul.mubr.bf16.gmra.mrb[0].mxu0 %v2054
  %v2343 = vpop.f32.mrb[0].mxu0
  %v2344 = vadd.f32 %v2084, %v2343
  %v2345 = vpop.f32.mrb[0].mxu0
  %v2346 = vpop.f32.mrb[0].mxu0
  %v2347 = vadd.f32 %v2084, %v2346
  %v2348 = vpop.f32.mrb[0].mxu0
  %2349 = vmatprep.mubr.bf16.mxu0 0
  %2350 = vmatmul.mubr.bf16.gmra.mrb[0].mxu0 %v2055
  %v2351 = vpop.f32.mrb[0].mxu0
  %v2352 = vadd.f32 %v2084, %v2351
  %v2353 = vpop.f32.mrb[0].mxu0
  %v2354 = vpop.f32.mrb[0].mxu0
  %v2355 = vadd.f32 %v2084, %v2354
  %v2356 = vpop.f32.mrb[0].mxu0
  %2357 = vmatprep.mubr.bf16.mxu0 0
  %2358 = vmatmul.mubr.bf16.gmra.mrb[0].mxu0 %v2056
  %v2359 = vpop.f32.mrb[0].mxu0
  %v2360 = vadd.f32 %v2084, %v2359
  %v2361 = vpop.f32.mrb[0].mxu0
  %v2362 = vpop.f32.mrb[0].mxu0
  %v2363 = vadd.f32 %v2084, %v2362
  %v2364 = vpop.f32.mrb[0].mxu0
  %2365 = vmatprep.mubr.bf16.mxu0 0
  %2366 = vmatmul.mubr.bf16.gmra.mrb[0].mxu0 %v2057
  %v2367 = vpop.f32.mrb[0].mxu0
  %v2368 = vadd.f32 %v2084, %v2367
  %v2369 = vpop.f32.mrb[0].mxu0
  %v2370 = vpop.f32.mrb[0].mxu0
  %v2371 = vadd.f32 %v2084, %v2370
  %v2372 = vpop.f32.mrb[0].mxu0
  %2373 = vmatprep.mubr.bf16.mxu0 0
  %2374 = vmatmul.mubr.bf16.gmra.mrb[0].mxu0 %v2058
  %v2375 = vpop.f32.mrb[0].mxu0
  %v2376 = vadd.f32 %v2084, %v2375
  %v2377 = vpop.f32.mrb[0].mxu0
  %v2378 = vpop.f32.mrb[0].mxu0
  %v2379 = vadd.f32 %v2084, %v2378
  %v2380 = vpop.f32.mrb[0].mxu0
  %2381 = vmatprep.mubr.bf16.mxu0 0
  %2382 = vmatmul.mubr.bf16.gmra.mrb[0].mxu0 %v2059
  %v2383 = vpop.f32.mrb[0].mxu0
  %v2384 = vadd.f32 %v2084, %v2383
  %v2385 = vpop.f32.mrb[0].mxu0
  %v2386 = vpop.f32.mrb[0].mxu0
  %v2387 = vadd.f32 %v2084, %v2386
  %v2388 = vpop.f32.mrb[0].mxu0
  %2389 = vmatprep.mubr.bf16.mxu0 0
  %2390 = vmatmul.mubr.bf16.gmra.mrb[0].mxu0 %v2060
  %v2391 = vpop.f32.mrb[0].mxu0
  %v2392 = vadd.f32 %v2084, %v2391
  %v2393 = vpop.f32.mrb[0].mxu0
  %v2394 = vpop.f32.mrb[0].mxu0
  %v2395 = vadd.f32 %v2084, %v2394
  %v2396 = vpop.f32.mrb[0].mxu0
  %2397 = vmatprep.mubr.bf16.mxu0 0
  %2398 = vmatmul.mubr.bf16.gmra.mrb[0].mxu0 %v2061
  %v2399 = vpop.f32.mrb[0].mxu0
  %v2400 = vadd.f32 %v2084, %v2399
  %v2401 = vpop.f32.mrb[0].mxu0
  %v2402 = vpop.f32.mrb[0].mxu0
  %v2403 = vadd.f32 %v2084, %v2402
  %v2404 = vpop.f32.mrb[0].mxu0
  %2405 = vmatprep.mubr.bf16.mxu0 0
  %2406 = vmatmul.mubr.bf16.gmra.mrb[0].mxu0 %v2062
  %v2407 = vpop.f32.mrb[0].mxu0
  %v2408 = vadd.f32 %v2084, %v2407
  %v2409 = vpop.f32.mrb[0].mxu0
  %v2410 = vpop.f32.mrb[0].mxu0
  %v2411 = vadd.f32 %v2084, %v2410
  %v2412 = vpop.f32.mrb[0].mxu0
  %2413 = vmatprep.mubr.bf16.mxu0 0
  %2414 = vmatmul.mubr.bf16.gmra.mrb[0].mxu0 %v2063
  %v2415 = vpop.f32.mrb[0].mxu0
  %v2416 = vadd.f32 %v2084, %v2415
  %v2417 = vpop.f32.mrb[0].mxu0
  %v2418 = vpop.f32.mrb[0].mxu0
  %v2419 = vadd.f32 %v2084, %v2418
  %v2420 = vpop.f32.mrb[0].mxu0
  %2421 = vdwg.mxu0
  %v2422 = vmax.f32 %v2168, 0.0
  %v2423 = vmax.f32 %v2171, 0.0
  %v2424 = vmax.f32 %v2176, 0.0
  %v2425 = vmax.f32 %v2179, 0.0
  %v2426 = vmax.f32 %v2184, 0.0
  %v2427 = vmax.f32 %v2187, 0.0
  %v2428 = vmax.f32 %v2192, 0.0
  %v2429 = vmax.f32 %v2195, 0.0
  %v2430 = vmax.f32 %v2200, 0.0
  %v2431 = vmax.f32 %v2203, 0.0
  %v2432 = vmax.f32 %v2208, 0.0
  %v2433 = vmax.f32 %v2211, 0.0
  %v2434 = vmax.f32 %v2216, 0.0
  %v2435 = vmax.f32 %v2219, 0.0
  %v2436 = vmax.f32 %v2224, 0.0
  %v2437 = vmax.f32 %v2227, 0.0
  %v2438 = vmax.f32 %v2232, 0.0
  %v2439 = vmax.f32 %v2235, 0.0
  %v2440 = vmax.f32 %v2240, 0.0
  %v2441 = vmax.f32 %v2243, 0.0
  %v2442 = vmax.f32 %v2248, 0.0
  %v2443 = vmax.f32 %v2251, 0.0
  %v2444 = vmax.f32 %v2256, 0.0
  %v2445 = vmax.f32 %v2259, 0.0
  %v2446 = vmax.f32 %v2264, 0.0
  %v2447 = vmax.f32 %v2267, 0.0
  %v2448 = vmax.f32 %v2272, 0.0
  %v2449 = vmax.f32 %v2275, 0.0
  %v2450 = vmax.f32 %v2280, 0.0
  %v2451 = vmax.f32 %v2283, 0.0
  %v2452 = vmax.f32 %v2288, 0.0
  %v2453 = vmax.f32 %v2291, 0.0
  %v2454 = vmax.f32 %v2296, 0.0
  %v2455 = vmax.f32 %v2299, 0.0
  %v2456 = vmax.f32 %v2304, 0.0
  %v2457 = vmax.f32 %v2307, 0.0
  %v2458 = vmax.f32 %v2312, 0.0
  %v2459 = vmax.f32 %v2315, 0.0
  %v2460 = vmax.f32 %v2320, 0.0
  %v2461 = vmax.f32 %v2323, 0.0
  %v2462 = vmax.f32 %v2328, 0.0
  %v2463 = vmax.f32 %v2331, 0.0
  %v2464 = vmax.f32 %v2336, 0.0
  %v2465 = vmax.f32 %v2339, 0.0
  %v2466 = vmax.f32 %v2344, 0.0
  %v2467 = vmax.f32 %v2347, 0.0
  %v2468 = vmax.f32 %v2352, 0.0
  %v2469 = vmax.f32 %v2355, 0.0
  %v2470 = vmax.f32 %v2360, 0.0
  %v2471 = vmax.f32 %v2363, 0.0
  %v2472 = vmax.f32 %v2368, 0.0
  %v2473 = vmax.f32 %v2371, 0.0
  %v2474 = vmax.f32 %v2376, 0.0
  %v2475 = vmax.f32 %v2379, 0.0
  %v2476 = vmax.f32 %v2384, 0.0
  %v2477 = vmax.f32 %v2387, 0.0
  %v2478 = vmax.f32 %v2392, 0.0
  %v2479 = vmax.f32 %v2395, 0.0
  %v2480 = vmax.f32 %v2400, 0.0
  %v2481 = vmax.f32 %v2403, 0.0
  %v2482 = vmax.f32 %v2408, 0.0
  %v2483 = vmax.f32 %v2411, 0.0
  %v2484 = vmax.f32 %v2416, 0.0
  %v2485 = vmax.f32 %v2419, 0.0
  %v2486 = vpack.c.bf16 %v2423, %v2422
  %v2487 = vpack.c.bf16 %v2425, %v2424
  %v2488 = vpack.c.bf16 %v2427, %v2426
  %v2489 = vpack.c.bf16 %v2429, %v2428
  %v2490 = vpack.c.bf16 %v2431, %v2430
  %v2491 = vpack.c.bf16 %v2433, %v2432
  %v2492 = vpack.c.bf16 %v2435, %v2434
  %v2493 = vpack.c.bf16 %v2437, %v2436
  %v2494 = vpack.c.bf16 %v2439, %v2438
  %v2495 = vpack.c.bf16 %v2441, %v2440
  %v2496 = vpack.c.bf16 %v2443, %v2442
  %v2497 = vpack.c.bf16 %v2445, %v2444
  %v2498 = vpack.c.bf16 %v2447, %v2446
  %v2499 = vpack.c.bf16 %v2449, %v2448
  %v2500 = vpack.c.bf16 %v2451, %v2450
  %v2501 = vpack.c.bf16 %v2453, %v2452
  %v2502 = vpack.c.bf16 %v2455, %v2454
  %v2503 = vpack.c.bf16 %v2457, %v2456
  %v2504 = vpack.c.bf16 %v2459, %v2458
  %v2505 = vpack.c.bf16 %v2461, %v2460
  %v2506 = vpack.c.bf16 %v2463, %v2462
  %v2507 = vpack.c.bf16 %v2465, %v2464
  %v2508 = vpack.c.bf16 %v2467, %v2466
  %v2509 = vpack.c.bf16 %v2469, %v2468
  %v2510 = vpack.c.bf16 %v2471, %v2470
  %v2511 = vpack.c.bf16 %v2473, %v2472
  %v2512 = vpack.c.bf16 %v2475, %v2474
  %v2513 = vpack.c.bf16 %v2477, %v2476
  %v2514 = vpack.c.bf16 %v2479, %v2478
  %v2515 = vpack.c.bf16 %v2481, %v2480
  %v2516 = vpack.c.bf16 %v2483, %v2482
  %v2517 = vpack.c.bf16 %v2485, %v2484
  %v2518 = vld [vmem:[%s3] sm:$0xf]
  %v2519 = vld [vmem:[%s3 + $0x4] sm:$0xf]
  %v2520 = vld [vmem:[%s3 + $0x8] sm:$0xf]
  %v2521 = vld [vmem:[%s3 + $0xc] sm:$0xf]
  %v2522 = vld [vmem:[%s3 + $0x10] sm:$0xf]
  %v2523 = vld [vmem:[%s3 + $0x14] sm:$0xf]
  %v2524 = vld [vmem:[%s3 + $0x18] sm:$0xf]
  %v2525 = vld [vmem:[%s3 + $0x1c] sm:$0xf]
  %v2526 = vld [vmem:[%s3 + $0x20] sm:$0xf]
  %v2527 = vld [vmem:[%s3 + $0x24] sm:$0xf]
  %v2528 = vld [vmem:[%s3 + $0x28] sm:$0xf]
  %v2529 = vld [vmem:[%s3 + $0x2c] sm:$0xf]
  %v2530 = vld [vmem:[%s3 + $0x30] sm:$0xf]
  %v2531 = vld [vmem:[%s3 + $0x34] sm:$0xf]
  %v2532 = vld [vmem:[%s3 + $0x38] sm:$0xf]
  %v2533 = vld [vmem:[%s3 + $0x3c] sm:$0xf]
  %v2534 = vlaneseq
  %v2535 = vshrl.u32 %v2534, 7
  %v2536 = vsub.s32 5, %v2535
  %v2537 = vrot.slane %v23, %v2536
  %v2554 = vunpack.c.l.b16 %v2518
  %v2555 = vunpack.c.l.b16 %v2519
  %v2556 = vunpack.c.l.b16 %v2520
  %v2557 = vunpack.c.l.b16 %v2521
  %v2558 = vunpack.c.l.b16 %v2522
  %v2559 = vunpack.c.l.b16 %v2523
  %v2560 = vunpack.c.l.b16 %v2524
  %v2561 = vunpack.c.l.b16 %v2525
  %v2562 = vunpack.c.l.b16 %v2526
  %v2563 = vunpack.c.l.b16 %v2527
  %v2564 = vunpack.c.l.b16 %v2528
  %v2565 = vunpack.c.l.b16 %v2529
  %v2566 = vunpack.c.l.b16 %v2530
  %v2567 = vunpack.c.l.b16 %v2531
  %v2568 = vunpack.c.l.b16 %v2532
  %v2569 = vunpack.c.l.b16 %v2533
  %v2570 = vpack.c.b16 %v2555, %v2554
  %v2571 = vpack.c.b16 %v2557, %v2556
  %v2572 = vpack.c.b16 %v2559, %v2558
  %v2573 = vpack.c.b16 %v2561, %v2560
  %v2574 = vpack.c.b16 %v2563, %v2562
  %v2575 = vpack.c.b16 %v2565, %v2564
  %v2576 = vpack.c.b16 %v2567, %v2566
  %v2577 = vpack.c.b16 %v2569, %v2568
  %2586 = vmatprep.subr.bf16.mxu0 0
  %2587 = vmatpush1.bf16.msra.mxu0 %v2570
  %2588 = vmatprep.subr.bf16.mxu0 0
  %2589 = vmatpush1.bf16.msra.mxu0 %v2571
  %2590 = vmatprep.subr.bf16.mxu0 0
  %2591 = vmatpush1.bf16.msra.mxu0 %v2572
  %2592 = vmatprep.subr.bf16.mxu0 0
  %2593 = vmatpush1.bf16.msra.mxu0 %v2573
  %2594 = vmatprep.subr.bf16.mxu0 0
  %2595 = vmatpush1.bf16.msra.mxu0 %v2574
  %2596 = vmatprep.subr.bf16.mxu0 0
  %2597 = vmatpush1.bf16.msra.mxu0 %v2575
  %2598 = vmatprep.subr.bf16.mxu0 0
  %2599 = vmatpush1.bf16.msra.mxu0 %v2576
  %2600 = vmatprep.subr.bf16.mxu0 0
  %2601 = vmatpush1.bf16.msra.mxu0 %v2577
  %2602 = vmatprep.subr.bf16.mxu0 0
  %2603 = vmatpush1.bf16.msra.mxu0 0
  %2604 = vmatprep.subr.bf16.mxu0 0
  %2605 = vmatpush1.bf16.msra.mxu0 0
  %2606 = vmatprep.subr.bf16.mxu0 0
  %2607 = vmatpush1.bf16.msra.mxu0 0
  %2608 = vmatprep.subr.bf16.mxu0 0
  %2609 = vmatpush1.bf16.msra.mxu0 0
  %2610 = vmatprep.subr.bf16.mxu0 0
  %2611 = vmatpush1.bf16.msra.mxu0 0
  %2612 = vmatprep.subr.bf16.mxu0 0
  %2613 = vmatpush1.bf16.msra.mxu0 0
  %2614 = vmatprep.subr.bf16.mxu0 0
  %2615 = vmatpush1.bf16.msra.mxu0 0
  %2616 = vmatprep.subr.bf16.mxu0 0
  %2617 = vmatpush1.bf16.msra.mxu0 0
  %2618 = vmatprep.mubr.bf16.mxu0 0
  %2619 = vmatmul.mubr.bf16.gmra.mrb[0].mxu0 %v2486
  %v2620 = vpop.f32.mrb[0].mxu0
  %v2621 = vadd.f32 %v2537, %v2620
  %v2622 = vpop.f32.mrb[0].mxu0
  %v2623 = vpop.f32.mrb[0].mxu0
  %v2624 = vadd.f32 %v2537, %v2623
  %v2625 = vpop.f32.mrb[0].mxu0
  %2626 = vmatprep.mubr.bf16.mxu0 0
  %2627 = vmatmul.mubr.bf16.gmra.mrb[0].mxu0 %v2487
  %v2628 = vpop.f32.mrb[0].mxu0
  %v2629 = vadd.f32 %v2537, %v2628
  %v2630 = vpop.f32.mrb[0].mxu0
  %v2631 = vpop.f32.mrb[0].mxu0
  %v2632 = vadd.f32 %v2537, %v2631
  %v2633 = vpop.f32.mrb[0].mxu0
  %2634 = vmatprep.mubr.bf16.mxu0 0
  %2635 = vmatmul.mubr.bf16.gmra.mrb[0].mxu0 %v2488
  %v2636 = vpop.f32.mrb[0].mxu0
  %v2637 = vadd.f32 %v2537, %v2636
  %v2638 = vpop.f32.mrb[0].mxu0
  %v2639 = vpop.f32.mrb[0].mxu0
  %v2640 = vadd.f32 %v2537, %v2639
  %v2641 = vpop.f32.mrb[0].mxu0
  %2642 = vmatprep.mubr.bf16.mxu0 0
  %2643 = vmatmul.mubr.bf16.gmra.mrb[0].mxu0 %v2489
  %v2644 = vpop.f32.mrb[0].mxu0
  %v2645 = vadd.f32 %v2537, %v2644
  %v2646 = vpop.f32.mrb[0].mxu0
  %v2647 = vpop.f32.mrb[0].mxu0
  %v2648 = vadd.f32 %v2537, %v2647
  %v2649 = vpop.f32.mrb[0].mxu0
  %2650 = vmatprep.mubr.bf16.mxu0 0
  %2651 = vmatmul.mubr.bf16.gmra.mrb[0].mxu0 %v2490
  %v2652 = vpop.f32.mrb[0].mxu0
  %v2653 = vadd.f32 %v2537, %v2652
  %v2654 = vpop.f32.mrb[0].mxu0
  %v2655 = vpop.f32.mrb[0].mxu0
  %v2656 = vadd.f32 %v2537, %v2655
  %v2657 = vpop.f32.mrb[0].mxu0
  %2658 = vmatprep.mubr.bf16.mxu0 0
  %2659 = vmatmul.mubr.bf16.gmra.mrb[0].mxu0 %v2491
  %v2660 = vpop.f32.mrb[0].mxu0
  %v2661 = vadd.f32 %v2537, %v2660
  %v2662 = vpop.f32.mrb[0].mxu0
  %v2663 = vpop.f32.mrb[0].mxu0
  %v2664 = vadd.f32 %v2537, %v2663
  %v2665 = vpop.f32.mrb[0].mxu0
  %2666 = vmatprep.mubr.bf16.mxu0 0
  %2667 = vmatmul.mubr.bf16.gmra.mrb[0].mxu0 %v2492
  %v2668 = vpop.f32.mrb[0].mxu0
  %v2669 = vadd.f32 %v2537, %v2668
  %v2670 = vpop.f32.mrb[0].mxu0
  %v2671 = vpop.f32.mrb[0].mxu0
  %v2672 = vadd.f32 %v2537, %v2671
  %v2673 = vpop.f32.mrb[0].mxu0
  %2674 = vmatprep.mubr.bf16.mxu0 0
  %2675 = vmatmul.mubr.bf16.gmra.mrb[0].mxu0 %v2493
  %v2676 = vpop.f32.mrb[0].mxu0
  %v2677 = vadd.f32 %v2537, %v2676
  %v2678 = vpop.f32.mrb[0].mxu0
  %v2679 = vpop.f32.mrb[0].mxu0
  %v2680 = vadd.f32 %v2537, %v2679
  %v2681 = vpop.f32.mrb[0].mxu0
  %2682 = vmatprep.mubr.bf16.mxu0 0
  %2683 = vmatmul.mubr.bf16.gmra.mrb[0].mxu0 %v2494
  %v2684 = vpop.f32.mrb[0].mxu0
  %v2685 = vadd.f32 %v2537, %v2684
  %v2686 = vpop.f32.mrb[0].mxu0
  %v2687 = vpop.f32.mrb[0].mxu0
  %v2688 = vadd.f32 %v2537, %v2687
  %v2689 = vpop.f32.mrb[0].mxu0
  %2690 = vmatprep.mubr.bf16.mxu0 0
  %2691 = vmatmul.mubr.bf16.gmra.mrb[0].mxu0 %v2495
  %v2692 = vpop.f32.mrb[0].mxu0
  %v2693 = vadd.f32 %v2537, %v2692
  %v2694 = vpop.f32.mrb[0].mxu0
  %v2695 = vpop.f32.mrb[0].mxu0
  %v2696 = vadd.f32 %v2537, %v2695
  %v2697 = vpop.f32.mrb[0].mxu0
  %2698 = vmatprep.mubr.bf16.mxu0 0
  %2699 = vmatmul.mubr.bf16.gmra.mrb[0].mxu0 %v2496
  %v2700 = vpop.f32.mrb[0].mxu0
  %v2701 = vadd.f32 %v2537, %v2700
  %v2702 = vpop.f32.mrb[0].mxu0
  %v2703 = vpop.f32.mrb[0].mxu0
  %v2704 = vadd.f32 %v2537, %v2703
  %v2705 = vpop.f32.mrb[0].mxu0
  %2706 = vmatprep.mubr.bf16.mxu0 0
  %2707 = vmatmul.mubr.bf16.gmra.mrb[0].mxu0 %v2497
  %v2708 = vpop.f32.mrb[0].mxu0
  %v2709 = vadd.f32 %v2537, %v2708
  %v2710 = vpop.f32.mrb[0].mxu0
  %v2711 = vpop.f32.mrb[0].mxu0
  %v2712 = vadd.f32 %v2537, %v2711
  %v2713 = vpop.f32.mrb[0].mxu0
  %2714 = vmatprep.mubr.bf16.mxu0 0
  %2715 = vmatmul.mubr.bf16.gmra.mrb[0].mxu0 %v2498
  %v2716 = vpop.f32.mrb[0].mxu0
  %v2717 = vadd.f32 %v2537, %v2716
  %v2718 = vpop.f32.mrb[0].mxu0
  %v2719 = vpop.f32.mrb[0].mxu0
  %v2720 = vadd.f32 %v2537, %v2719
  %v2721 = vpop.f32.mrb[0].mxu0
  %2722 = vmatprep.mubr.bf16.mxu0 0
  %2723 = vmatmul.mubr.bf16.gmra.mrb[0].mxu0 %v2499
  %v2724 = vpop.f32.mrb[0].mxu0
  %v2725 = vadd.f32 %v2537, %v2724
  %v2726 = vpop.f32.mrb[0].mxu0
  %v2727 = vpop.f32.mrb[0].mxu0
  %v2728 = vadd.f32 %v2537, %v2727
  %v2729 = vpop.f32.mrb[0].mxu0
  %2730 = vmatprep.mubr.bf16.mxu0 0
  %2731 = vmatmul.mubr.bf16.gmra.mrb[0].mxu0 %v2500
  %v2732 = vpop.f32.mrb[0].mxu0
  %v2733 = vadd.f32 %v2537, %v2732
  %v2734 = vpop.f32.mrb[0].mxu0
  %v2735 = vpop.f32.mrb[0].mxu0
  %v2736 = vadd.f32 %v2537, %v2735
  %v2737 = vpop.f32.mrb[0].mxu0
  %2738 = vmatprep.mubr.bf16.mxu0 0
  %2739 = vmatmul.mubr.bf16.gmra.mrb[0].mxu0 %v2501
  %v2740 = vpop.f32.mrb[0].mxu0
  %v2741 = vadd.f32 %v2537, %v2740
  %v2742 = vpop.f32.mrb[0].mxu0
  %v2743 = vpop.f32.mrb[0].mxu0
  %v2744 = vadd.f32 %v2537, %v2743
  %v2745 = vpop.f32.mrb[0].mxu0
  %2746 = vmatprep.mubr.bf16.mxu0 0
  %2747 = vmatmul.mubr.bf16.gmra.mrb[0].mxu0 %v2502
  %v2748 = vpop.f32.mrb[0].mxu0
  %v2749 = vadd.f32 %v2537, %v2748
  %v2750 = vpop.f32.mrb[0].mxu0
  %v2751 = vpop.f32.mrb[0].mxu0
  %v2752 = vadd.f32 %v2537, %v2751
  %v2753 = vpop.f32.mrb[0].mxu0
  %2754 = vmatprep.mubr.bf16.mxu0 0
  %2755 = vmatmul.mubr.bf16.gmra.mrb[0].mxu0 %v2503
  %v2756 = vpop.f32.mrb[0].mxu0
  %v2757 = vadd.f32 %v2537, %v2756
  %v2758 = vpop.f32.mrb[0].mxu0
  %v2759 = vpop.f32.mrb[0].mxu0
  %v2760 = vadd.f32 %v2537, %v2759
  %v2761 = vpop.f32.mrb[0].mxu0
  %2762 = vmatprep.mubr.bf16.mxu0 0
  %2763 = vmatmul.mubr.bf16.gmra.mrb[0].mxu0 %v2504
  %v2764 = vpop.f32.mrb[0].mxu0
  %v2765 = vadd.f32 %v2537, %v2764
  %v2766 = vpop.f32.mrb[0].mxu0
  %v2767 = vpop.f32.mrb[0].mxu0
  %v2768 = vadd.f32 %v2537, %v2767
  %v2769 = vpop.f32.mrb[0].mxu0
  %2770 = vmatprep.mubr.bf16.mxu0 0
  %2771 = vmatmul.mubr.bf16.gmra.mrb[0].mxu0 %v2505
  %v2772 = vpop.f32.mrb[0].mxu0
  %v2773 = vadd.f32 %v2537, %v2772
  %v2774 = vpop.f32.mrb[0].mxu0
  %v2775 = vpop.f32.mrb[0].mxu0
  %v2776 = vadd.f32 %v2537, %v2775
  %v2777 = vpop.f32.mrb[0].mxu0
  %2778 = vmatprep.mubr.bf16.mxu0 0
  %2779 = vmatmul.mubr.bf16.gmra.mrb[0].mxu0 %v2506
  %v2780 = vpop.f32.mrb[0].mxu0
  %v2781 = vadd.f32 %v2537, %v2780
  %v2782 = vpop.f32.mrb[0].mxu0
  %v2783 = vpop.f32.mrb[0].mxu0
  %v2784 = vadd.f32 %v2537, %v2783
  %v2785 = vpop.f32.mrb[0].mxu0
  %2786 = vmatprep.mubr.bf16.mxu0 0
  %2787 = vmatmul.mubr.bf16.gmra.mrb[0].mxu0 %v2507
  %v2788 = vpop.f32.mrb[0].mxu0
  %v2789 = vadd.f32 %v2537, %v2788
  %v2790 = vpop.f32.mrb[0].mxu0
  %v2791 = vpop.f32.mrb[0].mxu0
  %v2792 = vadd.f32 %v2537, %v2791
  %v2793 = vpop.f32.mrb[0].mxu0
  %2794 = vmatprep.mubr.bf16.mxu0 0
  %2795 = vmatmul.mubr.bf16.gmra.mrb[0].mxu0 %v2508
  %v2796 = vpop.f32.mrb[0].mxu0
  %v2797 = vadd.f32 %v2537, %v2796
  %v2798 = vpop.f32.mrb[0].mxu0
  %v2799 = vpop.f32.mrb[0].mxu0
  %v2800 = vadd.f32 %v2537, %v2799
  %v2801 = vpop.f32.mrb[0].mxu0
  %2802 = vmatprep.mubr.bf16.mxu0 0
  %2803 = vmatmul.mubr.bf16.gmra.mrb[0].mxu0 %v2509
  %v2804 = vpop.f32.mrb[0].mxu0
  %v2805 = vadd.f32 %v2537, %v2804
  %v2806 = vpop.f32.mrb[0].mxu0
  %v2807 = vpop.f32.mrb[0].mxu0
  %v2808 = vadd.f32 %v2537, %v2807
  %v2809 = vpop.f32.mrb[0].mxu0
  %2810 = vmatprep.mubr.bf16.mxu0 0
  %2811 = vmatmul.mubr.bf16.gmra.mrb[0].mxu0 %v2510
  %v2812 = vpop.f32.mrb[0].mxu0
  %v2813 = vadd.f32 %v2537, %v2812
  %v2814 = vpop.f32.mrb[0].mxu0
  %v2815 = vpop.f32.mrb[0].mxu0
  %v2816 = vadd.f32 %v2537, %v2815
  %v2817 = vpop.f32.mrb[0].mxu0
  %2818 = vmatprep.mubr.bf16.mxu0 0
  %2819 = vmatmul.mubr.bf16.gmra.mrb[0].mxu0 %v2511
  %v2820 = vpop.f32.mrb[0].mxu0
  %v2821 = vadd.f32 %v2537, %v2820
  %v2822 = vpop.f32.mrb[0].mxu0
  %v2823 = vpop.f32.mrb[0].mxu0
  %v2824 = vadd.f32 %v2537, %v2823
  %v2825 = vpop.f32.mrb[0].mxu0
  %2826 = vmatprep.mubr.bf16.mxu0 0
  %2827 = vmatmul.mubr.bf16.gmra.mrb[0].mxu0 %v2512
  %v2828 = vpop.f32.mrb[0].mxu0
  %v2829 = vadd.f32 %v2537, %v2828
  %v2830 = vpop.f32.mrb[0].mxu0
  %v2831 = vpop.f32.mrb[0].mxu0
  %v2832 = vadd.f32 %v2537, %v2831
  %v2833 = vpop.f32.mrb[0].mxu0
  %2834 = vmatprep.mubr.bf16.mxu0 0
  %2835 = vmatmul.mubr.bf16.gmra.mrb[0].mxu0 %v2513
  %v2836 = vpop.f32.mrb[0].mxu0
  %v2837 = vadd.f32 %v2537, %v2836
  %v2838 = vpop.f32.mrb[0].mxu0
  %v2839 = vpop.f32.mrb[0].mxu0
  %v2840 = vadd.f32 %v2537, %v2839
  %v2841 = vpop.f32.mrb[0].mxu0
  %2842 = vmatprep.mubr.bf16.mxu0 0
  %2843 = vmatmul.mubr.bf16.gmra.mrb[0].mxu0 %v2514
  %v2844 = vpop.f32.mrb[0].mxu0
  %v2845 = vadd.f32 %v2537, %v2844
  %v2846 = vpop.f32.mrb[0].mxu0
  %v2847 = vpop.f32.mrb[0].mxu0
  %v2848 = vadd.f32 %v2537, %v2847
  %v2849 = vpop.f32.mrb[0].mxu0
  %2850 = vmatprep.mubr.bf16.mxu0 0
  %2851 = vmatmul.mubr.bf16.gmra.mrb[0].mxu0 %v2515
  %v2852 = vpop.f32.mrb[0].mxu0
  %v2853 = vadd.f32 %v2537, %v2852
  %v2854 = vpop.f32.mrb[0].mxu0
  %v2855 = vpop.f32.mrb[0].mxu0
  %v2856 = vadd.f32 %v2537, %v2855
  %v2857 = vpop.f32.mrb[0].mxu0
  %2858 = vmatprep.mubr.bf16.mxu0 0
  %2859 = vmatmul.mubr.bf16.gmra.mrb[0].mxu0 %v2516
  %v2860 = vpop.f32.mrb[0].mxu0
  %v2861 = vadd.f32 %v2537, %v2860
  %v2862 = vpop.f32.mrb[0].mxu0
  %v2863 = vpop.f32.mrb[0].mxu0
  %v2864 = vadd.f32 %v2537, %v2863
  %v2865 = vpop.f32.mrb[0].mxu0
  %2866 = vmatprep.mubr.bf16.mxu0 0
  %2867 = vmatmul.mubr.bf16.gmra.mrb[0].mxu0 %v2517
  %v2868 = vpop.f32.mrb[0].mxu0
  %v2869 = vadd.f32 %v2537, %v2868
  %v2870 = vpop.f32.mrb[0].mxu0
  %v2871 = vpop.f32.mrb[0].mxu0
  %v2872 = vadd.f32 %v2537, %v2871
  %v2873 = vpop.f32.mrb[0].mxu0
  %2874 = vdwg.mxu0
  %2875 = vst.msk [vmem:[%s5] sm:$0xff] %vm156, %v2621
  %2876 = vst.msk [vmem:[%s5 + $0x8] sm:$0xff] %vm156, %v2624
  %2877 = vst.msk [vmem:[%s5 + $0x10] sm:$0xff] %vm156, %v2629
  %2878 = vst.msk [vmem:[%s5 + $0x18] sm:$0xff] %vm156, %v2632
  %2879 = vst.msk [vmem:[%s5 + $0x20] sm:$0xff] %vm156, %v2637
  %2880 = vst.msk [vmem:[%s5 + $0x28] sm:$0xff] %vm156, %v2640
  %2881 = vst.msk [vmem:[%s5 + $0x30] sm:$0xff] %vm156, %v2645
  %2882 = vst.msk [vmem:[%s5 + $0x38] sm:$0xff] %vm156, %v2648
  %2883 = vst.msk [vmem:[%s5 + $0x40] sm:$0xff] %vm156, %v2653
  %2884 = vst.msk [vmem:[%s5 + $0x48] sm:$0xff] %vm156, %v2656
  %2885 = vst.msk [vmem:[%s5 + $0x50] sm:$0xff] %vm156, %v2661
  %2886 = vst.msk [vmem:[%s5 + $0x58] sm:$0xff] %vm156, %v2664
  %2887 = vst.msk [vmem:[%s5 + $0x60] sm:$0xff] %vm156, %v2669
  %2888 = vst.msk [vmem:[%s5 + $0x68] sm:$0xff] %vm156, %v2672
  %2889 = vst.msk [vmem:[%s5 + $0x70] sm:$0xff] %vm156, %v2677
  %2890 = vst.msk [vmem:[%s5 + $0x78] sm:$0xff] %vm156, %v2680
  %2891 = vst.msk [vmem:[%s5 + $0x80] sm:$0xff] %vm156, %v2685
  %2892 = vst.msk [vmem:[%s5 + $0x88] sm:$0xff] %vm156, %v2688
  %2893 = vst.msk [vmem:[%s5 + $0x90] sm:$0xff] %vm156, %v2693
  %2894 = vst.msk [vmem:[%s5 + $0x98] sm:$0xff] %vm156, %v2696
  %2895 = vst.msk [vmem:[%s5 + $0xa0] sm:$0xff] %vm156, %v2701
  %2896 = vst.msk [vmem:[%s5 + $0xa8] sm:$0xff] %vm156, %v2704
  %2897 = vst.msk [vmem:[%s5 + $0xb0] sm:$0xff] %vm156, %v2709
  %2898 = vst.msk [vmem:[%s5 + $0xb8] sm:$0xff] %vm156, %v2712
  %2899 = vst.msk [vmem:[%s5 + $0xc0] sm:$0xff] %vm156, %v2717
  %2900 = vst.msk [vmem:[%s5 + $0xc8] sm:$0xff] %vm156, %v2720
  %2901 = vst.msk [vmem:[%s5 + $0xd0] sm:$0xff] %vm156, %v2725
  %2902 = vst.msk [vmem:[%s5 + $0xd8] sm:$0xff] %vm156, %v2728
  %2903 = vst.msk [vmem:[%s5 + $0xe0] sm:$0xff] %vm156, %v2733
  %2904 = vst.msk [vmem:[%s5 + $0xe8] sm:$0xff] %vm156, %v2736
  %2905 = vst.msk [vmem:[%s5 + $0xf0] sm:$0xff] %vm156, %v2741
  %2906 = vst.msk [vmem:[%s5 + $0xf8] sm:$0xff] %vm156, %v2744
  %2907 = vst.msk [vmem:[%s5 + $0x100] sm:$0xff] %vm156, %v2749
  %2908 = vst.msk [vmem:[%s5 + $0x108] sm:$0xff] %vm156, %v2752
  %2909 = vst.msk [vmem:[%s5 + $0x110] sm:$0xff] %vm156, %v2757
  %2910 = vst.msk [vmem:[%s5 + $0x118] sm:$0xff] %vm156, %v2760
  %2911 = vst.msk [vmem:[%s5 + $0x120] sm:$0xff] %vm156, %v2765
  %2912 = vst.msk [vmem:[%s5 + $0x128] sm:$0xff] %vm156, %v2768
  %2913 = vst.msk [vmem:[%s5 + $0x130] sm:$0xff] %vm156, %v2773
  %2914 = vst.msk [vmem:[%s5 + $0x138] sm:$0xff] %vm156, %v2776
  %2915 = vst.msk [vmem:[%s5 + $0x140] sm:$0xff] %vm156, %v2781
  %2916 = vst.msk [vmem:[%s5 + $0x148] sm:$0xff] %vm156, %v2784
  %2917 = vst.msk [vmem:[%s5 + $0x150] sm:$0xff] %vm156, %v2789
  %2918 = vst.msk [vmem:[%s5 + $0x158] sm:$0xff] %vm156, %v2792
  %2919 = vst.msk [vmem:[%s5 + $0x160] sm:$0xff] %vm156, %v2797
  %2920 = vst.msk [vmem:[%s5 + $0x168] sm:$0xff] %vm156, %v2800
  %2921 = vst.msk [vmem:[%s5 + $0x170] sm:$0xff] %vm156, %v2805
  %2922 = vst.msk [vmem:[%s5 + $0x178] sm:$0xff] %vm156, %v2808
  %2923 = vst.msk [vmem:[%s5 + $0x180] sm:$0xff] %vm156, %v2813
  %2924 = vst.msk [vmem:[%s5 + $0x188] sm:$0xff] %vm156, %v2816
  %2925 = vst.msk [vmem:[%s5 + $0x190] sm:$0xff] %vm156, %v2821
  %2926 = vst.msk [vmem:[%s5 + $0x198] sm:$0xff] %vm156, %v2824
  %2927 = vst.msk [vmem:[%s5 + $0x1a0] sm:$0xff] %vm156, %v2829
  %2928 = vst.msk [vmem:[%s5 + $0x1a8] sm:$0xff] %vm156, %v2832
  %2929 = vst.msk [vmem:[%s5 + $0x1b0] sm:$0xff] %vm156, %v2837
  %2930 = vst.msk [vmem:[%s5 + $0x1b8] sm:$0xff] %vm156, %v2840
  %2931 = vst.msk [vmem:[%s5 + $0x1c0] sm:$0xff] %vm156, %v2845
  %2932 = vst.msk [vmem:[%s5 + $0x1c8] sm:$0xff] %vm156, %v2848
  %2933 = vst.msk [vmem:[%s5 + $0x1d0] sm:$0xff] %vm156, %v2853
  %2934 = vst.msk [vmem:[%s5 + $0x1d8] sm:$0xff] %vm156, %v2856
  %2935 = vst.msk [vmem:[%s5 + $0x1e0] sm:$0xff] %vm156, %v2861
  %2936 = vst.msk [vmem:[%s5 + $0x1e8] sm:$0xff] %vm156, %v2864
  %2937 = vst.msk [vmem:[%s5 + $0x1f0] sm:$0xff] %vm156, %v2869
  %2938 = vst.msk [vmem:[%s5 + $0x1f8] sm:$0xff] %vm156, %v2872
  // Predicated region
  $region22: #{tpu_custom_call.1} parent=0 // pred_check
    _
  $region23: #{tpu_custom_call.1} parent=0 // pred_check_branch
    %2940 = sbr.rel (0) target = $region25
  $region24: #{tpu_custom_call.1} parent=0 // pred_region
    _
  $region25: #{tpu_custom_call.1} parent=0 // pred_fallthru
    _
  // Predicated region
  $region26: #{tpu_custom_call.1} parent=0 // pred_check
    _
  $region27: #{tpu_custom_call.1} parent=0 // pred_check_branch
    %2942 = sbr.rel (0) target = $region29
  $region28: #{tpu_custom_call.1} parent=0 // pred_region
    _
  $region29: #{tpu_custom_call.1} parent=0 // pred_fallthru
    _
  // Predicated region
  $region30: #{tpu_custom_call.1} parent=0 // pred_check
    _
  $region31: #{tpu_custom_call.1} parent=0 // pred_check_branch
    %2944 = sbr.rel (0) target = $region33
  $region32: #{tpu_custom_call.1} parent=0 // pred_region
    _
  $region33: #{tpu_custom_call.1} parent=0 // pred_fallthru
    _
  // Predicated region
  $region34: #{tpu_custom_call.1} parent=0 // pred_check
    _
  $region35: #{tpu_custom_call.1} parent=0 // pred_check_branch
    %2946 = sbr.rel (0) target = $region37
  $region36: #{tpu_custom_call.1} parent=0 // pred_region
    _
  $region37: #{tpu_custom_call.1} parent=0 // pred_fallthru
    _

</llo_original>
